<compile_context>
chip_gen: v5e
topology: v5e:2x2
jax: 0.10.0
libtpu: 0.0.40
codegen_flags: <defaults>
</compile_context>

<pallas_src>
import functools

import jax
import jax.numpy as jnp
from jax import lax
from jax.experimental import pallas as pl
from jax.experimental.pallas import tpu as pltpu

F32 = jnp.float32
BF16 = jnp.bfloat16
E = 128                       # embedding size (forced by the nn.Linear(128,128) gates)
_VMEM = pl.BlockSpec(memory_space=pltpu.MemorySpace.VMEM)


def _mxu_is_256():
    """True on chips whose MXU tile is 256x256 (v6e/v7x); False on 128x128 MXUs."""
    try:
        kind = jax.devices()[0].device_kind.lower()
    except Exception:
        return True
    return not any(t in kind for t in ('v2', 'v3', 'v4', 'v5'))


# --------------------------- parameter / adjacency packing ---------------------------

def pack_model(params, adj, L, dims, fuse23):
    """Pre-transpose + bf16-cast + stack weights, pack adjacencies/embeddings into slabs."""
    def wt(p):   # nn.Linear (out,in) -> (in,out), bf16 = MXU single-pass fast path
        return p[0].T.astype(BF16)

    def bv(p):
        return p[1].astype(F32)

    def getp(name):
        if name.startswith('lin_a'):
            return params['linears_a'][int(name[5:])]
        if name.startswith('lin_b'):
            return params['linears_b'][int(name[5:])]
        return params[name]

    # ---- 128x128 weights (lin_a0/lin_b0 dropped: layer 0 never calls lres) ----
    w128_names = []
    for i in range(1, L):
        w128_names += [f'lin_a{i}', f'lin_b{i}']
    w128_names += ['tran_pv', 'tran_pc', 'tran_cv', 'tran_cp']
    if not fuse23:
        w128_names += ['w_v_2', 'w_v_3', 'w_p_2', 'w_p_3', 'w_c_2', 'w_c_3']
    w128_idx = {n: i for i, n in enumerate(w128_names)}
    W128 = jnp.stack([wt(getp(n)) for n in w128_names])               # (n,128,128) bf16

    w384_names = ['w_v_1', 'w_p_1', 'w_c_1']
    w384_idx = {n: i for i, n in enumerate(w384_names)}
    W384 = jnp.stack([wt(getp(n)) for n in w384_names])               # (3,384,128) bf16

    # ---- fused cross-domain gate: [x|y] @ [[Wa],[Wb]] + (ba+bb) ----
    Wgate = jnp.concatenate([wt(params['gate_a']), wt(params['gate_b'])], axis=0)  # (256,128)

    # ---- biases (f32) ----
    b_names = w128_names + w384_names
    b_idx = {n: i for i, n in enumerate(b_names)}
    b_list = [bv(getp(n)) for n in b_names]
    b_idx['gate'] = len(b_list)
    b_list.append(bv(params['gate_a']) + bv(params['gate_b']))
    B = jnp.stack(b_list)                                              # (nb,128) f32

    # ---- optional block-diag fusion of the *_2/*_3 gate linears (one 256x256 MXU tile) ----
    w256_idx = {}
    packed_extra = {}
    if fuse23:
        blocks, b23 = [], []
        for i, pre in enumerate(('w_v', 'w_p', 'w_c')):
            w2, w3 = wt(params[pre + '_2']), wt(params[pre + '_3'])
            top = jnp.concatenate([w2, jnp.zeros((E, E), BF16)], axis=1)
            bot = jnp.concatenate([jnp.zeros((E, E), BF16), w3], axis=1)
            blocks.append(jnp.concatenate([top, bot], axis=0))
            b23.append(jnp.concatenate([bv(params[pre + '_2']), bv(params[pre + '_3'])]))
            w256_idx[pre] = i
        packed_extra['W256'] = jnp.stack(blocks)                       # (3,256,256) bf16
        packed_extra['B23'] = jnp.stack(b23)                           # (3,256) f32

    # ---- A/B-stacked block adjacencies packed into one lane-padded slab ----
    def blkdiag(a, b):
        ra, ca = a.shape
        rb, cb = b.shape
        top = jnp.concatenate([a, jnp.zeros((ra, cb), F32)], axis=1)
        bot = jnp.concatenate([jnp.zeros((rb, ca), F32), b], axis=1)
        return jnp.concatenate([top, bot], axis=0)

    def crossblk(a, b):        # [[0,a],[b,0]] : [X_A;X_B] -> [a@X_B ; b@X_A]
        ra, ca = a.shape
        rb, cb = b.shape
        top = jnp.concatenate([jnp.zeros((ra, cb), F32), a], axis=1)
        bot = jnp.concatenate([b, jnp.zeros((rb, ca), F32)], axis=1)
        return jnp.concatenate([top, bot], axis=0)

    adjp = {
        'ab_adj': blkdiag(adj['A_adj'], adj['B_adj']),
        'ab_pp':  blkdiag(adj['A_pp'],  adj['B_pp']),
        'ab_cc':  blkdiag(adj['A_cc'],  adj['B_cc']),
        'ab_vp':  blkdiag(adj['A_vp'],  adj['B_vp']),
        'ab_vc':  blkdiag(adj['A_vc'],  adj['B_vc']),
        'ab_pv':  blkdiag(adj['A_pv'],  adj['B_pv']),
        'ab_pc':  blkdiag(adj['A_pc'],  adj['B_pc']),
        'ab_cv':  blkdiag(adj['A_cv'],  adj['B_cv']),
        'ab_cp':  blkdiag(adj['A_cp'],  adj['B_cp']),
        'cross_u': crossblk(adj['HyGCN_a_u'], adj['HyGCN_b_u']),
        'cross_i': crossblk(adj['HyGCN_a_i'], adj['HyGCN_b_i']),
        'conv_u':  blkdiag(adj['conv_au'], adj['conv_bu']),
    }
    adj_offs, ablocks, row = {}, [], 0
    for name in adjp:
        m = adjp[name].astype(F32)
        r, c = m.shape
        adj_offs[name] = (row, r, c)
        ablocks.append(jnp.pad(m, ((0, 0), (0, E - c))))
        row += r
    adj_slab = jnp.concatenate(ablocks, axis=0)                        # (352,128) f32

    # ---- embedding tables packed into one (112,128) slab ----
    emb_list = [
        ('U', jnp.concatenate([params['user_emb_a'], params['user_emb_b']], axis=0)),
        ('V', jnp.concatenate([params['A_emb'], params['B_emb']], axis=0)),
        ('P', jnp.concatenate([params['A_pri'], params['B_pri']], axis=0)),
        ('C', jnp.concatenate([params['A_cat'], params['B_cat']], axis=0)),
    ]
    emb_offs, eblocks, row = {}, [], 0
    for name, m in emb_list:
        emb_offs[name] = (row, m.shape[0])
        eblocks.append(m.astype(F32))
        row += m.shape[0]
    emb_slab = jnp.concatenate(eblocks, axis=0)                        # (112,128) f32

    packed = dict(emb=emb_slab, adjs=adj_slab, W128=W128, W384=W384,
                  Wgate=Wgate, B=B, **packed_extra)
    meta = dict(L=L, fuse23=fuse23,
                NU_A=dims['NU_A'], NU=dims['NU'], NV_A=dims['NV_A'], NV=dims['NV'],
                w128_idx=w128_idx, w384_idx=w384_idx, w256_idx=w256_idx,
                b_idx=b_idx, adj_offs=adj_offs, emb_offs=emb_offs)
    return packed, meta


# ------------------------------ fused Pallas forward ------------------------------

def make_fused_forward(meta, NS):
    L, fuse23 = meta['L'], meta['fuse23']
    NU_A, NU = meta['NU_A'], meta['NU']
    NV_A, NV = meta['NV_A'], meta['NV']
    w128_idx, w384_idx = meta['w128_idx'], meta['w384_idx']
    w256_idx, b_idx = meta['w256_idx'], meta['b_idx']
    adj_offs, emb_offs = meta['adj_offs'], meta['emb_offs']

    NSEL = 2 * NS
    NSEL_PAD = ((NSEL + 7) // 8) * 8            # full-sublane, unmasked final store

    def body(r, out_ref):
        def dot(a, b):                          # bf16 MXU fast path, f32 accumulation
            return lax.dot_general(a.astype(BF16), b.astype(BF16),
                                   (((1,), (0,)), ((), ())),
                                   preferred_element_type=F32)

        def dot_nt(a, b):                       # a @ b.T without materializing transpose
            return lax.dot_general(a.astype(BF16), b.astype(BF16),
                                   (((1,), (1,)), ((), ())),
                                   preferred_element_type=F32)

        def dot_f32(a, b):                      # exact one-hot row gather
            return lax.dot_general(a, b, (((1,), (0,)), ((), ())),
                                   preferred_element_type=F32)

        adjs = r['adjs'][...]
        emb = r['emb'][...]

        def A(name):
            o, nr, nc = adj_offs[name]
            return adjs[o:o + nr, :nc]

        def EMB(name):
            o, nr = emb_offs[name]
            return emb[o:o + nr, :]

        def w(name):
            return r['w128'][w128_idx[name]]

        def bias(name):
            i = b_idx[name]
            return r['bias'][i:i + 1, :]

        def linear(x, name):
            return dot(x, w(name)) + bias(name)

        def lres(x, name):                      # relu(Linear(x)) + x
            return jnp.maximum(linear(x, name), 0.0) + x

        def intra(adjm, tname, e1, e2):         # attention gate: softmax -> mask -> renorm
            t2 = linear(e2, tname)
            s = dot_nt(e1, t2)
            s = s - jnp.max(s, axis=1, keepdims=True)
            a = jnp.exp(s)
            a = a * pl.reciprocal(jnp.sum(a, axis=1, keepdims=True), approx=True)
            a = a * adjm
            a = a * pl.reciprocal(jnp.sum(a, axis=1, keepdims=True) + 1e-8, approx=True)
            return dot(a, e2)

        if fuse23:
            def gates23(prefix, z1, e2, e3):    # one 256x256 block-diag MXU tile
                i = w256_idx[prefix]
                y = dot(jnp.concatenate([e2, e3], axis=1), r['w256'][i]) + r['b23'][i:i + 1, :]
                return jnp.tanh(z1 + y[:, :E]), jnp.tanh(z1 + y[:, E:])
        else:
            def gates23(prefix, z1, e2, e3):    # two 128x128 matmuls (v2-v5 MXU)
                return (jnp.tanh(z1 + linear(e2, prefix + '_2')),
                        jnp.tanh(z1 + linear(e3, prefix + '_3')))

        def inter3(prefix, e1, e2, e3, extra):
            z1 = dot(jnp.concatenate([e1, e2, e3], axis=1),
                     r['w384'][w384_idx[prefix + '_1']]) + bias(prefix + '_1')
            g1, g2 = gates23(prefix, z1, e2, e3)
            return e1 + g1 * e2 + g2 * e3 + extra

        def fuse(x, y, mask):
            # domain A rows: sigmoid(gate_a(x)+gate_b(y)); domain B rows: swapped.
            z1 = jnp.where(mask, x, y)          # gate_a operand
            z2 = jnp.where(mask, y, x)          # gate_b operand
            g = jax.nn.sigmoid(dot(jnp.concatenate([z1, z2], axis=1), r['wgate'][...])
                               + bias('gate'))
            return g * x + (1.0 - g) * y

        U, V, P, C = EMB('U'), EMB('V'), EMB('P'), EMB('C')
        mask_u = lax.broadcasted_iota(jnp.int32, (NU, E), 0) < NU_A
        mask_i = lax.broadcasted_iota(jnp.int32, (NV, E), 0) < NV_A

        U_hist, V_hist = [U], [V]
        for i in range(L):
            Mu = U_hist[-1]
            if i != 0:
                Mu = dot(A('conv_u'), Mu)
                # row-stacked residual linears: one matmul per domain weight (4 -> 2)
                Xa = jnp.concatenate([Mu[:NU_A], V[:NV_A]], axis=0)
                Xb = jnp.concatenate([Mu[NU_A:], V[NV_A:]], axis=0)
                Ya = lres(Xa, f'lin_a{i}')
                Yb = lres(Xb, f'lin_b{i}')
                Mu = jnp.concatenate([Ya[:NU_A], Yb[:NU_A]], axis=0)
                V = jnp.concatenate([Ya[NU_A:], Yb[NU_A:]], axis=0)

            # heterogeneous node updates (A/B batched via block-diag adjacencies)
            new_V = inter3('w_v', V, dot(A('ab_vp'), P), dot(A('ab_vc'), C),
                           dot(A('ab_adj'), V))
            new_P = inter3('w_p', P,
                           intra(A('ab_pv'), 'tran_pv', P, V),
                           intra(A('ab_pc'), 'tran_pc', P, C),
                           dot(A('ab_pp'), P))
            new_C = inter3('w_c', C,
                           intra(A('ab_cp'), 'tran_cp', C, P),
                           intra(A('ab_cv'), 'tran_cv', C, V),
                           dot(A('ab_cc'), C))
            V, P, C = new_V, new_P, new_C

            # inter-user / inter-item: cross-domain hypergraph + gated fuse
            Yu = jnp.maximum(dot(A('cross_u'), Mu), 0.0)
            Mu = fuse(Mu, Yu, mask_u)
            U_hist.append(Mu)

            Yi = jnp.maximum(dot(A('cross_i'), V), 0.0)
            V = fuse(V, Yi, mask_i)
            V_hist.append(V)

        Pu = jnp.concatenate(U_hist, axis=1)                  # (NU, E*(L+1))
        Pi = jnp.concatenate(V_hist, axis=1)                  # (NV, E*(L+1))
        su = dot_f32(r['sel_u'][...], Pu)                     # one-hot row gather (exact)
        si = dot_f32(r['sel_i'][...], Pi)

        d = jnp.sum(su * si, axis=1, keepdims=True)
        nu2 = jnp.sum(su * su, axis=1, keepdims=True)
        ni2 = jnp.sum(si * si, axis=1, keepdims=True)
        cos = d * lax.rsqrt(jnp.maximum(nu2 * ni2, 1e-16))    # EUP rsqrt; padded rows -> 0
        cos = jnp.clip(cos, 0.0, 1.0)
        out_ref[...] = jnp.broadcast_to(cos, (NSEL_PAD, E))   # lane-dense output

    if fuse23:
        def kernel(emb, adjs, w128, w384, wgate, b, sel_u, sel_i, w256, b23, out_ref):
            body(dict(emb=emb, adjs=adjs, w128=w128, w384=w384, wgate=wgate, bias=b,
                      sel_u=sel_u, sel_i=sel_i, w256=w256, b23=b23), out_ref)
        n_in = 10
    else:
        def kernel(emb, adjs, w128, w384, wgate, b, sel_u, sel_i, out_ref):
            body(dict(emb=emb, adjs=adjs, w128=w128, w384=w384, wgate=wgate, bias=b,
                      sel_u=sel_u, sel_i=sel_i), out_ref)
        n_in = 8

    @jax.jit
    def forward(packed, user_a, user_b, item_a, item_b):
        sel_u = jax.nn.one_hot(jnp.concatenate([user_a, user_b + NU_A]), NU, dtype=F32)
        sel_i = jax.nn.one_hot(jnp.concatenate([item_a, item_b + NV_A]), NV, dtype=F32)
        sel_u = jnp.pad(sel_u, ((0, NSEL_PAD - NSEL), (0, 0)))   # zero rows -> cos 0, no NaN
        sel_i = jnp.pad(sel_i, ((0, NSEL_PAD - NSEL), (0, 0)))
        args = [packed['emb'], packed['adjs'], packed['W128'], packed['W384'],
                packed['Wgate'], packed['B'], sel_u, sel_i]
        if fuse23:
            args += [packed['W256'], packed['B23']]
        out = pl.pallas_call(
            kernel,
            out_shape=jax.ShapeDtypeStruct((NSEL_PAD, E), F32),
            in_specs=[_VMEM] * n_in,
            out_specs=_VMEM,
        )(*args)
        scores = out[:NSEL, 0]
        return scores[:NS], scores[NS:]

    return forward


# -------------------------- pure-JAX per-domain reference --------------------------

def reference_forward(params, adj, user_a, user_b, item_a, item_b, L):
    hp = functools.partial(jnp.matmul, precision=jax.lax.Precision.HIGHEST)
    lin = lambda x, p: hp(x, p[0].T) + p[1]

    def lres(x, p):
        return jnp.maximum(lin(x, p), 0.0) + x

    def intra(a, tp, e1, e2):
        t2 = lin(e2, tp)
        al = jax.nn.softmax(hp(e1, t2.T), axis=1)
        al = al * a
        al = al / (jnp.sum(al, axis=1, keepdims=True) + 1e-8)
        return hp(al, e2)

    def inter3(p1, p2, p3, e1, e2, e3, extra):
        z = lin(jnp.concatenate([e1, e2, e3], axis=1), p1)
        g1 = jnp.tanh(z + lin(e2, p2))
        g2 = jnp.tanh(z + lin(e3, p3))
        return e1 + g1 * e2 + g2 * e3 + extra

    def fuse(x, y, px, py):
        g = jax.nn.sigmoid(lin(x, px) + lin(y, py))
        return g * x + (1.0 - g) * y

    def cosine(u, v):
        d = jnp.sum(u * v, axis=1)
        un = jnp.sqrt(jnp.sum(u * u, axis=1))
        vn = jnp.sqrt(jnp.sum(v * v, axis=1))
        eps = 1e-8
        return jnp.clip(d / (jnp.maximum(un, eps) * jnp.maximum(vn, eps)), 0.0, 1.0)

    Eua = [params['user_emb_a']]          # User_SingleDomain.forward == embedding table
    Eub = [params['user_emb_b']]
    A_emb, B_emb = params['A_emb'], params['B_emb']
    A_pri, B_pri = params['A_pri'], params['B_pri']
    A_cat, B_cat = params['A_cat'], params['B_cat']
    Eia, Eib = [A_emb], [B_emb]

    for i in range(L):
        Mua, Mub = Eua[-1], Eub[-1]
        if i != 0:
            Mua = hp(adj['conv_au'], Mua)
            Mub = hp(adj['conv_bu'], Mub)
            Mua = lres(Mua, params['linears_a'][i])
            Mub = lres(Mub, params['linears_b'][i])
            A_emb = lres(A_emb, params['linears_a'][i])
            B_emb = lres(B_emb, params['linears_b'][i])

        dA_item = inter3(params['w_v_1'], params['w_v_2'], params['w_v_3'],
                         A_emb, hp(adj['A_vp'], A_pri), hp(adj['A_vc'], A_cat),
                         hp(adj['A_adj'], A_emb))
        dB_item = inter3(params['w_v_1'], params['w_v_2'], params['w_v_3'],
                         B_emb, hp(adj['B_vp'], B_pri), hp(adj['B_vc'], B_cat),
                         hp(adj['B_adj'], B_emb))
        dA_pri = inter3(params['w_p_1'], params['w_p_2'], params['w_p_3'],
                        A_pri,
                        intra(adj['A_pv'], params['tran_pv'], A_pri, A_emb),
                        intra(adj['A_pc'], params['tran_pc'], A_pri, A_cat),
                        hp(adj['A_pp'], A_pri))
        dB_pri = inter3(params['w_p_1'], params['w_p_2'], params['w_p_3'],
                        B_pri,
                        intra(adj['B_pv'], params['tran_pv'], B_pri, B_emb),
                        intra(adj['B_pc'], params['tran_pc'], B_pri, B_cat),
                        hp(adj['B_pp'], B_pri))
        dA_cat = inter3(params['w_c_1'], params['w_c_2'], params['w_c_3'],
                        A_cat,
                        intra(adj['A_cp'], params['tran_cp'], A_cat, A_pri),
                        intra(adj['A_cv'], params['tran_cv'], A_cat, A_emb),
                        hp(adj['A_cc'], A_cat))
        dB_cat = inter3(params['w_c_1'], params['w_c_2'], params['w_c_3'],
                        B_cat,
                        intra(adj['B_cp'], params['tran_cp'], B_cat, B_pri),
                        intra(adj['B_cv'], params['tran_cv'], B_cat, B_emb),
                        hp(adj['B_cc'], B_cat))
        A_emb, A_pri, A_cat = dA_item, dA_pri, dA_cat
        B_emb, B_pri, B_cat = dB_item, dB_pri, dB_cat

        Mua_from_b = jnp.maximum(hp(adj['HyGCN_a_u'], Mub), 0.0)
        Mub_from_a = jnp.maximum(hp(adj['HyGCN_b_u'], Mua), 0.0)
        Eua.append(fuse(Mua, Mua_from_b, params['gate_a'], params['gate_b']))
        Eub.append(fuse(Mub, Mub_from_a, params['gate_b'], params['gate_a']))

        Mia_from_b = jnp.maximum(hp(adj['HyGCN_a_i'], B_emb), 0.0)
        Mib_from_a = jnp.maximum(hp(adj['HyGCN_b_i'], A_emb), 0.0)
        A_emb = fuse(A_emb, Mia_from_b, params['gate_a'], params['gate_b'])
        B_emb = fuse(B_emb, Mib_from_a, params['gate_b'], params['gate_a'])
        Eia.append(A_emb)
        Eib.append(B_emb)

    Pua = jnp.concatenate(Eua, axis=1)
    Pub = jnp.concatenate(Eub, axis=1)
    Pia = jnp.concatenate(Eia, axis=1)
    Pib = jnp.concatenate(Eib, axis=1)
    return cosine(Pua[user_a], Pia[item_a]), cosine(Pub[user_b], Pib[item_b])


# ----------------------------- deterministic init -----------------------------

def init_all(key):
    user_a, user_b = 16, 16
    a_node, b_node = 24, 24
    a_price, b_price = 8, 8
    a_cat, b_cat = 8, 8
    L = 2

    stdv = 1.0 / (E ** 0.5)
    keys = iter(jax.random.split(key, 128))

    def unif(shape, bound=stdv):
        return jax.random.uniform(next(keys), shape, F32, -bound, bound)

    def lin_params(in_dim, out_dim):
        bound = 1.0 / (in_dim ** 0.5)
        return (unif((out_dim, in_dim), bound), unif((out_dim,), bound))

    def adj_mat(rows, cols):
        m = jax.random.uniform(next(keys), (rows, cols), F32, 0.0, 1.0)
        return m / jnp.sum(m, axis=1, keepdims=True)

    params = {
        'user_emb_a': unif((user_a, E)), 'user_emb_b': unif((user_b, E)),
        'A_emb': unif((a_node, E)), 'B_emb': unif((b_node, E)),
        'A_pri': unif((a_price, E)), 'B_pri': unif((b_price, E)),
        'A_cat': unif((a_cat, E)), 'B_cat': unif((b_cat, E)),
        'linears_a': [lin_params(E, E) for _ in range(L)],
        'linears_b': [lin_params(E, E) for _ in range(L)],
        'tran_pv': lin_params(E, E), 'tran_pc': lin_params(E, E),
        'tran_cv': lin_params(E, E), 'tran_cp': lin_params(E, E),
        'w_v_1': lin_params(3 * E, E), 'w_v_2': lin_params(E, E), 'w_v_3': lin_params(E, E),
        'w_p_1': lin_params(3 * E, E), 'w_p_2': lin_params(E, E), 'w_p_3': lin_params(E, E),
        'w_c_1': lin_params(3 * E, E), 'w_c_2': lin_params(E, E), 'w_c_3': lin_params(E, E),
        'gate_a': lin_params(E, E), 'gate_b': lin_params(E, E),
    }
    adj = {
        'A_adj': adj_mat(a_node, a_node), 'B_adj': adj_mat(b_node, b_node),
        'A_pp': adj_mat(a_price, a_price), 'B_pp': adj_mat(b_price, b_price),
        'A_cc': adj_mat(a_cat, a_cat), 'B_cc': adj_mat(b_cat, b_cat),
        'A_vp': adj_mat(a_node, a_price), 'A_vc': adj_mat(a_node, a_cat),
        'B_vp': adj_mat(b_node, b_price), 'B_vc': adj_mat(b_node, b_cat),
        'A_pv': adj_mat(a_price, a_node), 'A_pc': adj_mat(a_price, a_cat),
        'B_pv': adj_mat(b_price, b_node), 'B_pc': adj_mat(b_price, b_cat),
        'A_cv': adj_mat(a_cat, a_node), 'A_cp': adj_mat(a_cat, a_price),
        'B_cv': adj_mat(b_cat, b_node), 'B_cp': adj_mat(b_cat, b_price),
        'HyGCN_a_u': adj_mat(user_a, user_b), 'HyGCN_b_u': adj_mat(user_b, user_a),
        'HyGCN_a_i': adj_mat(a_node, b_node), 'HyGCN_b_i': adj_mat(b_node, a_node),
        'conv_au': adj_mat(user_a, user_a), 'conv_bu': adj_mat(user_b, user_b),
    }
    dims = dict(NU_A=user_a, NU=user_a + user_b, NV_A=a_node, NV=a_node + b_node)
    return params, adj, L, dims


if __name__ == "__main__":
    key = jax.random.PRNGKey(0)
    params, adj, L, dims = init_all(key)

    user_sample_a = jnp.array([0, 3, 5, 7, 11, 15], dtype=jnp.int32)
    user_sample_b = jnp.array([1, 2, 4, 6, 8, 14], dtype=jnp.int32)
    item_sample_a = jnp.array([0, 2, 5, 9, 17, 23], dtype=jnp.int32)
    item_sample_b = jnp.array([1, 3, 7, 12, 19, 22], dtype=jnp.int32)
    NS = int(user_sample_a.shape[0])

    fuse23 = _mxu_is_256()
    packed, meta = pack_model(params, adj, L, dims, fuse23)
    fused_forward = make_fused_forward(meta, NS)

    score_a, score_b = fused_forward(packed, user_sample_a, user_sample_b,
                                     item_sample_a, item_sample_b)
    jax.block_until_ready((score_a, score_b))

    ref_a, ref_b = jax.jit(reference_forward, static_argnames='L')(
        params, adj, user_sample_a, user_sample_b, item_sample_a, item_sample_b, L=L)
    max_diff = float(jnp.maximum(jnp.max(jnp.abs(score_a - ref_a)),
                                 jnp.max(jnp.abs(score_b - ref_b))))
    assert max_diff < 2e-2, f"Pallas vs reference mismatch: {max_diff}"
    print("KERNEL_OK")
</pallas_src>

<mosaic_0001>
module attributes {stable_mosaic.version = 11 : i64} {
  func.func @kernel(%arg0: memref<112x128xf32, #tpu.memory_space<vmem>>, %arg1: memref<352x128xf32, #tpu.memory_space<vmem>>, %arg2: memref<6x128x128xbf16, #tpu.memory_space<vmem>>, %arg3: memref<3x384x128xbf16, #tpu.memory_space<vmem>>, %arg4: memref<256x128xbf16, #tpu.memory_space<vmem>>, %arg5: memref<10x128xf32, #tpu.memory_space<vmem>>, %arg6: memref<16x32xf32, #tpu.memory_space<vmem>>, %arg7: memref<16x48xf32, #tpu.memory_space<vmem>>, %arg8: memref<3x256x256xbf16, #tpu.memory_space<vmem>>, %arg9: memref<3x256xf32, #tpu.memory_space<vmem>>, %arg10: memref<16x128xf32, #tpu.memory_space<vmem>>) attributes {dimension_semantics = [], scalar_prefetch = 0 : i64, scratch_operands = 0 : i64, tpu.core_type = #tpu.core_type<tc>} {
    %c0 = arith.constant 0 : index
    %c0_0 = arith.constant 0 : index
    %0 = vector.load %arg1[%c0, %c0_0] : memref<352x128xf32, #tpu.memory_space<vmem>>, vector<352x128xf32>
    %c0_1 = arith.constant 0 : index
    %c0_2 = arith.constant 0 : index
    %1 = vector.load %arg0[%c0_1, %c0_2] : memref<112x128xf32, #tpu.memory_space<vmem>>, vector<112x128xf32>
    %2 = vector.extract_strided_slice %1 {offsets = [0, 0], sizes = [32, 128], strides = [1, 1]} : vector<112x128xf32> to vector<32x128xf32>
    %3 = vector.extract_strided_slice %1 {offsets = [32, 0], sizes = [48, 128], strides = [1, 1]} : vector<112x128xf32> to vector<48x128xf32>
    %4 = vector.extract_strided_slice %1 {offsets = [80, 0], sizes = [16, 128], strides = [1, 1]} : vector<112x128xf32> to vector<16x128xf32>
    %5 = vector.extract_strided_slice %1 {offsets = [96, 0], sizes = [16, 128], strides = [1, 1]} : vector<112x128xf32> to vector<16x128xf32>
    %6 = tpu.iota {dimensions = array<i32: 0>} : vector<32x128xi32>
    %c16_i32 = arith.constant 16 : i32
    %7 = vector.broadcast %c16_i32 : i32 to vector<32x128xi32>
    %8 = arith.cmpi slt, %6, %7 : vector<32x128xi32>
    %9 = tpu.iota {dimensions = array<i32: 0>} : vector<48x128xi32>
    %c24_i32 = arith.constant 24 : i32
    %10 = vector.broadcast %c24_i32 : i32 to vector<48x128xi32>
    %11 = arith.cmpi slt, %9, %10 : vector<48x128xi32>
    %12 = vector.extract_strided_slice %0 {offsets = [80, 0], sizes = [48, 16], strides = [1, 1]} : vector<352x128xf32> to vector<48x16xf32>
    %13 = arith.truncf %12 : vector<48x16xf32> to vector<48x16xbf16>
    %14 = arith.truncf %4 : vector<16x128xf32> to vector<16x128xbf16>
    %cst = arith.constant dense<0.000000e+00> : vector<48x128xf32>
    %15 = tpu.matmul %13, %14, %cst {dimension_numbers = #tpu.dot_dimension_numbers<[1], [0], [0], [1], [0, 0, 1, 1], [], []>} : vector<48x16xbf16>, vector<16x128xbf16>, vector<48x128xf32> -> vector<48x128xf32>
    %16 = vector.extract_strided_slice %0 {offsets = [128, 0], sizes = [48, 16], strides = [1, 1]} : vector<352x128xf32> to vector<48x16xf32>
    %17 = arith.truncf %16 : vector<48x16xf32> to vector<48x16xbf16>
    %18 = arith.truncf %5 : vector<16x128xf32> to vector<16x128xbf16>
    %cst_3 = arith.constant dense<0.000000e+00> : vector<48x128xf32>
    %19 = tpu.matmul %17, %18, %cst_3 {dimension_numbers = #tpu.dot_dimension_numbers<[1], [0], [0], [1], [0, 0, 1, 1], [], []>} : vector<48x16xbf16>, vector<16x128xbf16>, vector<48x128xf32> -> vector<48x128xf32>
    %20 = vector.extract_strided_slice %0 {offsets = [0, 0], sizes = [48, 48], strides = [1, 1]} : vector<352x128xf32> to vector<48x48xf32>
    %21 = arith.truncf %20 : vector<48x48xf32> to vector<48x48xbf16>
    %22 = arith.truncf %3 : vector<48x128xf32> to vector<48x128xbf16>
    %cst_4 = arith.constant dense<0.000000e+00> : vector<48x128xf32>
    %23 = tpu.matmul %21, %22, %cst_4 {dimension_numbers = #tpu.dot_dimension_numbers<[1], [0], [0], [1], [0, 0, 1, 1], [], []>} : vector<48x48xbf16>, vector<48x128xbf16>, vector<48x128xf32> -> vector<48x128xf32>
    %24 = tpu.concatenate %3, %15, %19 in 1 : vector<48x128xf32>, vector<48x128xf32>, vector<48x128xf32> -> vector<48x384xf32>
    %c0_5 = arith.constant 0 : index
    %c0_6 = arith.constant 0 : index
    %c0_7 = arith.constant 0 : index
    %25 = vector.load %arg3[%c0_5, %c0_6, %c0_7] : memref<3x384x128xbf16, #tpu.memory_space<vmem>>, vector<1x384x128xbf16>
    %26 = vector.shape_cast %25 : vector<1x384x128xbf16> to vector<384x128xbf16>
    %27 = arith.truncf %24 : vector<48x384xf32> to vector<48x384xbf16>
    %cst_8 = arith.constant dense<0.000000e+00> : vector<48x128xf32>
    %28 = tpu.matmul %27, %26, %cst_8 {dimension_numbers = #tpu.dot_dimension_numbers<[1], [0], [0], [1], [0, 0, 1, 1], [], []>} : vector<48x384xbf16>, vector<384x128xbf16>, vector<48x128xf32> -> vector<48x128xf32>
    %c6 = arith.constant 6 : index
    %c0_9 = arith.constant 0 : index
    %29 = vector.load %arg5[%c6, %c0_9] : memref<10x128xf32, #tpu.memory_space<vmem>>, vector<1x128xf32>
    %30 = vector.broadcast %29 : vector<1x128xf32> to vector<48x128xf32>
    %31 = arith.addf %28, %30 : vector<48x128xf32>
    %32 = tpu.concatenate %15, %19 in 1 : vector<48x128xf32>, vector<48x128xf32> -> vector<48x256xf32>
    %c0_10 = arith.constant 0 : index
    %c0_11 = arith.constant 0 : index
    %c0_12 = arith.constant 0 : index
    %33 = vector.load %arg8[%c0_10, %c0_11, %c0_12] : memref<3x256x256xbf16, #tpu.memory_space<vmem>>, vector<1x256x256xbf16>
    %34 = vector.shape_cast %33 : vector<1x256x256xbf16> to vector<256x256xbf16>
    %35 = arith.truncf %32 : vector<48x256xf32> to vector<48x256xbf16>
    %cst_13 = arith.constant dense<0.000000e+00> : vector<48x256xf32>
    %36 = tpu.matmul %35, %34, %cst_13 {dimension_numbers = #tpu.dot_dimension_numbers<[1], [0], [0], [1], [0, 0, 1, 1], [], []>} : vector<48x256xbf16>, vector<256x256xbf16>, vector<48x256xf32> -> vector<48x256xf32>
    %c0_14 = arith.constant 0 : index
    %c0_15 = arith.constant 0 : index
    %37 = vector.load %arg9[%c0_14, %c0_15] : memref<3x256xf32, #tpu.memory_space<vmem>>, vector<1x256xf32>
    %38 = vector.broadcast %37 : vector<1x256xf32> to vector<48x256xf32>
    %39 = arith.addf %36, %38 : vector<48x256xf32>
    %40 = vector.extract_strided_slice %39 {offsets = [0, 0], sizes = [48, 128], strides = [1, 1]} : vector<48x256xf32> to vector<48x128xf32>
    %41 = arith.addf %31, %40 : vector<48x128xf32>
    %42 = math.tanh %41 : vector<48x128xf32>
    %43 = vector.extract_strided_slice %39 {offsets = [0, 128], sizes = [48, 128], strides = [1, 1]} : vector<48x256xf32> to vector<48x128xf32>
    %44 = arith.addf %31, %43 : vector<48x128xf32>
    %45 = math.tanh %44 : vector<48x128xf32>
    %46 = arith.mulf %42, %15 : vector<48x128xf32>
    %47 = arith.addf %3, %46 : vector<48x128xf32>
    %48 = arith.mulf %45, %19 : vector<48x128xf32>
    %49 = arith.addf %47, %48 : vector<48x128xf32>
    %50 = arith.addf %49, %23 : vector<48x128xf32>
    %51 = vector.extract_strided_slice %0 {offsets = [176, 0], sizes = [16, 48], strides = [1, 1]} : vector<352x128xf32> to vector<16x48xf32>
    %c2 = arith.constant 2 : index
    %c0_16 = arith.constant 0 : index
    %c0_17 = arith.constant 0 : index
    %52 = vector.load %arg2[%c2, %c0_16, %c0_17] : memref<6x128x128xbf16, #tpu.memory_space<vmem>>, vector<1x128x128xbf16>
    %53 = vector.shape_cast %52 : vector<1x128x128xbf16> to vector<128x128xbf16>
    %54 = arith.truncf %3 : vector<48x128xf32> to vector<48x128xbf16>
    %cst_18 = arith.constant dense<0.000000e+00> : vector<48x128xf32>
    %55 = tpu.matmul %54, %53, %cst_18 {dimension_numbers = #tpu.dot_dimension_numbers<[1], [0], [0], [1], [0, 0, 1, 1], [], []>} : vector<48x128xbf16>, vector<128x128xbf16>, vector<48x128xf32> -> vector<48x128xf32>
    %c2_19 = arith.constant 2 : index
    %c0_20 = arith.constant 0 : index
    %56 = vector.load %arg5[%c2_19, %c0_20] : memref<10x128xf32, #tpu.memory_space<vmem>>, vector<1x128xf32>
    %57 = vector.broadcast %56 : vector<1x128xf32> to vector<48x128xf32>
    %58 = arith.addf %55, %57 : vector<48x128xf32>
    %59 = arith.truncf %4 : vector<16x128xf32> to vector<16x128xbf16>
    %60 = arith.truncf %58 : vector<48x128xf32> to vector<48x128xbf16>
    %cst_21 = arith.constant dense<0.000000e+00> : vector<16x48xf32>
    %61 = tpu.matmul %59, %60, %cst_21 {dimension_numbers = #tpu.dot_dimension_numbers<[1], [1], [0], [0], [0, 0, 1, 0], [], []>} : vector<16x128xbf16>, vector<48x128xbf16>, vector<16x48xf32> -> vector<16x48xf32>
    %cst_22 = arith.constant dense<0xFF800000> : vector<16xf32>
    %62 = vector.multi_reduction <maximumf>, %61, %cst_22 [1] : vector<16x48xf32> to vector<16xf32>
    %63 = vector.shape_cast %62 : vector<16xf32> to vector<16x1xf32>
    %64 = vector.broadcast %63 : vector<16x1xf32> to vector<16x48xf32>
    %65 = arith.subf %61, %64 : vector<16x48xf32>
    %66 = math.exp %65 : vector<16x48xf32>
    %cst_23 = arith.constant dense<0.000000e+00> : vector<16xf32>
    %67 = vector.multi_reduction <add>, %66, %cst_23 [1] : vector<16x48xf32> to vector<16xf32>
    %68 = vector.shape_cast %67 : vector<16xf32> to vector<16x1xf32>
    %69 = tpu.reciprocal %68 {approx = true} : vector<16x1xf32> -> vector<16x1xf32>
    %70 = vector.broadcast %69 : vector<16x1xf32> to vector<16x48xf32>
    %71 = arith.mulf %66, %70 : vector<16x48xf32>
    %72 = arith.mulf %71, %51 : vector<16x48xf32>
    %cst_24 = arith.constant dense<0.000000e+00> : vector<16xf32>
    %73 = vector.multi_reduction <add>, %72, %cst_24 [1] : vector<16x48xf32> to vector<16xf32>
    %74 = vector.shape_cast %73 : vector<16xf32> to vector<16x1xf32>
    %cst_25 = arith.constant 9.99999993E-9 : f32
    %75 = vector.broadcast %cst_25 : f32 to vector<16x1xf32>
    %76 = arith.addf %74, %75 : vector<16x1xf32>
    %77 = tpu.reciprocal %76 {approx = true} : vector<16x1xf32> -> vector<16x1xf32>
    %78 = vector.broadcast %77 : vector<16x1xf32> to vector<16x48xf32>
    %79 = arith.mulf %72, %78 : vector<16x48xf32>
    %80 = arith.truncf %79 : vector<16x48xf32> to vector<16x48xbf16>
    %81 = arith.truncf %3 : vector<48x128xf32> to vector<48x128xbf16>
    %cst_26 = arith.constant dense<0.000000e+00> : vector<16x128xf32>
    %82 = tpu.matmul %80, %81, %cst_26 {dimension_numbers = #tpu.dot_dimension_numbers<[1], [0], [0], [1], [0, 0, 1, 1], [], []>} : vector<16x48xbf16>, vector<48x128xbf16>, vector<16x128xf32> -> vector<16x128xf32>
    %83 = vector.extract_strided_slice %0 {offsets = [192, 0], sizes = [16, 16], strides = [1, 1]} : vector<352x128xf32> to vector<16x16xf32>
    %c3 = arith.constant 3 : index
    %c0_27 = arith.constant 0 : index
    %c0_28 = arith.constant 0 : index
    %84 = vector.load %arg2[%c3, %c0_27, %c0_28] : memref<6x128x128xbf16, #tpu.memory_space<vmem>>, vector<1x128x128xbf16>
    %85 = vector.shape_cast %84 : vector<1x128x128xbf16> to vector<128x128xbf16>
    %86 = arith.truncf %5 : vector<16x128xf32> to vector<16x128xbf16>
    %cst_29 = arith.constant dense<0.000000e+00> : vector<16x128xf32>
    %87 = tpu.matmul %86, %85, %cst_29 {dimension_numbers = #tpu.dot_dimension_numbers<[1], [0], [0], [1], [0, 0, 1, 1], [], []>} : vector<16x128xbf16>, vector<128x128xbf16>, vector<16x128xf32> -> vector<16x128xf32>
    %c3_30 = arith.constant 3 : index
    %c0_31 = arith.constant 0 : index
    %88 = vector.load %arg5[%c3_30, %c0_31] : memref<10x128xf32, #tpu.memory_space<vmem>>, vector<1x128xf32>
    %89 = vector.broadcast %88 : vector<1x128xf32> to vector<16x128xf32>
    %90 = arith.addf %87, %89 : vector<16x128xf32>
    %91 = arith.truncf %4 : vector<16x128xf32> to vector<16x128xbf16>
    %92 = arith.truncf %90 : vector<16x128xf32> to vector<16x128xbf16>
    %cst_32 = arith.constant dense<0.000000e+00> : vector<16x16xf32>
    %93 = tpu.matmul %91, %92, %cst_32 {dimension_numbers = #tpu.dot_dimension_numbers<[1], [1], [0], [0], [0, 0, 1, 0], [], []>} : vector<16x128xbf16>, vector<16x128xbf16>, vector<16x16xf32> -> vector<16x16xf32>
    %cst_33 = arith.constant dense<0xFF800000> : vector<16xf32>
    %94 = vector.multi_reduction <maximumf>, %93, %cst_33 [1] : vector<16x16xf32> to vector<16xf32>
    %95 = vector.shape_cast %94 : vector<16xf32> to vector<16x1xf32>
    %96 = vector.broadcast %95 : vector<16x1xf32> to vector<16x16xf32>
    %97 = arith.subf %93, %96 : vector<16x16xf32>
    %98 = math.exp %97 : vector<16x16xf32>
    %cst_34 = arith.constant dense<0.000000e+00> : vector<16xf32>
    %99 = vector.multi_reduction <add>, %98, %cst_34 [1] : vector<16x16xf32> to vector<16xf32>
    %100 = vector.shape_cast %99 : vector<16xf32> to vector<16x1xf32>
    %101 = tpu.reciprocal %100 {approx = true} : vector<16x1xf32> -> vector<16x1xf32>
    %102 = vector.broadcast %101 : vector<16x1xf32> to vector<16x16xf32>
    %103 = arith.mulf %98, %102 : vector<16x16xf32>
    %104 = arith.mulf %103, %83 : vector<16x16xf32>
    %cst_35 = arith.constant dense<0.000000e+00> : vector<16xf32>
    %105 = vector.multi_reduction <add>, %104, %cst_35 [1] : vector<16x16xf32> to vector<16xf32>
    %106 = vector.shape_cast %105 : vector<16xf32> to vector<16x1xf32>
    %cst_36 = arith.constant 9.99999993E-9 : f32
    %107 = vector.broadcast %cst_36 : f32 to vector<16x1xf32>
    %108 = arith.addf %106, %107 : vector<16x1xf32>
    %109 = tpu.reciprocal %108 {approx = true} : vector<16x1xf32> -> vector<16x1xf32>
    %110 = vector.broadcast %109 : vector<16x1xf32> to vector<16x16xf32>
    %111 = arith.mulf %104, %110 : vector<16x16xf32>
    %112 = arith.truncf %111 : vector<16x16xf32> to vector<16x16xbf16>
    %113 = arith.truncf %5 : vector<16x128xf32> to vector<16x128xbf16>
    %cst_37 = arith.constant dense<0.000000e+00> : vector<16x128xf32>
    %114 = tpu.matmul %112, %113, %cst_37 {dimension_numbers = #tpu.dot_dimension_numbers<[1], [0], [0], [1], [0, 0, 1, 1], [], []>} : vector<16x16xbf16>, vector<16x128xbf16>, vector<16x128xf32> -> vector<16x128xf32>
    %115 = vector.extract_strided_slice %0 {offsets = [48, 0], sizes = [16, 16], strides = [1, 1]} : vector<352x128xf32> to vector<16x16xf32>
    %116 = arith.truncf %115 : vector<16x16xf32> to vector<16x16xbf16>
    %117 = arith.truncf %4 : vector<16x128xf32> to vector<16x128xbf16>
    %cst_38 = arith.constant dense<0.000000e+00> : vector<16x128xf32>
    %118 = tpu.matmul %116, %117, %cst_38 {dimension_numbers = #tpu.dot_dimension_numbers<[1], [0], [0], [1], [0, 0, 1, 1], [], []>} : vector<16x16xbf16>, vector<16x128xbf16>, vector<16x128xf32> -> vector<16x128xf32>
    %119 = tpu.concatenate %4, %82, %114 in 1 : vector<16x128xf32>, vector<16x128xf32>, vector<16x128xf32> -> vector<16x384xf32>
    %c1 = arith.constant 1 : index
    %c0_39 = arith.constant 0 : index
    %c0_40 = arith.constant 0 : index
    %120 = vector.load %arg3[%c1, %c0_39, %c0_40] : memref<3x384x128xbf16, #tpu.memory_space<vmem>>, vector<1x384x128xbf16>
    %121 = vector.shape_cast %120 : vector<1x384x128xbf16> to vector<384x128xbf16>
    %122 = arith.truncf %119 : vector<16x384xf32> to vector<16x384xbf16>
    %cst_41 = arith.constant dense<0.000000e+00> : vector<16x128xf32>
    %123 = tpu.matmul %122, %121, %cst_41 {dimension_numbers = #tpu.dot_dimension_numbers<[1], [0], [0], [1], [0, 0, 1, 1], [], []>} : vector<16x384xbf16>, vector<384x128xbf16>, vector<16x128xf32> -> vector<16x128xf32>
    %c7 = arith.constant 7 : index
    %c0_42 = arith.constant 0 : index
    %124 = vector.load %arg5[%c7, %c0_42] : memref<10x128xf32, #tpu.memory_space<vmem>>, vector<1x128xf32>
    %125 = vector.broadcast %124 : vector<1x128xf32> to vector<16x128xf32>
    %126 = arith.addf %123, %125 : vector<16x128xf32>
    %127 = tpu.concatenate %82, %114 in 1 : vector<16x128xf32>, vector<16x128xf32> -> vector<16x256xf32>
    %c1_43 = arith.constant 1 : index
    %c0_44 = arith.constant 0 : index
    %c0_45 = arith.constant 0 : index
    %128 = vector.load %arg8[%c1_43, %c0_44, %c0_45] : memref<3x256x256xbf16, #tpu.memory_space<vmem>>, vector<1x256x256xbf16>
    %129 = vector.shape_cast %128 : vector<1x256x256xbf16> to vector<256x256xbf16>
    %130 = arith.truncf %127 : vector<16x256xf32> to vector<16x256xbf16>
    %cst_46 = arith.constant dense<0.000000e+00> : vector<16x256xf32>
    %131 = tpu.matmul %130, %129, %cst_46 {dimension_numbers = #tpu.dot_dimension_numbers<[1], [0], [0], [1], [0, 0, 1, 1], [], []>} : vector<16x256xbf16>, vector<256x256xbf16>, vector<16x256xf32> -> vector<16x256xf32>
    %c1_47 = arith.constant 1 : index
    %c0_48 = arith.constant 0 : index
    %132 = vector.load %arg9[%c1_47, %c0_48] : memref<3x256xf32, #tpu.memory_space<vmem>>, vector<1x256xf32>
    %133 = vector.broadcast %132 : vector<1x256xf32> to vector<16x256xf32>
    %134 = arith.addf %131, %133 : vector<16x256xf32>
    %135 = vector.extract_strided_slice %134 {offsets = [0, 0], sizes = [16, 128], strides = [1, 1]} : vector<16x256xf32> to vector<16x128xf32>
    %136 = arith.addf %126, %135 : vector<16x128xf32>
    %137 = math.tanh %136 : vector<16x128xf32>
    %138 = vector.extract_strided_slice %134 {offsets = [0, 128], sizes = [16, 128], strides = [1, 1]} : vector<16x256xf32> to vector<16x128xf32>
    %139 = arith.addf %126, %138 : vector<16x128xf32>
    %140 = math.tanh %139 : vector<16x128xf32>
    %141 = arith.mulf %137, %82 : vector<16x128xf32>
    %142 = arith.addf %4, %141 : vector<16x128xf32>
    %143 = arith.mulf %140, %114 : vector<16x128xf32>
    %144 = arith.addf %142, %143 : vector<16x128xf32>
    %145 = arith.addf %144, %118 : vector<16x128xf32>
    %146 = vector.extract_strided_slice %0 {offsets = [224, 0], sizes = [16, 16], strides = [1, 1]} : vector<352x128xf32> to vector<16x16xf32>
    %c5 = arith.constant 5 : index
    %c0_49 = arith.constant 0 : index
    %c0_50 = arith.constant 0 : index
    %147 = vector.load %arg2[%c5, %c0_49, %c0_50] : memref<6x128x128xbf16, #tpu.memory_space<vmem>>, vector<1x128x128xbf16>
    %148 = vector.shape_cast %147 : vector<1x128x128xbf16> to vector<128x128xbf16>
    %149 = arith.truncf %4 : vector<16x128xf32> to vector<16x128xbf16>
    %cst_51 = arith.constant dense<0.000000e+00> : vector<16x128xf32>
    %150 = tpu.matmul %149, %148, %cst_51 {dimension_numbers = #tpu.dot_dimension_numbers<[1], [0], [0], [1], [0, 0, 1, 1], [], []>} : vector<16x128xbf16>, vector<128x128xbf16>, vector<16x128xf32> -> vector<16x128xf32>
    %c5_52 = arith.constant 5 : index
    %c0_53 = arith.constant 0 : index
    %151 = vector.load %arg5[%c5_52, %c0_53] : memref<10x128xf32, #tpu.memory_space<vmem>>, vector<1x128xf32>
    %152 = vector.broadcast %151 : vector<1x128xf32> to vector<16x128xf32>
    %153 = arith.addf %150, %152 : vector<16x128xf32>
    %154 = arith.truncf %5 : vector<16x128xf32> to vector<16x128xbf16>
    %155 = arith.truncf %153 : vector<16x128xf32> to vector<16x128xbf16>
    %cst_54 = arith.constant dense<0.000000e+00> : vector<16x16xf32>
    %156 = tpu.matmul %154, %155, %cst_54 {dimension_numbers = #tpu.dot_dimension_numbers<[1], [1], [0], [0], [0, 0, 1, 0], [], []>} : vector<16x128xbf16>, vector<16x128xbf16>, vector<16x16xf32> -> vector<16x16xf32>
    %cst_55 = arith.constant dense<0xFF800000> : vector<16xf32>
    %157 = vector.multi_reduction <maximumf>, %156, %cst_55 [1] : vector<16x16xf32> to vector<16xf32>
    %158 = vector.shape_cast %157 : vector<16xf32> to vector<16x1xf32>
    %159 = vector.broadcast %158 : vector<16x1xf32> to vector<16x16xf32>
    %160 = arith.subf %156, %159 : vector<16x16xf32>
    %161 = math.exp %160 : vector<16x16xf32>
    %cst_56 = arith.constant dense<0.000000e+00> : vector<16xf32>
    %162 = vector.multi_reduction <add>, %161, %cst_56 [1] : vector<16x16xf32> to vector<16xf32>
    %163 = vector.shape_cast %162 : vector<16xf32> to vector<16x1xf32>
    %164 = tpu.reciprocal %163 {approx = true} : vector<16x1xf32> -> vector<16x1xf32>
    %165 = vector.broadcast %164 : vector<16x1xf32> to vector<16x16xf32>
    %166 = arith.mulf %161, %165 : vector<16x16xf32>
    %167 = arith.mulf %166, %146 : vector<16x16xf32>
    %cst_57 = arith.constant dense<0.000000e+00> : vector<16xf32>
    %168 = vector.multi_reduction <add>, %167, %cst_57 [1] : vector<16x16xf32> to vector<16xf32>
    %169 = vector.shape_cast %168 : vector<16xf32> to vector<16x1xf32>
    %cst_58 = arith.constant 9.99999993E-9 : f32
    %170 = vector.broadcast %cst_58 : f32 to vector<16x1xf32>
    %171 = arith.addf %169, %170 : vector<16x1xf32>
    %172 = tpu.reciprocal %171 {approx = true} : vector<16x1xf32> -> vector<16x1xf32>
    %173 = vector.broadcast %172 : vector<16x1xf32> to vector<16x16xf32>
    %174 = arith.mulf %167, %173 : vector<16x16xf32>
    %175 = arith.truncf %174 : vector<16x16xf32> to vector<16x16xbf16>
    %176 = arith.truncf %4 : vector<16x128xf32> to vector<16x128xbf16>
    %cst_59 = arith.constant dense<0.000000e+00> : vector<16x128xf32>
    %177 = tpu.matmul %175, %176, %cst_59 {dimension_numbers = #tpu.dot_dimension_numbers<[1], [0], [0], [1], [0, 0, 1, 1], [], []>} : vector<16x16xbf16>, vector<16x128xbf16>, vector<16x128xf32> -> vector<16x128xf32>
    %178 = vector.extract_strided_slice %0 {offsets = [208, 0], sizes = [16, 48], strides = [1, 1]} : vector<352x128xf32> to vector<16x48xf32>
    %c4 = arith.constant 4 : index
    %c0_60 = arith.constant 0 : index
    %c0_61 = arith.constant 0 : index
    %179 = vector.load %arg2[%c4, %c0_60, %c0_61] : memref<6x128x128xbf16, #tpu.memory_space<vmem>>, vector<1x128x128xbf16>
    %180 = vector.shape_cast %179 : vector<1x128x128xbf16> to vector<128x128xbf16>
    %181 = arith.truncf %3 : vector<48x128xf32> to vector<48x128xbf16>
    %cst_62 = arith.constant dense<0.000000e+00> : vector<48x128xf32>
    %182 = tpu.matmul %181, %180, %cst_62 {dimension_numbers = #tpu.dot_dimension_numbers<[1], [0], [0], [1], [0, 0, 1, 1], [], []>} : vector<48x128xbf16>, vector<128x128xbf16>, vector<48x128xf32> -> vector<48x128xf32>
    %c4_63 = arith.constant 4 : index
    %c0_64 = arith.constant 0 : index
    %183 = vector.load %arg5[%c4_63, %c0_64] : memref<10x128xf32, #tpu.memory_space<vmem>>, vector<1x128xf32>
    %184 = vector.broadcast %183 : vector<1x128xf32> to vector<48x128xf32>
    %185 = arith.addf %182, %184 : vector<48x128xf32>
    %186 = arith.truncf %5 : vector<16x128xf32> to vector<16x128xbf16>
    %187 = arith.truncf %185 : vector<48x128xf32> to vector<48x128xbf16>
    %cst_65 = arith.constant dense<0.000000e+00> : vector<16x48xf32>
    %188 = tpu.matmul %186, %187, %cst_65 {dimension_numbers = #tpu.dot_dimension_numbers<[1], [1], [0], [0], [0, 0, 1, 0], [], []>} : vector<16x128xbf16>, vector<48x128xbf16>, vector<16x48xf32> -> vector<16x48xf32>
    %cst_66 = arith.constant dense<0xFF800000> : vector<16xf32>
    %189 = vector.multi_reduction <maximumf>, %188, %cst_66 [1] : vector<16x48xf32> to vector<16xf32>
    %190 = vector.shape_cast %189 : vector<16xf32> to vector<16x1xf32>
    %191 = vector.broadcast %190 : vector<16x1xf32> to vector<16x48xf32>
    %192 = arith.subf %188, %191 : vector<16x48xf32>
    %193 = math.exp %192 : vector<16x48xf32>
    %cst_67 = arith.constant dense<0.000000e+00> : vector<16xf32>
    %194 = vector.multi_reduction <add>, %193, %cst_67 [1] : vector<16x48xf32> to vector<16xf32>
    %195 = vector.shape_cast %194 : vector<16xf32> to vector<16x1xf32>
    %196 = tpu.reciprocal %195 {approx = true} : vector<16x1xf32> -> vector<16x1xf32>
    %197 = vector.broadcast %196 : vector<16x1xf32> to vector<16x48xf32>
    %198 = arith.mulf %193, %197 : vector<16x48xf32>
    %199 = arith.mulf %198, %178 : vector<16x48xf32>
    %cst_68 = arith.constant dense<0.000000e+00> : vector<16xf32>
    %200 = vector.multi_reduction <add>, %199, %cst_68 [1] : vector<16x48xf32> to vector<16xf32>
    %201 = vector.shape_cast %200 : vector<16xf32> to vector<16x1xf32>
    %cst_69 = arith.constant 9.99999993E-9 : f32
    %202 = vector.broadcast %cst_69 : f32 to vector<16x1xf32>
    %203 = arith.addf %201, %202 : vector<16x1xf32>
    %204 = tpu.reciprocal %203 {approx = true} : vector<16x1xf32> -> vector<16x1xf32>
    %205 = vector.broadcast %204 : vector<16x1xf32> to vector<16x48xf32>
    %206 = arith.mulf %199, %205 : vector<16x48xf32>
    %207 = arith.truncf %206 : vector<16x48xf32> to vector<16x48xbf16>
    %208 = arith.truncf %3 : vector<48x128xf32> to vector<48x128xbf16>
    %cst_70 = arith.constant dense<0.000000e+00> : vector<16x128xf32>
    %209 = tpu.matmul %207, %208, %cst_70 {dimension_numbers = #tpu.dot_dimension_numbers<[1], [0], [0], [1], [0, 0, 1, 1], [], []>} : vector<16x48xbf16>, vector<48x128xbf16>, vector<16x128xf32> -> vector<16x128xf32>
    %210 = vector.extract_strided_slice %0 {offsets = [64, 0], sizes = [16, 16], strides = [1, 1]} : vector<352x128xf32> to vector<16x16xf32>
    %211 = arith.truncf %210 : vector<16x16xf32> to vector<16x16xbf16>
    %212 = arith.truncf %5 : vector<16x128xf32> to vector<16x128xbf16>
    %cst_71 = arith.constant dense<0.000000e+00> : vector<16x128xf32>
    %213 = tpu.matmul %211, %212, %cst_71 {dimension_numbers = #tpu.dot_dimension_numbers<[1], [0], [0], [1], [0, 0, 1, 1], [], []>} : vector<16x16xbf16>, vector<16x128xbf16>, vector<16x128xf32> -> vector<16x128xf32>
    %214 = tpu.concatenate %5, %177, %209 in 1 : vector<16x128xf32>, vector<16x128xf32>, vector<16x128xf32> -> vector<16x384xf32>
    %c2_72 = arith.constant 2 : index
    %c0_73 = arith.constant 0 : index
    %c0_74 = arith.constant 0 : index
    %215 = vector.load %arg3[%c2_72, %c0_73, %c0_74] : memref<3x384x128xbf16, #tpu.memory_space<vmem>>, vector<1x384x128xbf16>
    %216 = vector.shape_cast %215 : vector<1x384x128xbf16> to vector<384x128xbf16>
    %217 = arith.truncf %214 : vector<16x384xf32> to vector<16x384xbf16>
    %cst_75 = arith.constant dense<0.000000e+00> : vector<16x128xf32>
    %218 = tpu.matmul %217, %216, %cst_75 {dimension_numbers = #tpu.dot_dimension_numbers<[1], [0], [0], [1], [0, 0, 1, 1], [], []>} : vector<16x384xbf16>, vector<384x128xbf16>, vector<16x128xf32> -> vector<16x128xf32>
    %c8 = arith.constant 8 : index
    %c0_76 = arith.constant 0 : index
    %219 = vector.load %arg5[%c8, %c0_76] : memref<10x128xf32, #tpu.memory_space<vmem>>, vector<1x128xf32>
    %220 = vector.broadcast %219 : vector<1x128xf32> to vector<16x128xf32>
    %221 = arith.addf %218, %220 : vector<16x128xf32>
    %222 = tpu.concatenate %177, %209 in 1 : vector<16x128xf32>, vector<16x128xf32> -> vector<16x256xf32>
    %c2_77 = arith.constant 2 : index
    %c0_78 = arith.constant 0 : index
    %c0_79 = arith.constant 0 : index
    %223 = vector.load %arg8[%c2_77, %c0_78, %c0_79] : memref<3x256x256xbf16, #tpu.memory_space<vmem>>, vector<1x256x256xbf16>
    %224 = vector.shape_cast %223 : vector<1x256x256xbf16> to vector<256x256xbf16>
    %225 = arith.truncf %222 : vector<16x256xf32> to vector<16x256xbf16>
    %cst_80 = arith.constant dense<0.000000e+00> : vector<16x256xf32>
    %226 = tpu.matmul %225, %224, %cst_80 {dimension_numbers = #tpu.dot_dimension_numbers<[1], [0], [0], [1], [0, 0, 1, 1], [], []>} : vector<16x256xbf16>, vector<256x256xbf16>, vector<16x256xf32> -> vector<16x256xf32>
    %c2_81 = arith.constant 2 : index
    %c0_82 = arith.constant 0 : index
    %227 = vector.load %arg9[%c2_81, %c0_82] : memref<3x256xf32, #tpu.memory_space<vmem>>, vector<1x256xf32>
    %228 = vector.broadcast %227 : vector<1x256xf32> to vector<16x256xf32>
    %229 = arith.addf %226, %228 : vector<16x256xf32>
    %230 = vector.extract_strided_slice %229 {offsets = [0, 0], sizes = [16, 128], strides = [1, 1]} : vector<16x256xf32> to vector<16x128xf32>
    %231 = arith.addf %221, %230 : vector<16x128xf32>
    %232 = math.tanh %231 : vector<16x128xf32>
    %233 = vector.extract_strided_slice %229 {offsets = [0, 128], sizes = [16, 128], strides = [1, 1]} : vector<16x256xf32> to vector<16x128xf32>
    %234 = arith.addf %221, %233 : vector<16x128xf32>
    %235 = math.tanh %234 : vector<16x128xf32>
    %236 = arith.mulf %232, %177 : vector<16x128xf32>
    %237 = arith.addf %5, %236 : vector<16x128xf32>
    %238 = arith.mulf %235, %209 : vector<16x128xf32>
    %239 = arith.addf %237, %238 : vector<16x128xf32>
    %240 = arith.addf %239, %213 : vector<16x128xf32>
    %241 = vector.extract_strided_slice %0 {offsets = [240, 0], sizes = [32, 32], strides = [1, 1]} : vector<352x128xf32> to vector<32x32xf32>
    %242 = arith.truncf %241 : vector<32x32xf32> to vector<32x32xbf16>
    %243 = arith.truncf %2 : vector<32x128xf32> to vector<32x128xbf16>
    %cst_83 = arith.constant dense<0.000000e+00> : vector<32x128xf32>
    %244 = tpu.matmul %242, %243, %cst_83 {dimension_numbers = #tpu.dot_dimension_numbers<[1], [0], [0], [1], [0, 0, 1, 1], [], []>} : vector<32x32xbf16>, vector<32x128xbf16>, vector<32x128xf32> -> vector<32x128xf32>
    %cst_84 = arith.constant 0.000000e+00 : f32
    %245 = vector.broadcast %cst_84 : f32 to vector<32x128xf32>
    %246 = arith.maximumf %244, %245 : vector<32x128xf32>
    %247 = arith.select %8, %2, %246 : vector<32x128xi1>, vector<32x128xf32>
    %248 = arith.select %8, %246, %2 : vector<32x128xi1>, vector<32x128xf32>
    %249 = tpu.concatenate %247, %248 in 1 : vector<32x128xf32>, vector<32x128xf32> -> vector<32x256xf32>
    %c0_85 = arith.constant 0 : index
    %c0_86 = arith.constant 0 : index
    %250 = vector.load %arg4[%c0_85, %c0_86] : memref<256x128xbf16, #tpu.memory_space<vmem>>, vector<256x128xbf16>
    %251 = arith.truncf %249 : vector<32x256xf32> to vector<32x256xbf16>
    %cst_87 = arith.constant dense<0.000000e+00> : vector<32x128xf32>
    %252 = tpu.matmul %251, %250, %cst_87 {dimension_numbers = #tpu.dot_dimension_numbers<[1], [0], [0], [1], [0, 0, 1, 1], [], []>} : vector<32x256xbf16>, vector<256x128xbf16>, vector<32x128xf32> -> vector<32x128xf32>
    %c9 = arith.constant 9 : index
    %c0_88 = arith.constant 0 : index
    %253 = vector.load %arg5[%c9, %c0_88] : memref<10x128xf32, #tpu.memory_space<vmem>>, vector<1x128xf32>
    %254 = vector.broadcast %253 : vector<1x128xf32> to vector<32x128xf32>
    %255 = arith.addf %252, %254 : vector<32x128xf32>
    %256 = arith.negf %255 : vector<32x128xf32>
    %257 = math.exp %256 : vector<32x128xf32>
    %cst_89 = arith.constant 1.000000e+00 : f32
    %258 = vector.broadcast %cst_89 : f32 to vector<32x128xf32>
    %259 = arith.addf %258, %257 : vector<32x128xf32>
    %260 = arith.divf %258, %259 : vector<32x128xf32>
    %261 = arith.mulf %260, %2 : vector<32x128xf32>
    %cst_90 = arith.constant 1.000000e+00 : f32
    %262 = vector.broadcast %cst_90 : f32 to vector<32x128xf32>
    %263 = arith.subf %262, %260 : vector<32x128xf32>
    %264 = arith.mulf %263, %246 : vector<32x128xf32>
    %265 = arith.addf %261, %264 : vector<32x128xf32>
    %266 = vector.extract_strided_slice %0 {offsets = [272, 0], sizes = [48, 48], strides = [1, 1]} : vector<352x128xf32> to vector<48x48xf32>
    %267 = arith.truncf %266 : vector<48x48xf32> to vector<48x48xbf16>
    %268 = arith.truncf %50 : vector<48x128xf32> to vector<48x128xbf16>
    %cst_91 = arith.constant dense<0.000000e+00> : vector<48x128xf32>
    %269 = tpu.matmul %267, %268, %cst_91 {dimension_numbers = #tpu.dot_dimension_numbers<[1], [0], [0], [1], [0, 0, 1, 1], [], []>} : vector<48x48xbf16>, vector<48x128xbf16>, vector<48x128xf32> -> vector<48x128xf32>
    %cst_92 = arith.constant 0.000000e+00 : f32
    %270 = vector.broadcast %cst_92 : f32 to vector<48x128xf32>
    %271 = arith.maximumf %269, %270 : vector<48x128xf32>
    %272 = arith.select %11, %50, %271 : vector<48x128xi1>, vector<48x128xf32>
    %273 = arith.select %11, %271, %50 : vector<48x128xi1>, vector<48x128xf32>
    %274 = tpu.concatenate %272, %273 in 1 : vector<48x128xf32>, vector<48x128xf32> -> vector<48x256xf32>
    %c0_93 = arith.constant 0 : index
    %c0_94 = arith.constant 0 : index
    %275 = vector.load %arg4[%c0_93, %c0_94] : memref<256x128xbf16, #tpu.memory_space<vmem>>, vector<256x128xbf16>
    %276 = arith.truncf %274 : vector<48x256xf32> to vector<48x256xbf16>
    %cst_95 = arith.constant dense<0.000000e+00> : vector<48x128xf32>
    %277 = tpu.matmul %276, %275, %cst_95 {dimension_numbers = #tpu.dot_dimension_numbers<[1], [0], [0], [1], [0, 0, 1, 1], [], []>} : vector<48x256xbf16>, vector<256x128xbf16>, vector<48x128xf32> -> vector<48x128xf32>
    %c9_96 = arith.constant 9 : index
    %c0_97 = arith.constant 0 : index
    %278 = vector.load %arg5[%c9_96, %c0_97] : memref<10x128xf32, #tpu.memory_space<vmem>>, vector<1x128xf32>
    %279 = vector.broadcast %278 : vector<1x128xf32> to vector<48x128xf32>
    %280 = arith.addf %277, %279 : vector<48x128xf32>
    %281 = arith.negf %280 : vector<48x128xf32>
    %282 = math.exp %281 : vector<48x128xf32>
    %cst_98 = arith.constant 1.000000e+00 : f32
    %283 = vector.broadcast %cst_98 : f32 to vector<48x128xf32>
    %284 = arith.addf %283, %282 : vector<48x128xf32>
    %285 = arith.divf %283, %284 : vector<48x128xf32>
    %286 = arith.mulf %285, %50 : vector<48x128xf32>
    %cst_99 = arith.constant 1.000000e+00 : f32
    %287 = vector.broadcast %cst_99 : f32 to vector<48x128xf32>
    %288 = arith.subf %287, %285 : vector<48x128xf32>
    %289 = arith.mulf %288, %271 : vector<48x128xf32>
    %290 = arith.addf %286, %289 : vector<48x128xf32>
    %291 = vector.extract_strided_slice %0 {offsets = [320, 0], sizes = [32, 32], strides = [1, 1]} : vector<352x128xf32> to vector<32x32xf32>
    %292 = arith.truncf %291 : vector<32x32xf32> to vector<32x32xbf16>
    %293 = arith.truncf %265 : vector<32x128xf32> to vector<32x128xbf16>
    %cst_100 = arith.constant dense<0.000000e+00> : vector<32x128xf32>
    %294 = tpu.matmul %292, %293, %cst_100 {dimension_numbers = #tpu.dot_dimension_numbers<[1], [0], [0], [1], [0, 0, 1, 1], [], []>} : vector<32x32xbf16>, vector<32x128xbf16>, vector<32x128xf32> -> vector<32x128xf32>
    %295 = vector.extract_strided_slice %294 {offsets = [0, 0], sizes = [16, 128], strides = [1, 1]} : vector<32x128xf32> to vector<16x128xf32>
    %296 = vector.extract_strided_slice %290 {offsets = [0, 0], sizes = [24, 128], strides = [1, 1]} : vector<48x128xf32> to vector<24x128xf32>
    %297 = tpu.concatenate %295, %296 in 0 : vector<16x128xf32>, vector<24x128xf32> -> vector<40x128xf32>
    %298 = vector.extract_strided_slice %294 {offsets = [16, 0], sizes = [16, 128], strides = [1, 1]} : vector<32x128xf32> to vector<16x128xf32>
    %299 = vector.extract_strided_slice %290 {offsets = [24, 0], sizes = [24, 128], strides = [1, 1]} : vector<48x128xf32> to vector<24x128xf32>
    %300 = tpu.concatenate %298, %299 in 0 : vector<16x128xf32>, vector<24x128xf32> -> vector<40x128xf32>
    %c0_101 = arith.constant 0 : index
    %c0_102 = arith.constant 0 : index
    %c0_103 = arith.constant 0 : index
    %301 = vector.load %arg2[%c0_101, %c0_102, %c0_103] : memref<6x128x128xbf16, #tpu.memory_space<vmem>>, vector<1x128x128xbf16>
    %302 = vector.shape_cast %301 : vector<1x128x128xbf16> to vector<128x128xbf16>
    %303 = arith.truncf %297 : vector<40x128xf32> to vector<40x128xbf16>
    %cst_104 = arith.constant dense<0.000000e+00> : vector<40x128xf32>
    %304 = tpu.matmul %303, %302, %cst_104 {dimension_numbers = #tpu.dot_dimension_numbers<[1], [0], [0], [1], [0, 0, 1, 1], [], []>} : vector<40x128xbf16>, vector<128x128xbf16>, vector<40x128xf32> -> vector<40x128xf32>
    %c0_105 = arith.constant 0 : index
    %c0_106 = arith.constant 0 : index
    %305 = vector.load %arg5[%c0_105, %c0_106] : memref<10x128xf32, #tpu.memory_space<vmem>>, vector<1x128xf32>
    %306 = vector.broadcast %305 : vector<1x128xf32> to vector<40x128xf32>
    %307 = arith.addf %304, %306 : vector<40x128xf32>
    %cst_107 = arith.constant 0.000000e+00 : f32
    %308 = vector.broadcast %cst_107 : f32 to vector<40x128xf32>
    %309 = arith.maximumf %307, %308 : vector<40x128xf32>
    %310 = arith.addf %309, %297 : vector<40x128xf32>
    %c1_108 = arith.constant 1 : index
    %c0_109 = arith.constant 0 : index
    %c0_110 = arith.constant 0 : index
    %311 = vector.load %arg2[%c1_108, %c0_109, %c0_110] : memref<6x128x128xbf16, #tpu.memory_space<vmem>>, vector<1x128x128xbf16>
    %312 = vector.shape_cast %311 : vector<1x128x128xbf16> to vector<128x128xbf16>
    %313 = arith.truncf %300 : vector<40x128xf32> to vector<40x128xbf16>
    %cst_111 = arith.constant dense<0.000000e+00> : vector<40x128xf32>
    %314 = tpu.matmul %313, %312, %cst_111 {dimension_numbers = #tpu.dot_dimension_numbers<[1], [0], [0], [1], [0, 0, 1, 1], [], []>} : vector<40x128xbf16>, vector<128x128xbf16>, vector<40x128xf32> -> vector<40x128xf32>
    %c1_112 = arith.constant 1 : index
    %c0_113 = arith.constant 0 : index
    %315 = vector.load %arg5[%c1_112, %c0_113] : memref<10x128xf32, #tpu.memory_space<vmem>>, vector<1x128xf32>
    %316 = vector.broadcast %315 : vector<1x128xf32> to vector<40x128xf32>
    %317 = arith.addf %314, %316 : vector<40x128xf32>
    %cst_114 = arith.constant 0.000000e+00 : f32
    %318 = vector.broadcast %cst_114 : f32 to vector<40x128xf32>
    %319 = arith.maximumf %317, %318 : vector<40x128xf32>
    %320 = arith.addf %319, %300 : vector<40x128xf32>
    %321 = vector.extract_strided_slice %310 {offsets = [0, 0], sizes = [16, 128], strides = [1, 1]} : vector<40x128xf32> to vector<16x128xf32>
    %322 = vector.extract_strided_slice %320 {offsets = [0, 0], sizes = [16, 128], strides = [1, 1]} : vector<40x128xf32> to vector<16x128xf32>
    %323 = tpu.concatenate %321, %322 in 0 : vector<16x128xf32>, vector<16x128xf32> -> vector<32x128xf32>
    %324 = vector.extract_strided_slice %310 {offsets = [16, 0], sizes = [24, 128], strides = [1, 1]} : vector<40x128xf32> to vector<24x128xf32>
    %325 = vector.extract_strided_slice %320 {offsets = [16, 0], sizes = [24, 128], strides = [1, 1]} : vector<40x128xf32> to vector<24x128xf32>
    %326 = tpu.concatenate %324, %325 in 0 : vector<24x128xf32>, vector<24x128xf32> -> vector<48x128xf32>
    %327 = vector.extract_strided_slice %0 {offsets = [80, 0], sizes = [48, 16], strides = [1, 1]} : vector<352x128xf32> to vector<48x16xf32>
    %328 = arith.truncf %327 : vector<48x16xf32> to vector<48x16xbf16>
    %329 = arith.truncf %145 : vector<16x128xf32> to vector<16x128xbf16>
    %cst_115 = arith.constant dense<0.000000e+00> : vector<48x128xf32>
    %330 = tpu.matmul %328, %329, %cst_115 {dimension_numbers = #tpu.dot_dimension_numbers<[1], [0], [0], [1], [0, 0, 1, 1], [], []>} : vector<48x16xbf16>, vector<16x128xbf16>, vector<48x128xf32> -> vector<48x128xf32>
    %331 = vector.extract_strided_slice %0 {offsets = [128, 0], sizes = [48, 16], strides = [1, 1]} : vector<352x128xf32> to vector<48x16xf32>
    %332 = arith.truncf %331 : vector<48x16xf32> to vector<48x16xbf16>
    %333 = arith.truncf %240 : vector<16x128xf32> to vector<16x128xbf16>
    %cst_116 = arith.constant dense<0.000000e+00> : vector<48x128xf32>
    %334 = tpu.matmul %332, %333, %cst_116 {dimension_numbers = #tpu.dot_dimension_numbers<[1], [0], [0], [1], [0, 0, 1, 1], [], []>} : vector<48x16xbf16>, vector<16x128xbf16>, vector<48x128xf32> -> vector<48x128xf32>
    %335 = vector.extract_strided_slice %0 {offsets = [0, 0], sizes = [48, 48], strides = [1, 1]} : vector<352x128xf32> to vector<48x48xf32>
    %336 = arith.truncf %335 : vector<48x48xf32> to vector<48x48xbf16>
    %337 = arith.truncf %326 : vector<48x128xf32> to vector<48x128xbf16>
    %cst_117 = arith.constant dense<0.000000e+00> : vector<48x128xf32>
    %338 = tpu.matmul %336, %337, %cst_117 {dimension_numbers = #tpu.dot_dimension_numbers<[1], [0], [0], [1], [0, 0, 1, 1], [], []>} : vector<48x48xbf16>, vector<48x128xbf16>, vector<48x128xf32> -> vector<48x128xf32>
    %339 = tpu.concatenate %326, %330, %334 in 1 : vector<48x128xf32>, vector<48x128xf32>, vector<48x128xf32> -> vector<48x384xf32>
    %c0_118 = arith.constant 0 : index
    %c0_119 = arith.constant 0 : index
    %c0_120 = arith.constant 0 : index
    %340 = vector.load %arg3[%c0_118, %c0_119, %c0_120] : memref<3x384x128xbf16, #tpu.memory_space<vmem>>, vector<1x384x128xbf16>
    %341 = vector.shape_cast %340 : vector<1x384x128xbf16> to vector<384x128xbf16>
    %342 = arith.truncf %339 : vector<48x384xf32> to vector<48x384xbf16>
    %cst_121 = arith.constant dense<0.000000e+00> : vector<48x128xf32>
    %343 = tpu.matmul %342, %341, %cst_121 {dimension_numbers = #tpu.dot_dimension_numbers<[1], [0], [0], [1], [0, 0, 1, 1], [], []>} : vector<48x384xbf16>, vector<384x128xbf16>, vector<48x128xf32> -> vector<48x128xf32>
    %c6_122 = arith.constant 6 : index
    %c0_123 = arith.constant 0 : index
    %344 = vector.load %arg5[%c6_122, %c0_123] : memref<10x128xf32, #tpu.memory_space<vmem>>, vector<1x128xf32>
    %345 = vector.broadcast %344 : vector<1x128xf32> to vector<48x128xf32>
    %346 = arith.addf %343, %345 : vector<48x128xf32>
    %347 = tpu.concatenate %330, %334 in 1 : vector<48x128xf32>, vector<48x128xf32> -> vector<48x256xf32>
    %c0_124 = arith.constant 0 : index
    %c0_125 = arith.constant 0 : index
    %c0_126 = arith.constant 0 : index
    %348 = vector.load %arg8[%c0_124, %c0_125, %c0_126] : memref<3x256x256xbf16, #tpu.memory_space<vmem>>, vector<1x256x256xbf16>
    %349 = vector.shape_cast %348 : vector<1x256x256xbf16> to vector<256x256xbf16>
    %350 = arith.truncf %347 : vector<48x256xf32> to vector<48x256xbf16>
    %cst_127 = arith.constant dense<0.000000e+00> : vector<48x256xf32>
    %351 = tpu.matmul %350, %349, %cst_127 {dimension_numbers = #tpu.dot_dimension_numbers<[1], [0], [0], [1], [0, 0, 1, 1], [], []>} : vector<48x256xbf16>, vector<256x256xbf16>, vector<48x256xf32> -> vector<48x256xf32>
    %c0_128 = arith.constant 0 : index
    %c0_129 = arith.constant 0 : index
    %352 = vector.load %arg9[%c0_128, %c0_129] : memref<3x256xf32, #tpu.memory_space<vmem>>, vector<1x256xf32>
    %353 = vector.broadcast %352 : vector<1x256xf32> to vector<48x256xf32>
    %354 = arith.addf %351, %353 : vector<48x256xf32>
    %355 = vector.extract_strided_slice %354 {offsets = [0, 0], sizes = [48, 128], strides = [1, 1]} : vector<48x256xf32> to vector<48x128xf32>
    %356 = arith.addf %346, %355 : vector<48x128xf32>
    %357 = math.tanh %356 : vector<48x128xf32>
    %358 = vector.extract_strided_slice %354 {offsets = [0, 128], sizes = [48, 128], strides = [1, 1]} : vector<48x256xf32> to vector<48x128xf32>
    %359 = arith.addf %346, %358 : vector<48x128xf32>
    %360 = math.tanh %359 : vector<48x128xf32>
    %361 = arith.mulf %357, %330 : vector<48x128xf32>
    %362 = arith.addf %326, %361 : vector<48x128xf32>
    %363 = arith.mulf %360, %334 : vector<48x128xf32>
    %364 = arith.addf %362, %363 : vector<48x128xf32>
    %365 = arith.addf %364, %338 : vector<48x128xf32>
    %366 = vector.extract_strided_slice %0 {offsets = [240, 0], sizes = [32, 32], strides = [1, 1]} : vector<352x128xf32> to vector<32x32xf32>
    %367 = arith.truncf %366 : vector<32x32xf32> to vector<32x32xbf16>
    %368 = arith.truncf %323 : vector<32x128xf32> to vector<32x128xbf16>
    %cst_130 = arith.constant dense<0.000000e+00> : vector<32x128xf32>
    %369 = tpu.matmul %367, %368, %cst_130 {dimension_numbers = #tpu.dot_dimension_numbers<[1], [0], [0], [1], [0, 0, 1, 1], [], []>} : vector<32x32xbf16>, vector<32x128xbf16>, vector<32x128xf32> -> vector<32x128xf32>
    %cst_131 = arith.constant 0.000000e+00 : f32
    %370 = vector.broadcast %cst_131 : f32 to vector<32x128xf32>
    %371 = arith.maximumf %369, %370 : vector<32x128xf32>
    %372 = arith.select %8, %323, %371 : vector<32x128xi1>, vector<32x128xf32>
    %373 = arith.select %8, %371, %323 : vector<32x128xi1>, vector<32x128xf32>
    %374 = tpu.concatenate %372, %373 in 1 : vector<32x128xf32>, vector<32x128xf32> -> vector<32x256xf32>
    %c0_132 = arith.constant 0 : index
    %c0_133 = arith.constant 0 : index
    %375 = vector.load %arg4[%c0_132, %c0_133] : memref<256x128xbf16, #tpu.memory_space<vmem>>, vector<256x128xbf16>
    %376 = arith.truncf %374 : vector<32x256xf32> to vector<32x256xbf16>
    %cst_134 = arith.constant dense<0.000000e+00> : vector<32x128xf32>
    %377 = tpu.matmul %376, %375, %cst_134 {dimension_numbers = #tpu.dot_dimension_numbers<[1], [0], [0], [1], [0, 0, 1, 1], [], []>} : vector<32x256xbf16>, vector<256x128xbf16>, vector<32x128xf32> -> vector<32x128xf32>
    %c9_135 = arith.constant 9 : index
    %c0_136 = arith.constant 0 : index
    %378 = vector.load %arg5[%c9_135, %c0_136] : memref<10x128xf32, #tpu.memory_space<vmem>>, vector<1x128xf32>
    %379 = vector.broadcast %378 : vector<1x128xf32> to vector<32x128xf32>
    %380 = arith.addf %377, %379 : vector<32x128xf32>
    %381 = arith.negf %380 : vector<32x128xf32>
    %382 = math.exp %381 : vector<32x128xf32>
    %cst_137 = arith.constant 1.000000e+00 : f32
    %383 = vector.broadcast %cst_137 : f32 to vector<32x128xf32>
    %384 = arith.addf %383, %382 : vector<32x128xf32>
    %385 = arith.divf %383, %384 : vector<32x128xf32>
    %386 = arith.mulf %385, %323 : vector<32x128xf32>
    %cst_138 = arith.constant 1.000000e+00 : f32
    %387 = vector.broadcast %cst_138 : f32 to vector<32x128xf32>
    %388 = arith.subf %387, %385 : vector<32x128xf32>
    %389 = arith.mulf %388, %371 : vector<32x128xf32>
    %390 = arith.addf %386, %389 : vector<32x128xf32>
    %391 = vector.extract_strided_slice %0 {offsets = [272, 0], sizes = [48, 48], strides = [1, 1]} : vector<352x128xf32> to vector<48x48xf32>
    %392 = arith.truncf %391 : vector<48x48xf32> to vector<48x48xbf16>
    %393 = arith.truncf %365 : vector<48x128xf32> to vector<48x128xbf16>
    %cst_139 = arith.constant dense<0.000000e+00> : vector<48x128xf32>
    %394 = tpu.matmul %392, %393, %cst_139 {dimension_numbers = #tpu.dot_dimension_numbers<[1], [0], [0], [1], [0, 0, 1, 1], [], []>} : vector<48x48xbf16>, vector<48x128xbf16>, vector<48x128xf32> -> vector<48x128xf32>
    %cst_140 = arith.constant 0.000000e+00 : f32
    %395 = vector.broadcast %cst_140 : f32 to vector<48x128xf32>
    %396 = arith.maximumf %394, %395 : vector<48x128xf32>
    %397 = arith.select %11, %365, %396 : vector<48x128xi1>, vector<48x128xf32>
    %398 = arith.select %11, %396, %365 : vector<48x128xi1>, vector<48x128xf32>
    %399 = tpu.concatenate %397, %398 in 1 : vector<48x128xf32>, vector<48x128xf32> -> vector<48x256xf32>
    %c0_141 = arith.constant 0 : index
    %c0_142 = arith.constant 0 : index
    %400 = vector.load %arg4[%c0_141, %c0_142] : memref<256x128xbf16, #tpu.memory_space<vmem>>, vector<256x128xbf16>
    %401 = arith.truncf %399 : vector<48x256xf32> to vector<48x256xbf16>
    %cst_143 = arith.constant dense<0.000000e+00> : vector<48x128xf32>
    %402 = tpu.matmul %401, %400, %cst_143 {dimension_numbers = #tpu.dot_dimension_numbers<[1], [0], [0], [1], [0, 0, 1, 1], [], []>} : vector<48x256xbf16>, vector<256x128xbf16>, vector<48x128xf32> -> vector<48x128xf32>
    %c9_144 = arith.constant 9 : index
    %c0_145 = arith.constant 0 : index
    %403 = vector.load %arg5[%c9_144, %c0_145] : memref<10x128xf32, #tpu.memory_space<vmem>>, vector<1x128xf32>
    %404 = vector.broadcast %403 : vector<1x128xf32> to vector<48x128xf32>
    %405 = arith.addf %402, %404 : vector<48x128xf32>
    %406 = arith.negf %405 : vector<48x128xf32>
    %407 = math.exp %406 : vector<48x128xf32>
    %cst_146 = arith.constant 1.000000e+00 : f32
    %408 = vector.broadcast %cst_146 : f32 to vector<48x128xf32>
    %409 = arith.addf %408, %407 : vector<48x128xf32>
    %410 = arith.divf %408, %409 : vector<48x128xf32>
    %411 = arith.mulf %410, %365 : vector<48x128xf32>
    %cst_147 = arith.constant 1.000000e+00 : f32
    %412 = vector.broadcast %cst_147 : f32 to vector<48x128xf32>
    %413 = arith.subf %412, %410 : vector<48x128xf32>
    %414 = arith.mulf %413, %396 : vector<48x128xf32>
    %415 = arith.addf %411, %414 : vector<48x128xf32>
    %416 = tpu.concatenate %2, %265, %390 in 1 : vector<32x128xf32>, vector<32x128xf32>, vector<32x128xf32> -> vector<32x384xf32>
    %417 = tpu.concatenate %3, %290, %415 in 1 : vector<48x128xf32>, vector<48x128xf32>, vector<48x128xf32> -> vector<48x384xf32>
    %c0_148 = arith.constant 0 : index
    %c0_149 = arith.constant 0 : index
    %418 = vector.load %arg6[%c0_148, %c0_149] : memref<16x32xf32, #tpu.memory_space<vmem>>, vector<16x32xf32>
    %cst_150 = arith.constant dense<0.000000e+00> : vector<16x384xf32>
    %419 = tpu.matmul %418, %416, %cst_150 {dimension_numbers = #tpu.dot_dimension_numbers<[1], [0], [0], [1], [0, 0, 1, 1], [], []>} : vector<16x32xf32>, vector<32x384xf32>, vector<16x384xf32> -> vector<16x384xf32>
    %c0_151 = arith.constant 0 : index
    %c0_152 = arith.constant 0 : index
    %420 = vector.load %arg7[%c0_151, %c0_152] : memref<16x48xf32, #tpu.memory_space<vmem>>, vector<16x48xf32>
    %cst_153 = arith.constant dense<0.000000e+00> : vector<16x384xf32>
    %421 = tpu.matmul %420, %417, %cst_153 {dimension_numbers = #tpu.dot_dimension_numbers<[1], [0], [0], [1], [0, 0, 1, 1], [], []>} : vector<16x48xf32>, vector<48x384xf32>, vector<16x384xf32> -> vector<16x384xf32>
    %422 = arith.mulf %419, %421 : vector<16x384xf32>
    %cst_154 = arith.constant dense<0.000000e+00> : vector<16xf32>
    %423 = vector.multi_reduction <add>, %422, %cst_154 [1] : vector<16x384xf32> to vector<16xf32>
    %424 = vector.shape_cast %423 : vector<16xf32> to vector<16x1xf32>
    %425 = arith.mulf %419, %419 : vector<16x384xf32>
    %cst_155 = arith.constant dense<0.000000e+00> : vector<16xf32>
    %426 = vector.multi_reduction <add>, %425, %cst_155 [1] : vector<16x384xf32> to vector<16xf32>
    %427 = vector.shape_cast %426 : vector<16xf32> to vector<16x1xf32>
    %428 = arith.mulf %421, %421 : vector<16x384xf32>
    %cst_156 = arith.constant dense<0.000000e+00> : vector<16xf32>
    %429 = vector.multi_reduction <add>, %428, %cst_156 [1] : vector<16x384xf32> to vector<16xf32>
    %430 = vector.shape_cast %429 : vector<16xf32> to vector<16x1xf32>
    %431 = arith.mulf %427, %430 : vector<16x1xf32>
    %cst_157 = arith.constant 1.000000e-16 : f32
    %432 = vector.broadcast %cst_157 : f32 to vector<16x1xf32>
    %433 = arith.maximumf %431, %432 : vector<16x1xf32>
    %434 = math.rsqrt %433 : vector<16x1xf32>
    %435 = arith.mulf %424, %434 : vector<16x1xf32>
    %cst_158 = arith.constant 0.000000e+00 : f32
    %cst_159 = arith.constant 1.000000e+00 : f32
    %436 = vector.broadcast %cst_158 : f32 to vector<16x1xf32>
    %437 = arith.maximumf %436, %435 : vector<16x1xf32>
    %438 = vector.broadcast %cst_159 : f32 to vector<16x1xf32>
    %439 = arith.minimumf %438, %437 : vector<16x1xf32>
    %440 = vector.shape_cast %439 : vector<16x1xf32> to vector<16x1xf32>
    %441 = vector.broadcast %440 : vector<16x1xf32> to vector<16x128xf32>
    %c0_160 = arith.constant 0 : index
    %c0_161 = arith.constant 0 : index
    %442 = vector.load %arg10[%c0_160, %c0_161] : memref<16x128xf32, #tpu.memory_space<vmem>>, vector<16x128xf32>
    tpu.vector_store %arg10[%c0_160, %c0_161], %441 {strides = array<i32>} : memref<16x128xf32, #tpu.memory_space<vmem>>, vector<16x128xf32>,
    return
  }
}

</mosaic_0001>

<llo_original>
// kernel: forward.1
$region0: #{forward.1}
  #allocation0 [shape = 'u32[]', space=smem, size = 0x4, offset = 0x4, fixed_abs, tag = 'smem constant byte address 0x4 - core index']
  #allocation1 [shape = 'u32[72,128]{1,0:T(1,128)}', space=vmem, size = 0x9000, scoped, tag = 'internal scratch']
  %s0 = inlined_call_operand.hbm [shape: f32[112,128], index: 0, kind: input, shape index: {}]
  %s1 = inlined_call_operand.hbm [shape: f32[352,128], index: 1, kind: input, shape index: {}]
  %s2 = inlined_call_operand.hbm [shape: bf16[6,128,128], index: 2, kind: input, shape index: {}]
  %s3 = inlined_call_operand.hbm [shape: bf16[3,384,128], index: 3, kind: input, shape index: {}]
  %s4 = inlined_call_operand.hbm [shape: bf16[256,128], index: 4, kind: input, shape index: {}]
  %s5 = inlined_call_operand.vmem [shape: f32[10,128], index: 5, kind: input, shape index: {}]
  %s6 = inlined_call_operand.vmem [shape: f32[16,32], index: 6, kind: input, shape index: {}]
  %s7 = inlined_call_operand.vmem [shape: f32[16,48], index: 7, kind: input, shape index: {}]
  %s8 = inlined_call_operand.hbm [shape: bf16[3,256,256], index: 8, kind: input, shape index: {}]
  %s9 = inlined_call_operand.vmem [shape: f32[3,256], index: 9, kind: input, shape index: {}]
  %s10 = inlined_call_operand.vmem [shape: f32[16,128], index: 10, kind: output, shape index: {}]
  %s11 = sld [smem:[#allocation0]]
  $region74: #{forward.1} parent=0
    _
  %s13 = ssub.s32 1, %s11
  %s14 = scalar_select 0, %s13, %s11
  $region1: #{forward.1} parent=0
    #allocation2 [shape = 'u8[57344]{0}', space=vmem, size = 0xe000, scoped, tag = 'input window, operand 0, single buffered']
    #allocation3 [shape = 's32[1]{0}', space=sflag, size = 0x4, scoped, tag = 'scoped memory for forward.1']
    #allocation4 [shape = 'u8[180224]{0}', space=vmem, size = 0x2c000, scoped, tag = 'input window, operand 1, single buffered']
    #allocation5 [shape = 's32[1]{0}', space=sflag, size = 0x4, scoped, tag = 'scoped memory for forward.1']
    #allocation6 [shape = 'u8[196608]{0}', space=vmem, size = 0x30000, scoped, tag = 'input window, operand 2, single buffered']
    #allocation7 [shape = 'u8[294912]{0}', space=vmem, size = 0x48000, scoped, tag = 'input window, operand 3, single buffered']
    #allocation8 [shape = 's32[1]{0}', space=sflag, size = 0x4, scoped, tag = 'scoped memory for forward.1']
    #allocation9 [shape = 'u8[65536]{0}', space=vmem, size = 0x10000, scoped, tag = 'input window, operand 4, single buffered']
    #allocation10 [shape = 'u8[393216]{0}', space=vmem, size = 0x60000, scoped, tag = 'input window, operand 8, single buffered']
    #allocation11 [shape = 's32[1]{0}', space=sflag, size = 0x4, scoped, tag = 'scoped memory for forward.1']
    %15 = vsyncpa [#allocation3], 0
    %16 = vsyncpa [#allocation5], 0
    %17 = vsyncpa [#allocation8], 0
    %18 = vsyncpa [#allocation11], 0
    // Predicated region
    $region2: #{forward.1} parent=1 // pred_check
      _
    $region3: #{forward.1} parent=1 // pred_check_branch
      %20 = sbr.rel (0) target = $region5
    $region4: #{forward.1} parent=1 // pred_region
      %22 = vsyncadd [#allocation3], 0
      %s23 = sshll.u32 %s0, 4
      %s24 = int_to_ptr.hbm [resolvable:$true] %s23
      %s25 = sshll.u32 [#allocation2], 4
      %s26 = int_to_ptr.vmem [resolvable:$true] %s25
      %31 = dma.hbm_to_vmem [thread:$0]  %s24, 1792, %s26, [#allocation3], 128, 128, 8
    $region5: #{forward.1} parent=1 // pred_fallthru
      _
    // Predicated region
    $region6: #{forward.1} parent=1 // pred_check
      _
    $region7: #{forward.1} parent=1 // pred_check_branch
      %33 = sbr.rel (0) target = $region9
    $region8: #{forward.1} parent=1 // pred_region
      %35 = vsyncadd [#allocation5], 0
      %s36 = sshll.u32 %s1, 4
      %s37 = int_to_ptr.hbm [resolvable:$true] %s36
      %s38 = sshll.u32 [#allocation4], 4
      %s39 = int_to_ptr.vmem [resolvable:$true] %s38
      %44 = dma.hbm_to_vmem [thread:$0]  %s37, 5632, %s39, [#allocation5], 128, 128, 8
    $region9: #{forward.1} parent=1 // pred_fallthru
      _
    // Predicated region
    $region10: #{forward.1} parent=1 // pred_check
      _
    $region11: #{forward.1} parent=1 // pred_check_branch
      %46 = sbr.rel (0) target = $region13
    $region12: #{forward.1} parent=1 // pred_region
      %48 = vsyncadd [#allocation5], 0
      %s49 = sshll.u32 %s2, 4
      %s50 = int_to_ptr.hbm [resolvable:$true] %s49
      %s51 = sshll.u32 [#allocation6], 4
      %s52 = int_to_ptr.vmem [resolvable:$true] %s51
      %57 = dma.hbm_to_vmem [thread:$0]  %s50, 6144, %s52, [#allocation5], 64, 64, 4
    $region13: #{forward.1} parent=1 // pred_fallthru
      _
    // Predicated region
    $region14: #{forward.1} parent=1 // pred_check
      _
    $region15: #{forward.1} parent=1 // pred_check_branch
      %59 = sbr.rel (0) target = $region17
    $region16: #{forward.1} parent=1 // pred_region
      %61 = vsyncadd [#allocation8], 0
      %s62 = sshll.u32 %s3, 4
      %s63 = int_to_ptr.hbm [resolvable:$true] %s62
      %s64 = sshll.u32 [#allocation7], 4
      %s65 = int_to_ptr.vmem [resolvable:$true] %s64
      %70 = dma.hbm_to_vmem [thread:$0]  %s63, 9216, %s65, [#allocation8], 64, 64, 4
    $region17: #{forward.1} parent=1 // pred_fallthru
      _
    // Predicated region
    $region18: #{forward.1} parent=1 // pred_check
      _
    $region19: #{forward.1} parent=1 // pred_check_branch
      %72 = sbr.rel (0) target = $region21
    $region20: #{forward.1} parent=1 // pred_region
      %74 = vsyncadd [#allocation8], 0
      %s75 = sshll.u32 %s4, 4
      %s76 = int_to_ptr.hbm [resolvable:$true] %s75
      %s77 = sshll.u32 [#allocation9], 4
      %s78 = int_to_ptr.vmem [resolvable:$true] %s77
      %83 = dma.hbm_to_vmem [thread:$0]  %s76, 2048, %s78, [#allocation8], 64, 64, 4
    $region21: #{forward.1} parent=1 // pred_fallthru
      _
    // Predicated region
    $region22: #{forward.1} parent=1 // pred_check
      _
    $region23: #{forward.1} parent=1 // pred_check_branch
      %85 = sbr.rel (0) target = $region25
    $region24: #{forward.1} parent=1 // pred_region
      _
    $region25: #{forward.1} parent=1 // pred_fallthru
      _
    // Predicated region
    $region26: #{forward.1} parent=1 // pred_check
      _
    $region27: #{forward.1} parent=1 // pred_check_branch
      %87 = sbr.rel (0) target = $region29
    $region28: #{forward.1} parent=1 // pred_region
      _
    $region29: #{forward.1} parent=1 // pred_fallthru
      _
    // Predicated region
    $region30: #{forward.1} parent=1 // pred_check
      _
    $region31: #{forward.1} parent=1 // pred_check_branch
      %89 = sbr.rel (0) target = $region33
    $region32: #{forward.1} parent=1 // pred_region
      _
    $region33: #{forward.1} parent=1 // pred_fallthru
      _
    // Predicated region
    $region34: #{forward.1} parent=1 // pred_check
      _
    $region35: #{forward.1} parent=1 // pred_check_branch
      %91 = sbr.rel (0) target = $region37
    $region36: #{forward.1} parent=1 // pred_region
      %93 = vsyncadd [#allocation11], 0
      %s94 = sshll.u32 %s8, 4
      %s95 = int_to_ptr.hbm [resolvable:$true] %s94
      %s96 = sshll.u32 [#allocation10], 4
      %s97 = int_to_ptr.vmem [resolvable:$true] %s96
      %102 = dma.hbm_to_vmem [thread:$0]  %s95, 12288, %s97, [#allocation11], 128, 128, 8
    $region37: #{forward.1} parent=1 // pred_fallthru
      _
    // Predicated region
    $region38: #{forward.1} parent=1 // pred_check
      _
    $region39: #{forward.1} parent=1 // pred_check_branch
      %104 = sbr.rel (0) target = $region41
    $region40: #{forward.1} parent=1 // pred_region
      _
    $region41: #{forward.1} parent=1 // pred_fallthru
      _
    // Predicated region
    $region42: #{forward.1} parent=1 // pred_check
      _
    $region43: #{forward.1} parent=1 // pred_check_branch
      %106 = sbr.rel (0) target = $region45
    $region44: #{forward.1} parent=1 // pred_region
      %108 = dma.done [#allocation3], 1792
    $region45: #{forward.1} parent=1 // pred_fallthru
      _
    // Predicated region
    $region46: #{forward.1} parent=1 // pred_check
      _
    $region47: #{forward.1} parent=1 // pred_check_branch
      %110 = sbr.rel (0) target = $region49
    $region48: #{forward.1} parent=1 // pred_region
      %112 = dma.done [#allocation5], 5632
    $region49: #{forward.1} parent=1 // pred_fallthru
      _
    // Predicated region
    $region50: #{forward.1} parent=1 // pred_check
      _
    $region51: #{forward.1} parent=1 // pred_check_branch
      %114 = sbr.rel (0) target = $region53
    $region52: #{forward.1} parent=1 // pred_region
      %116 = dma.done [#allocation5], 6144
    $region53: #{forward.1} parent=1 // pred_fallthru
      _
    // Predicated region
    $region54: #{forward.1} parent=1 // pred_check
      _
    $region55: #{forward.1} parent=1 // pred_check_branch
      %118 = sbr.rel (0) target = $region57
    $region56: #{forward.1} parent=1 // pred_region
      %120 = dma.done [#allocation8], 9216
    $region57: #{forward.1} parent=1 // pred_fallthru
      _
    // Predicated region
    $region58: #{forward.1} parent=1 // pred_check
      _
    $region59: #{forward.1} parent=1 // pred_check_branch
      %122 = sbr.rel (0) target = $region61
    $region60: #{forward.1} parent=1 // pred_region
      %124 = dma.done [#allocation8], 2048
    $region61: #{forward.1} parent=1 // pred_fallthru
      _
    // Predicated region
    $region62: #{forward.1} parent=1 // pred_check
      _
    $region63: #{forward.1} parent=1 // pred_check_branch
      %126 = sbr.rel (0) target = $region65
    $region64: #{forward.1} parent=1 // pred_region
      %128 = dma.done [#allocation11], 12288
    $region65: #{forward.1} parent=1 // pred_fallthru
      _
    %v130 = vld [vmem:[#allocation4] sm:$0xff]
    %v131 = vld [vmem:[#allocation4 + $0x8] sm:$0xff]
    %v132 = vld [vmem:[#allocation4 + $0x10] sm:$0xff]
    %v133 = vld [vmem:[#allocation4 + $0x18] sm:$0xff]
    %v134 = vld [vmem:[#allocation4 + $0x20] sm:$0xff]
    %v135 = vld [vmem:[#allocation4 + $0x28] sm:$0xff]
    %v136 = vld [vmem:[#allocation4 + $0x30] sm:$0xff]
    %v137 = vld [vmem:[#allocation4 + $0x38] sm:$0xff]
    %v138 = vld [vmem:[#allocation4 + $0x40] sm:$0xff]
    %v139 = vld [vmem:[#allocation4 + $0x48] sm:$0xff]
    %v140 = vld [vmem:[#allocation4 + $0x50] sm:$0xff]
    %v141 = vld [vmem:[#allocation4 + $0x58] sm:$0xff]
    %v142 = vld [vmem:[#allocation4 + $0x60] sm:$0xff]
    %v143 = vld [vmem:[#allocation4 + $0x68] sm:$0xff]
    %v144 = vld [vmem:[#allocation4 + $0x70] sm:$0xff]
    %v145 = vld [vmem:[#allocation4 + $0x78] sm:$0xff]
    %v146 = vld [vmem:[#allocation4 + $0x80] sm:$0xff]
    %v147 = vld [vmem:[#allocation4 + $0x88] sm:$0xff]
    %v148 = vld [vmem:[#allocation4 + $0x90] sm:$0xff]
    %v149 = vld [vmem:[#allocation4 + $0x98] sm:$0xff]
    %v150 = vld [vmem:[#allocation4 + $0xa0] sm:$0xff]
    %v151 = vld [vmem:[#allocation4 + $0xa8] sm:$0xff]
    %v152 = vld [vmem:[#allocation4 + $0xb0] sm:$0xff]
    %v153 = vld [vmem:[#allocation4 + $0xb8] sm:$0xff]
    %v154 = vld [vmem:[#allocation4 + $0xc0] sm:$0xff]
    %v155 = vld [vmem:[#allocation4 + $0xc8] sm:$0xff]
    %v156 = vld [vmem:[#allocation4 + $0xd0] sm:$0xff]
    %v157 = vld [vmem:[#allocation4 + $0xd8] sm:$0xff]
    %v158 = vld [vmem:[#allocation4 + $0xe0] sm:$0xff]
    %v159 = vld [vmem:[#allocation4 + $0xe8] sm:$0xff]
    %v160 = vld [vmem:[#allocation4 + $0xf0] sm:$0xff]
    %v161 = vld [vmem:[#allocation4 + $0xf8] sm:$0xff]
    %v162 = vld [vmem:[#allocation4 + $0x100] sm:$0xff]
    %v163 = vld [vmem:[#allocation4 + $0x108] sm:$0xff]
    %v164 = vld [vmem:[#allocation4 + $0x110] sm:$0xff]
    %v165 = vld [vmem:[#allocation4 + $0x118] sm:$0xff]
    %v166 = vld [vmem:[#allocation4 + $0x120] sm:$0xff]
    %v167 = vld [vmem:[#allocation4 + $0x128] sm:$0xff]
    %v168 = vld [vmem:[#allocation4 + $0x130] sm:$0xff]
    %v169 = vld [vmem:[#allocation4 + $0x138] sm:$0xff]
    %v170 = vld [vmem:[#allocation4 + $0x140] sm:$0xff]
    %v171 = vld [vmem:[#allocation4 + $0x148] sm:$0xff]
    %v172 = vld [vmem:[#allocation4 + $0x150] sm:$0xff]
    %v173 = vld [vmem:[#allocation4 + $0x158] sm:$0xff]
    %v174 = vld [vmem:[#allocation2] sm:$0xff]
    %v175 = vld [vmem:[#allocation2 + $0x8] sm:$0xff]
    %v176 = vld [vmem:[#allocation2 + $0x10] sm:$0xff]
    %v177 = vld [vmem:[#allocation2 + $0x18] sm:$0xff]
    %v178 = vld [vmem:[#allocation2 + $0x20] sm:$0xff]
    %v179 = vld [vmem:[#allocation2 + $0x28] sm:$0xff]
    %v180 = vld [vmem:[#allocation2 + $0x30] sm:$0xff]
    %v181 = vld [vmem:[#allocation2 + $0x38] sm:$0xff]
    %v182 = vld [vmem:[#allocation2 + $0x40] sm:$0xff]
    %v183 = vld [vmem:[#allocation2 + $0x48] sm:$0xff]
    %v184 = vld [vmem:[#allocation2 + $0x50] sm:$0xff]
    %v185 = vld [vmem:[#allocation2 + $0x58] sm:$0xff]
    %v186 = vld [vmem:[#allocation2 + $0x60] sm:$0xff]
    %v187 = vld [vmem:[#allocation2 + $0x68] sm:$0xff]
    %v188 = vlaneseq
    %v189 = vshrl.u32 %v188, 7
    %v190 = vadd.s32 %v189, 8
    %v191 = vadd.s32 %v189, 16
    %v192 = vadd.s32 %v189, 24
    %vm193 = vcmp.lt.s32.totalorder %v189, 16
    %vm194 = vcmp.lt.s32.totalorder %v190, 16
    %vm195 = vcmp.lt.s32.totalorder %v191, 16
    %vm196 = vcmp.lt.s32.totalorder %v192, 16
    %v197 = vadd.s32 %v189, 32
    %v198 = vadd.s32 %v189, 40
    %vm199 = vcmp.lt.s32.totalorder %v189, 24
    %vm200 = vcmp.lt.s32.totalorder %v190, 24
    %vm201 = vcmp.lt.s32.totalorder %v191, 24
    %vm202 = vcmp.lt.s32.totalorder %v192, 24
    %vm203 = vcmp.lt.s32.totalorder %v197, 24
    %vm204 = vcmp.lt.s32.totalorder %v198, 24
    %v205 = vpack.c.bf16 %v141, %v140
    %v206 = vpack.c.bf16 %v143, %v142
    %v207 = vpack.c.bf16 %v145, %v144
    %v208 = vpack.c.bf16 %v185, %v184
    %vm209 = vcmask 130048
    %v211 = vsel %vm209, %v205, 0
    %v214 = vsel %vm209, %v206, 0
    %v217 = vsel %vm209, %v207, 0
    %219 = vmatpush.bf16.msra.mxu0 0
    %220 = vmatpush.bf16.msra.mxu0 0
    %221 = vmatpush.bf16.msra.mxu0 0
    %222 = vmatpush.bf16.msra.mxu0 0
    %223 = vmatpush.bf16.msra.mxu0 0
    %224 = vmatpush.bf16.msra.mxu0 0
    %225 = vmatpush.bf16.msra.mxu0 0
    %226 = vmatpush.bf16.msra.mxu0 %v208
    %227 = vmatmul.bf16.gmra.mxu0 %v211
    %v228 = vpop.f32.mrf.mxu0
    %v229 = vadd.f32 0.0, %v228
    %v230 = vpop.f32.mrf.mxu0
    %v231 = vadd.f32 0.0, %v230
    %232 = vmatmul.bf16.gmra.mxu0 %v214
    %v233 = vpop.f32.mrf.mxu0
    %v234 = vadd.f32 0.0, %v233
    %v235 = vpop.f32.mrf.mxu0
    %v236 = vadd.f32 0.0, %v235
    %237 = vmatmul.bf16.gmra.mxu0 %v217
    %v238 = vpop.f32.mrf.mxu0
    %v239 = vadd.f32 0.0, %v238
    %v240 = vpop.f32.mrf.mxu0
    %v241 = vadd.f32 0.0, %v240
    %242 = vdwg.mxu0
    %v243 = vpack.c.bf16 %v147, %v146
    %v244 = vpack.c.bf16 %v149, %v148
    %v245 = vpack.c.bf16 %v151, %v150
    %v246 = vpack.c.bf16 %v187, %v186
    %v248 = vsel %vm209, %v243, 0
    %v251 = vsel %vm209, %v244, 0
    %v254 = vsel %vm209, %v245, 0
    %256 = vmatpush.bf16.msra.mxu0 0
    %257 = vmatpush.bf16.msra.mxu0 0
    %258 = vmatpush.bf16.msra.mxu0 0
    %259 = vmatpush.bf16.msra.mxu0 0
    %260 = vmatpush.bf16.msra.mxu0 0
    %261 = vmatpush.bf16.msra.mxu0 0
    %262 = vmatpush.bf16.msra.mxu0 0
    %263 = vmatpush.bf16.msra.mxu0 %v246
    %264 = vmatmul.bf16.gmra.mxu0 %v248
    %v265 = vpop.f32.mrf.mxu0
    %v266 = vadd.f32 0.0, %v265
    %v267 = vpop.f32.mrf.mxu0
    %v268 = vadd.f32 0.0, %v267
    %269 = vmatmul.bf16.gmra.mxu0 %v251
    %v270 = vpop.f32.mrf.mxu0
    %v271 = vadd.f32 0.0, %v270
    %v272 = vpop.f32.mrf.mxu0
    %v273 = vadd.f32 0.0, %v272
    %274 = vmatmul.bf16.gmra.mxu0 %v254
    %v275 = vpop.f32.mrf.mxu0
    %v276 = vadd.f32 0.0, %v275
    %v277 = vpop.f32.mrf.mxu0
    %v278 = vadd.f32 0.0, %v277
    %279 = vdwg.mxu0
    %v280 = vpack.c.bf16 %v131, %v130
    %v281 = vpack.c.bf16 %v133, %v132
    %v282 = vpack.c.bf16 %v135, %v134
    %v283 = vpack.c.bf16 %v179, %v178
    %v284 = vpack.c.bf16 %v181, %v180
    %v285 = vpack.c.bf16 %v183, %v182
    %vm286 = vcmask 392192
    %v288 = vsel %vm286, %v280, 0
    %v291 = vsel %vm286, %v281, 0
    %v294 = vsel %vm286, %v282, 0
    %296 = vmatpush.bf16.msra.mxu0 0
    %297 = vmatpush.bf16.msra.mxu0 0
    %298 = vmatpush.bf16.msra.mxu0 0
    %299 = vmatpush.bf16.msra.mxu0 0
    %300 = vmatpush.bf16.msra.mxu0 0
    %301 = vmatpush.bf16.msra.mxu0 %v285
    %302 = vmatpush.bf16.msra.mxu0 %v284
    %303 = vmatpush.bf16.msra.mxu0 %v283
    %304 = vmatmul.bf16.gmra.mxu0 %v288
    %v305 = vpop.f32.mrf.mxu0
    %v306 = vadd.f32 0.0, %v305
    %v307 = vpop.f32.mrf.mxu0
    %v308 = vadd.f32 0.0, %v307
    %309 = vmatmul.bf16.gmra.mxu0 %v291
    %v310 = vpop.f32.mrf.mxu0
    %v311 = vadd.f32 0.0, %v310
    %v312 = vpop.f32.mrf.mxu0
    %v313 = vadd.f32 0.0, %v312
    %314 = vmatmul.bf16.gmra.mxu0 %v294
    %v315 = vpop.f32.mrf.mxu0
    %v316 = vadd.f32 0.0, %v315
    %v317 = vpop.f32.mrf.mxu0
    %v318 = vadd.f32 0.0, %v317
    %319 = vdwg.mxu0
    %v320 = vld [vmem:[#allocation7] sm:$0xf]
    %v321 = vld [vmem:[#allocation7 + $0x4] sm:$0xf]
    %v322 = vld [vmem:[#allocation7 + $0x8] sm:$0xf]
    %v323 = vld [vmem:[#allocation7 + $0xc] sm:$0xf]
    %v324 = vld [vmem:[#allocation7 + $0x10] sm:$0xf]
    %v325 = vld [vmem:[#allocation7 + $0x14] sm:$0xf]
    %v326 = vld [vmem:[#allocation7 + $0x18] sm:$0xf]
    %v327 = vld [vmem:[#allocation7 + $0x1c] sm:$0xf]
    %v328 = vld [vmem:[#allocation7 + $0x20] sm:$0xf]
    %v329 = vld [vmem:[#allocation7 + $0x24] sm:$0xf]
    %v330 = vld [vmem:[#allocation7 + $0x28] sm:$0xf]
    %v331 = vld [vmem:[#allocation7 + $0x2c] sm:$0xf]
    %v332 = vld [vmem:[#allocation7 + $0x30] sm:$0xf]
    %v333 = vld [vmem:[#allocation7 + $0x34] sm:$0xf]
    %v334 = vld [vmem:[#allocation7 + $0x38] sm:$0xf]
    %v335 = vld [vmem:[#allocation7 + $0x3c] sm:$0xf]
    %v336 = vld [vmem:[#allocation7 + $0x40] sm:$0xf]
    %v337 = vld [vmem:[#allocation7 + $0x44] sm:$0xf]
    %v338 = vld [vmem:[#allocation7 + $0x48] sm:$0xf]
    %v339 = vld [vmem:[#allocation7 + $0x4c] sm:$0xf]
    %v340 = vld [vmem:[#allocation7 + $0x50] sm:$0xf]
    %v341 = vld [vmem:[#allocation7 + $0x54] sm:$0xf]
    %v342 = vld [vmem:[#allocation7 + $0x58] sm:$0xf]
    %v343 = vld [vmem:[#allocation7 + $0x5c] sm:$0xf]
    %v344 = vld [vmem:[#allocation7 + $0x60] sm:$0xf]
    %v345 = vld [vmem:[#allocation7 + $0x64] sm:$0xf]
    %v346 = vld [vmem:[#allocation7 + $0x68] sm:$0xf]
    %v347 = vld [vmem:[#allocation7 + $0x6c] sm:$0xf]
    %v348 = vld [vmem:[#allocation7 + $0x70] sm:$0xf]
    %v349 = vld [vmem:[#allocation7 + $0x74] sm:$0xf]
    %v350 = vld [vmem:[#allocation7 + $0x78] sm:$0xf]
    %v351 = vld [vmem:[#allocation7 + $0x7c] sm:$0xf]
    %v352 = vld [vmem:[#allocation7 + $0x80] sm:$0xf]
    %v353 = vld [vmem:[#allocation7 + $0x84] sm:$0xf]
    %v354 = vld [vmem:[#allocation7 + $0x88] sm:$0xf]
    %v355 = vld [vmem:[#allocation7 + $0x8c] sm:$0xf]
    %v356 = vld [vmem:[#allocation7 + $0x90] sm:$0xf]
    %v357 = vld [vmem:[#allocation7 + $0x94] sm:$0xf]
    %v358 = vld [vmem:[#allocation7 + $0x98] sm:$0xf]
    %v359 = vld [vmem:[#allocation7 + $0x9c] sm:$0xf]
    %v360 = vld [vmem:[#allocation7 + $0xa0] sm:$0xf]
    %v361 = vld [vmem:[#allocation7 + $0xa4] sm:$0xf]
    %v362 = vld [vmem:[#allocation7 + $0xa8] sm:$0xf]
    %v363 = vld [vmem:[#allocation7 + $0xac] sm:$0xf]
    %v364 = vld [vmem:[#allocation7 + $0xb0] sm:$0xf]
    %v365 = vld [vmem:[#allocation7 + $0xb4] sm:$0xf]
    %v366 = vld [vmem:[#allocation7 + $0xb8] sm:$0xf]
    %v367 = vld [vmem:[#allocation7 + $0xbc] sm:$0xf]
    %v368 = vpack.c.bf16 %v231, %v229
    %v369 = vpack.c.bf16 %v268, %v266
    %v370 = vpack.c.bf16 %v236, %v234
    %v371 = vpack.c.bf16 %v273, %v271
    %v372 = vpack.c.bf16 %v241, %v239
    %v373 = vpack.c.bf16 %v278, %v276
    %v374 = vld [vmem:[%s5 + $0x6] sm:$0x1]
    %v375 = vperm.slane %v374, 0
    %v424 = vunpack.c.l.b16 %v320
    %v425 = vunpack.c.l.b16 %v321
    %v426 = vunpack.c.l.b16 %v322
    %v427 = vunpack.c.l.b16 %v323
    %v428 = vunpack.c.l.b16 %v324
    %v429 = vunpack.c.l.b16 %v325
    %v430 = vunpack.c.l.b16 %v326
    %v431 = vunpack.c.l.b16 %v327
    %v432 = vunpack.c.l.b16 %v328
    %v433 = vunpack.c.l.b16 %v329
    %v434 = vunpack.c.l.b16 %v330
    %v435 = vunpack.c.l.b16 %v331
    %v436 = vunpack.c.l.b16 %v332
    %v437 = vunpack.c.l.b16 %v333
    %v438 = vunpack.c.l.b16 %v334
    %v439 = vunpack.c.l.b16 %v335
    %v440 = vunpack.c.l.b16 %v336
    %v441 = vunpack.c.l.b16 %v337
    %v442 = vunpack.c.l.b16 %v338
    %v443 = vunpack.c.l.b16 %v339
    %v444 = vunpack.c.l.b16 %v340
    %v445 = vunpack.c.l.b16 %v341
    %v446 = vunpack.c.l.b16 %v342
    %v447 = vunpack.c.l.b16 %v343
    %v448 = vunpack.c.l.b16 %v344
    %v449 = vunpack.c.l.b16 %v345
    %v450 = vunpack.c.l.b16 %v346
    %v451 = vunpack.c.l.b16 %v347
    %v452 = vunpack.c.l.b16 %v348
    %v453 = vunpack.c.l.b16 %v349
    %v454 = vunpack.c.l.b16 %v350
    %v455 = vunpack.c.l.b16 %v351
    %v456 = vunpack.c.l.b16 %v352
    %v457 = vunpack.c.l.b16 %v353
    %v458 = vunpack.c.l.b16 %v354
    %v459 = vunpack.c.l.b16 %v355
    %v460 = vunpack.c.l.b16 %v356
    %v461 = vunpack.c.l.b16 %v357
    %v462 = vunpack.c.l.b16 %v358
    %v463 = vunpack.c.l.b16 %v359
    %v464 = vunpack.c.l.b16 %v360
    %v465 = vunpack.c.l.b16 %v361
    %v466 = vunpack.c.l.b16 %v362
    %v467 = vunpack.c.l.b16 %v363
    %v468 = vunpack.c.l.b16 %v364
    %v469 = vunpack.c.l.b16 %v365
    %v470 = vunpack.c.l.b16 %v366
    %v471 = vunpack.c.l.b16 %v367
    %v472 = vpack.c.b16 %v425, %v424
    %v473 = vpack.c.b16 %v427, %v426
    %v474 = vpack.c.b16 %v429, %v428
    %v475 = vpack.c.b16 %v431, %v430
    %v476 = vpack.c.b16 %v433, %v432
    %v477 = vpack.c.b16 %v435, %v434
    %v478 = vpack.c.b16 %v437, %v436
    %v479 = vpack.c.b16 %v439, %v438
    %v480 = vpack.c.b16 %v441, %v440
    %v481 = vpack.c.b16 %v443, %v442
    %v482 = vpack.c.b16 %v445, %v444
    %v483 = vpack.c.b16 %v447, %v446
    %v484 = vpack.c.b16 %v449, %v448
    %v485 = vpack.c.b16 %v451, %v450
    %v486 = vpack.c.b16 %v453, %v452
    %v487 = vpack.c.b16 %v455, %v454
    %v488 = vpack.c.b16 %v457, %v456
    %v489 = vpack.c.b16 %v459, %v458
    %v490 = vpack.c.b16 %v461, %v460
    %v491 = vpack.c.b16 %v463, %v462
    %v492 = vpack.c.b16 %v465, %v464
    %v493 = vpack.c.b16 %v467, %v466
    %v494 = vpack.c.b16 %v469, %v468
    %v495 = vpack.c.b16 %v471, %v470
    %520 = vmatpush.bf16.msra.mxu0 %v479
    %521 = vmatpush.bf16.msra.mxu0 %v478
    %522 = vmatpush.bf16.msra.mxu0 %v477
    %523 = vmatpush.bf16.msra.mxu0 %v476
    %524 = vmatpush.bf16.msra.mxu0 %v475
    %525 = vmatpush.bf16.msra.mxu0 %v474
    %526 = vmatpush.bf16.msra.mxu0 %v473
    %527 = vmatpush.bf16.msra.mxu0 %v472
    %528 = vmatmul.bf16.gmra.mxu0 %v283
    %v529 = vpop.f32.mrf.mxu0
    %v530 = vadd.f32 %v375, %v529
    %v531 = vpop.f32.mrf.mxu0
    %v532 = vadd.f32 %v375, %v531
    %533 = vmatmul.bf16.gmra.mxu0 %v284
    %v534 = vpop.f32.mrf.mxu0
    %v535 = vadd.f32 %v375, %v534
    %v536 = vpop.f32.mrf.mxu0
    %v537 = vadd.f32 %v375, %v536
    %538 = vmatmul.bf16.gmra.mxu0 %v285
    %v539 = vpop.f32.mrf.mxu0
    %v540 = vadd.f32 %v375, %v539
    %v541 = vpop.f32.mrf.mxu0
    %v542 = vadd.f32 %v375, %v541
    %543 = vdwg.mxu0
    %544 = vmatpush.bf16.msra.mxu0 %v487
    %545 = vmatpush.bf16.msra.mxu0 %v486
    %546 = vmatpush.bf16.msra.mxu0 %v485
    %547 = vmatpush.bf16.msra.mxu0 %v484
    %548 = vmatpush.bf16.msra.mxu0 %v483
    %549 = vmatpush.bf16.msra.mxu0 %v482
    %550 = vmatpush.bf16.msra.mxu0 %v481
    %551 = vmatpush.bf16.msra.mxu0 %v480
    %552 = vmatmul.bf16.gmra.mxu0 %v368
    %v553 = vpop.f32.mrf.mxu0
    %v554 = vadd.f32 %v530, %v553
    %v555 = vpop.f32.mrf.mxu0
    %v556 = vadd.f32 %v532, %v555
    %557 = vmatmul.bf16.gmra.mxu0 %v370
    %v558 = vpop.f32.mrf.mxu0
    %v559 = vadd.f32 %v535, %v558
    %v560 = vpop.f32.mrf.mxu0
    %v561 = vadd.f32 %v537, %v560
    %562 = vmatmul.bf16.gmra.mxu0 %v372
    %v563 = vpop.f32.mrf.mxu0
    %v564 = vadd.f32 %v540, %v563
    %v565 = vpop.f32.mrf.mxu0
    %v566 = vadd.f32 %v542, %v565
    %567 = vdwg.mxu0
    %568 = vmatpush.bf16.msra.mxu0 %v495
    %569 = vmatpush.bf16.msra.mxu0 %v494
    %570 = vmatpush.bf16.msra.mxu0 %v493
    %571 = vmatpush.bf16.msra.mxu0 %v492
    %572 = vmatpush.bf16.msra.mxu0 %v491
    %573 = vmatpush.bf16.msra.mxu0 %v490
    %574 = vmatpush.bf16.msra.mxu0 %v489
    %575 = vmatpush.bf16.msra.mxu0 %v488
    %576 = vmatmul.bf16.gmra.mxu0 %v369
    %v577 = vpop.f32.mrf.mxu0
    %v578 = vadd.f32 %v554, %v577
    %v579 = vpop.f32.mrf.mxu0
    %v580 = vadd.f32 %v556, %v579
    %581 = vmatmul.bf16.gmra.mxu0 %v371
    %v582 = vpop.f32.mrf.mxu0
    %v583 = vadd.f32 %v559, %v582
    %v584 = vpop.f32.mrf.mxu0
    %v585 = vadd.f32 %v561, %v584
    %586 = vmatmul.bf16.gmra.mxu0 %v373
    %v587 = vpop.f32.mrf.mxu0
    %v588 = vadd.f32 %v564, %v587
    %v589 = vpop.f32.mrf.mxu0
    %v590 = vadd.f32 %v566, %v589
    %591 = vdwg.mxu0
    %v592 = vld [vmem:[#allocation10] sm:$0xff]
    %v593 = vld [vmem:[#allocation10 + $0x8] sm:$0xff]
    %v594 = vld [vmem:[#allocation10 + $0x10] sm:$0xff]
    %v595 = vld [vmem:[#allocation10 + $0x18] sm:$0xff]
    %v596 = vld [vmem:[#allocation10 + $0x20] sm:$0xff]
    %v597 = vld [vmem:[#allocation10 + $0x28] sm:$0xff]
    %v598 = vld [vmem:[#allocation10 + $0x30] sm:$0xff]
    %v599 = vld [vmem:[#allocation10 + $0x38] sm:$0xff]
    %v600 = vld [vmem:[#allocation10 + $0x40] sm:$0xff]
    %v601 = vld [vmem:[#allocation10 + $0x48] sm:$0xff]
    %v602 = vld [vmem:[#allocation10 + $0x50] sm:$0xff]
    %v603 = vld [vmem:[#allocation10 + $0x58] sm:$0xff]
    %v604 = vld [vmem:[#allocation10 + $0x60] sm:$0xff]
    %v605 = vld [vmem:[#allocation10 + $0x68] sm:$0xff]
    %v606 = vld [vmem:[#allocation10 + $0x70] sm:$0xff]
    %v607 = vld [vmem:[#allocation10 + $0x78] sm:$0xff]
    %v608 = vld [vmem:[#allocation10 + $0x80] sm:$0xff]
    %v609 = vld [vmem:[#allocation10 + $0x88] sm:$0xff]
    %v610 = vld [vmem:[#allocation10 + $0x90] sm:$0xff]
    %v611 = vld [vmem:[#allocation10 + $0x98] sm:$0xff]
    %v612 = vld [vmem:[#allocation10 + $0xa0] sm:$0xff]
    %v613 = vld [vmem:[#allocation10 + $0xa8] sm:$0xff]
    %v614 = vld [vmem:[#allocation10 + $0xb0] sm:$0xff]
    %v615 = vld [vmem:[#allocation10 + $0xb8] sm:$0xff]
    %v616 = vld [vmem:[#allocation10 + $0xc0] sm:$0xff]
    %v617 = vld [vmem:[#allocation10 + $0xc8] sm:$0xff]
    %v618 = vld [vmem:[#allocation10 + $0xd0] sm:$0xff]
    %v619 = vld [vmem:[#allocation10 + $0xd8] sm:$0xff]
    %v620 = vld [vmem:[#allocation10 + $0xe0] sm:$0xff]
    %v621 = vld [vmem:[#allocation10 + $0xe8] sm:$0xff]
    %v622 = vld [vmem:[#allocation10 + $0xf0] sm:$0xff]
    %v623 = vld [vmem:[#allocation10 + $0xf8] sm:$0xff]
    %v624 = vld [vmem:[%s9] ss:$4 sm:$0x3]
    %v626 = vperm.slane %v624, 0
    %v627 = vperm.slane %v624, 1
    %v662 = vunpack.c.l.b16 %v592
    %v663 = vunpack.c.h.b16 %v592
    %v664 = vunpack.c.l.b16 %v593
    %v665 = vunpack.c.h.b16 %v593
    %v666 = vunpack.c.l.b16 %v594
    %v667 = vunpack.c.h.b16 %v594
    %v668 = vunpack.c.l.b16 %v595
    %v669 = vunpack.c.h.b16 %v595
    %v670 = vunpack.c.l.b16 %v596
    %v671 = vunpack.c.h.b16 %v596
    %v672 = vunpack.c.l.b16 %v597
    %v673 = vunpack.c.h.b16 %v597
    %v674 = vunpack.c.l.b16 %v598
    %v675 = vunpack.c.h.b16 %v598
    %v676 = vunpack.c.l.b16 %v599
    %v677 = vunpack.c.h.b16 %v599
    %v678 = vunpack.c.l.b16 %v600
    %v679 = vunpack.c.h.b16 %v600
    %v680 = vunpack.c.l.b16 %v601
    %v681 = vunpack.c.h.b16 %v601
    %v682 = vunpack.c.l.b16 %v602
    %v683 = vunpack.c.h.b16 %v602
    %v684 = vunpack.c.l.b16 %v603
    %v685 = vunpack.c.h.b16 %v603
    %v686 = vunpack.c.l.b16 %v604
    %v687 = vunpack.c.h.b16 %v604
    %v688 = vunpack.c.l.b16 %v605
    %v689 = vunpack.c.h.b16 %v605
    %v690 = vunpack.c.l.b16 %v606
    %v691 = vunpack.c.h.b16 %v606
    %v692 = vunpack.c.l.b16 %v607
    %v693 = vunpack.c.h.b16 %v607
    %v694 = vunpack.c.l.b16 %v608
    %v695 = vunpack.c.h.b16 %v608
    %v696 = vunpack.c.l.b16 %v609
    %v697 = vunpack.c.h.b16 %v609
    %v698 = vunpack.c.l.b16 %v610
    %v699 = vunpack.c.h.b16 %v610
    %v700 = vunpack.c.l.b16 %v611
    %v701 = vunpack.c.h.b16 %v611
    %v702 = vunpack.c.l.b16 %v612
    %v703 = vunpack.c.h.b16 %v612
    %v704 = vunpack.c.l.b16 %v613
    %v705 = vunpack.c.h.b16 %v613
    %v706 = vunpack.c.l.b16 %v614
    %v707 = vunpack.c.h.b16 %v614
    %v708 = vunpack.c.l.b16 %v615
    %v709 = vunpack.c.h.b16 %v615
    %v710 = vunpack.c.l.b16 %v616
    %v711 = vunpack.c.h.b16 %v616
    %v712 = vunpack.c.l.b16 %v617
    %v713 = vunpack.c.h.b16 %v617
    %v714 = vunpack.c.l.b16 %v618
    %v715 = vunpack.c.h.b16 %v618
    %v716 = vunpack.c.l.b16 %v619
    %v717 = vunpack.c.h.b16 %v619
    %v718 = vunpack.c.l.b16 %v620
    %v719 = vunpack.c.h.b16 %v620
    %v720 = vunpack.c.l.b16 %v621
    %v721 = vunpack.c.h.b16 %v621
    %v722 = vunpack.c.l.b16 %v622
    %v723 = vunpack.c.h.b16 %v622
    %v724 = vunpack.c.l.b16 %v623
    %v725 = vunpack.c.h.b16 %v623
    %v726 = vpack.c.b16 %v664, %v662
    %v727 = vpack.c.b16 %v665, %v663
    %v728 = vpack.c.b16 %v668, %v666
    %v729 = vpack.c.b16 %v669, %v667
    %v730 = vpack.c.b16 %v672, %v670
    %v731 = vpack.c.b16 %v673, %v671
    %v732 = vpack.c.b16 %v676, %v674
    %v733 = vpack.c.b16 %v677, %v675
    %v734 = vpack.c.b16 %v680, %v678
    %v735 = vpack.c.b16 %v681, %v679
    %v736 = vpack.c.b16 %v684, %v682
    %v737 = vpack.c.b16 %v685, %v683
    %v738 = vpack.c.b16 %v688, %v686
    %v739 = vpack.c.b16 %v689, %v687
    %v740 = vpack.c.b16 %v692, %v690
    %v741 = vpack.c.b16 %v693, %v691
    %v742 = vpack.c.b16 %v696, %v694
    %v743 = vpack.c.b16 %v697, %v695
    %v744 = vpack.c.b16 %v700, %v698
    %v745 = vpack.c.b16 %v701, %v699
    %v746 = vpack.c.b16 %v704, %v702
    %v747 = vpack.c.b16 %v705, %v703
    %v748 = vpack.c.b16 %v708, %v706
    %v749 = vpack.c.b16 %v709, %v707
    %v750 = vpack.c.b16 %v712, %v710
    %v751 = vpack.c.b16 %v713, %v711
    %v752 = vpack.c.b16 %v716, %v714
    %v753 = vpack.c.b16 %v717, %v715
    %v754 = vpack.c.b16 %v720, %v718
    %v755 = vpack.c.b16 %v721, %v719
    %v756 = vpack.c.b16 %v724, %v722
    %v757 = vpack.c.b16 %v725, %v723
    %790 = vmatpush.bf16.msra.mxu0 %v740
    %791 = vmatpush.bf16.msra.mxu0 %v738
    %792 = vmatpush.bf16.msra.mxu0 %v736
    %793 = vmatpush.bf16.msra.mxu0 %v734
    %794 = vmatpush.bf16.msra.mxu0 %v732
    %795 = vmatpush.bf16.msra.mxu0 %v730
    %796 = vmatpush.bf16.msra.mxu0 %v728
    %797 = vmatpush.bf16.msra.mxu0 %v726
    %798 = vmatmul.bf16.gmra.mxu0 %v368
    %v799 = vpop.f32.mrf.mxu0
    %v800 = vadd.f32 %v626, %v799
    %v801 = vpop.f32.mrf.mxu0
    %v802 = vadd.f32 %v626, %v801
    %803 = vmatmul.bf16.gmra.mxu0 %v370
    %v804 = vpop.f32.mrf.mxu0
    %v805 = vadd.f32 %v626, %v804
    %v806 = vpop.f32.mrf.mxu0
    %v807 = vadd.f32 %v626, %v806
    %808 = vmatmul.bf16.gmra.mxu0 %v372
    %v809 = vpop.f32.mrf.mxu0
    %v810 = vadd.f32 %v626, %v809
    %v811 = vpop.f32.mrf.mxu0
    %v812 = vadd.f32 %v626, %v811
    %813 = vdwg.mxu0
    %814 = vmatpush.bf16.msra.mxu0 %v756
    %815 = vmatpush.bf16.msra.mxu0 %v754
    %816 = vmatpush.bf16.msra.mxu0 %v752
    %817 = vmatpush.bf16.msra.mxu0 %v750
    %818 = vmatpush.bf16.msra.mxu0 %v748
    %819 = vmatpush.bf16.msra.mxu0 %v746
    %820 = vmatpush.bf16.msra.mxu0 %v744
    %821 = vmatpush.bf16.msra.mxu0 %v742
    %822 = vmatmul.bf16.gmra.mxu0 %v369
    %v823 = vpop.f32.mrf.mxu0
    %v824 = vadd.f32 %v800, %v823
    %v825 = vpop.f32.mrf.mxu0
    %v826 = vadd.f32 %v802, %v825
    %827 = vmatmul.bf16.gmra.mxu0 %v371
    %v828 = vpop.f32.mrf.mxu0
    %v829 = vadd.f32 %v805, %v828
    %v830 = vpop.f32.mrf.mxu0
    %v831 = vadd.f32 %v807, %v830
    %832 = vmatmul.bf16.gmra.mxu0 %v373
    %v833 = vpop.f32.mrf.mxu0
    %v834 = vadd.f32 %v810, %v833
    %v835 = vpop.f32.mrf.mxu0
    %v836 = vadd.f32 %v812, %v835
    %837 = vdwg.mxu0
    %838 = vmatpush.bf16.msra.mxu0 %v741
    %839 = vmatpush.bf16.msra.mxu0 %v739
    %840 = vmatpush.bf16.msra.mxu0 %v737
    %841 = vmatpush.bf16.msra.mxu0 %v735
    %842 = vmatpush.bf16.msra.mxu0 %v733
    %843 = vmatpush.bf16.msra.mxu0 %v731
    %844 = vmatpush.bf16.msra.mxu0 %v729
    %845 = vmatpush.bf16.msra.mxu0 %v727
    %846 = vmatmul.bf16.gmra.mxu0 %v368
    %v847 = vpop.f32.mrf.mxu0
    %v848 = vadd.f32 %v627, %v847
    %v849 = vpop.f32.mrf.mxu0
    %v850 = vadd.f32 %v627, %v849
    %851 = vmatmul.bf16.gmra.mxu0 %v370
    %v852 = vpop.f32.mrf.mxu0
    %v853 = vadd.f32 %v627, %v852
    %v854 = vpop.f32.mrf.mxu0
    %v855 = vadd.f32 %v627, %v854
    %856 = vmatmul.bf16.gmra.mxu0 %v372
    %v857 = vpop.f32.mrf.mxu0
    %v858 = vadd.f32 %v627, %v857
    %v859 = vpop.f32.mrf.mxu0
    %v860 = vadd.f32 %v627, %v859
    %861 = vdwg.mxu0
    %862 = vmatpush.bf16.msra.mxu0 %v757
    %863 = vmatpush.bf16.msra.mxu0 %v755
    %864 = vmatpush.bf16.msra.mxu0 %v753
    %865 = vmatpush.bf16.msra.mxu0 %v751
    %866 = vmatpush.bf16.msra.mxu0 %v749
    %867 = vmatpush.bf16.msra.mxu0 %v747
    %868 = vmatpush.bf16.msra.mxu0 %v745
    %869 = vmatpush.bf16.msra.mxu0 %v743
    %870 = vmatmul.bf16.gmra.mxu0 %v369
    %v871 = vpop.f32.mrf.mxu0
    %v872 = vadd.f32 %v848, %v871
    %v873 = vpop.f32.mrf.mxu0
    %v874 = vadd.f32 %v850, %v873
    %875 = vmatmul.bf16.gmra.mxu0 %v371
    %v876 = vpop.f32.mrf.mxu0
    %v877 = vadd.f32 %v853, %v876
    %v878 = vpop.f32.mrf.mxu0
    %v879 = vadd.f32 %v855, %v878
    %880 = vmatmul.bf16.gmra.mxu0 %v373
    %v881 = vpop.f32.mrf.mxu0
    %v882 = vadd.f32 %v858, %v881
    %v883 = vpop.f32.mrf.mxu0
    %v884 = vadd.f32 %v860, %v883
    %885 = vdwg.mxu0
    %v886 = vadd.f32 %v578, %v824
    %v887 = vadd.f32 %v580, %v826
    %v888 = vadd.f32 %v583, %v829
    %v889 = vadd.f32 %v585, %v831
    %v890 = vadd.f32 %v588, %v834
    %v891 = vadd.f32 %v590, %v836
    %v892 = vtanh.pop %v886
    %v893 = vtanh.pop %v887
    %v894 = vtanh.pop %v888
    %v895 = vtanh.pop %v889
    %v896 = vtanh.pop %v890
    %v897 = vtanh.pop %v891
    %v898 = vadd.f32 %v578, %v872
    %v899 = vadd.f32 %v580, %v874
    %v900 = vadd.f32 %v583, %v877
    %v901 = vadd.f32 %v585, %v879
    %v902 = vadd.f32 %v588, %v882
    %v903 = vadd.f32 %v590, %v884
    %v904 = vtanh.pop %v898
    %v905 = vtanh.pop %v899
    %v906 = vtanh.pop %v900
    %v907 = vtanh.pop %v901
    %v908 = vtanh.pop %v902
    %v909 = vtanh.pop %v903
    %v910 = vmul.f32 %v892, %v229
    %v911 = vmul.f32 %v893, %v231
    %v912 = vmul.f32 %v894, %v234
    %v913 = vmul.f32 %v895, %v236
    %v914 = vmul.f32 %v896, %v239
    %v915 = vmul.f32 %v897, %v241
    %v916 = vadd.f32 %v178, %v910
    %v917 = vadd.f32 %v179, %v911
    %v918 = vadd.f32 %v180, %v912
    %v919 = vadd.f32 %v181, %v913
    %v920 = vadd.f32 %v182, %v914
    %v921 = vadd.f32 %v183, %v915
    %v922 = vmul.f32 %v904, %v266
    %v923 = vmul.f32 %v905, %v268
    %v924 = vmul.f32 %v906, %v271
    %v925 = vmul.f32 %v907, %v273
    %v926 = vmul.f32 %v908, %v276
    %v927 = vmul.f32 %v909, %v278
    %v928 = vadd.f32 %v916, %v922
    %v929 = vadd.f32 %v917, %v923
    %v930 = vadd.f32 %v918, %v924
    %v931 = vadd.f32 %v919, %v925
    %v932 = vadd.f32 %v920, %v926
    %v933 = vadd.f32 %v921, %v927
    %v934 = vadd.f32 %v928, %v306
    %v935 = vadd.f32 %v929, %v308
    %v936 = vadd.f32 %v930, %v311
    %v937 = vadd.f32 %v931, %v313
    %v938 = vadd.f32 %v932, %v316
    %v939 = vadd.f32 %v933, %v318
    %s940 = scalar_lea.vmem [#allocation6], 128
    %v941 = vld [vmem:[%s940] sm:$0xf]
    %v942 = vld [vmem:[%s940 + $0x4] sm:$0xf]
    %v943 = vld [vmem:[%s940 + $0x8] sm:$0xf]
    %v944 = vld [vmem:[%s940 + $0xc] sm:$0xf]
    %v945 = vld [vmem:[%s940 + $0x10] sm:$0xf]
    %v946 = vld [vmem:[%s940 + $0x14] sm:$0xf]
    %v947 = vld [vmem:[%s940 + $0x18] sm:$0xf]
    %v948 = vld [vmem:[%s940 + $0x1c] sm:$0xf]
    %v949 = vld [vmem:[%s940 + $0x20] sm:$0xf]
    %v950 = vld [vmem:[%s940 + $0x24] sm:$0xf]
    %v951 = vld [vmem:[%s940 + $0x28] sm:$0xf]
    %v952 = vld [vmem:[%s940 + $0x2c] sm:$0xf]
    %v953 = vld [vmem:[%s940 + $0x30] sm:$0xf]
    %v954 = vld [vmem:[%s940 + $0x34] sm:$0xf]
    %v955 = vld [vmem:[%s940 + $0x38] sm:$0xf]
    %v956 = vld [vmem:[%s940 + $0x3c] sm:$0xf]
    %v957 = vld [vmem:[%s5 + $0x2] sm:$0x1]
    %v958 = vperm.slane %v957, 0
    %v975 = vunpack.c.l.b16 %v941
    %v976 = vunpack.c.l.b16 %v942
    %v977 = vunpack.c.l.b16 %v943
    %v978 = vunpack.c.l.b16 %v944
    %v979 = vunpack.c.l.b16 %v945
    %v980 = vunpack.c.l.b16 %v946
    %v981 = vunpack.c.l.b16 %v947
    %v982 = vunpack.c.l.b16 %v948
    %v983 = vunpack.c.l.b16 %v949
    %v984 = vunpack.c.l.b16 %v950
    %v985 = vunpack.c.l.b16 %v951
    %v986 = vunpack.c.l.b16 %v952
    %v987 = vunpack.c.l.b16 %v953
    %v988 = vunpack.c.l.b16 %v954
    %v989 = vunpack.c.l.b16 %v955
    %v990 = vunpack.c.l.b16 %v956
    %v991 = vpack.c.b16 %v976, %v975
    %v992 = vpack.c.b16 %v978, %v977
    %v993 = vpack.c.b16 %v980, %v979
    %v994 = vpack.c.b16 %v982, %v981
    %v995 = vpack.c.b16 %v984, %v983
    %v996 = vpack.c.b16 %v986, %v985
    %v997 = vpack.c.b16 %v988, %v987
    %v998 = vpack.c.b16 %v990, %v989
    %1007 = vmatpush.bf16.msra.mxu0 %v998
    %1008 = vmatpush.bf16.msra.mxu0 %v997
    %1009 = vmatpush.bf16.msra.mxu0 %v996
    %1010 = vmatpush.bf16.msra.mxu0 %v995
    %1011 = vmatpush.bf16.msra.mxu0 %v994
    %1012 = vmatpush.bf16.msra.mxu0 %v993
    %1013 = vmatpush.bf16.msra.mxu0 %v992
    %1014 = vmatpush.bf16.msra.mxu0 %v991
    %1015 = vmatmul.bf16.gmra.mxu0 %v283
    %v1016 = vpop.f32.mrf.mxu0
    %v1017 = vadd.f32 %v958, %v1016
    %v1018 = vpop.f32.mrf.mxu0
    %v1019 = vadd.f32 %v958, %v1018
    %1020 = vmatmul.bf16.gmra.mxu0 %v284
    %v1021 = vpop.f32.mrf.mxu0
    %v1022 = vadd.f32 %v958, %v1021
    %v1023 = vpop.f32.mrf.mxu0
    %v1024 = vadd.f32 %v958, %v1023
    %1025 = vmatmul.bf16.gmra.mxu0 %v285
    %v1026 = vpop.f32.mrf.mxu0
    %v1027 = vadd.f32 %v958, %v1026
    %v1028 = vpop.f32.mrf.mxu0
    %v1029 = vadd.f32 %v958, %v1028
    %1030 = vdwg.mxu0
    %v1031 = vpack.c.bf16 %v1019, %v1017
    %v1032 = vpack.c.bf16 %v1024, %v1022
    %v1033 = vpack.c.bf16 %v1029, %v1027
    %1034 = vmatpush.bf16.xpose.msra.mxu0 0
    %1035 = vmatpush.bf16.xpose.msra.mxu0 0
    %1036 = vmatpush.bf16.xpose.msra.mxu0 0
    %1037 = vmatpush.bf16.xpose.msra.mxu0 0
    %1038 = vmatpush.bf16.xpose.msra.mxu0 0
    %1039 = vmatpush.bf16.xpose.msra.mxu0 %v1033
    %1040 = vmatpush.bf16.xpose.msra.mxu0 %v1032
    %1041 = vmatpush.bf16.xpose.msra.mxu0 %v1031
    %1042 = vmatmul.bf16.gmra.mxu0 %v208
    %v1043 = vpop.f32.mrf.mxu0
    %v1044 = vadd.f32 0.0, %v1043
    %v1045 = vpop.f32.mrf.mxu0
    %v1046 = vadd.f32 0.0, %v1045
    %1047 = vdwg.mxu0
    %v1048 = vsel %vm286, %v1044, -inf
    %1049 = vmax.xlane.f32.xlu0 %v1048
    %v1050 = vpop.xlane.xlu0 %1049
    %v1051 = vsel %vm286, %v1046, -inf
    %1052 = vmax.xlane.f32.xlu0 %v1051
    %v1053 = vpop.xlane.xlu0 %1052
    %v1054 = vsub.f32 %v1044, %v1050
    %v1055 = vsub.f32 %v1046, %v1053
    %v1056 = vmul.f32 %v1054, 1.442695
    %v1057 = vpow.pop %v1056
    %v1058 = vmul.f32 %v1055, 1.442695
    %v1059 = vpow.pop %v1058
    %v1060 = vsel %vm286, %v1057, 0.0
    %1061 = vadd.xlane.f32.xlu0 %v1060
    %v1062 = vpop.xlane.xlu0 %1061
    %v1063 = vsel %vm286, %v1059, 0.0
    %1064 = vadd.xlane.f32.xlu0 %v1063
    %v1065 = vpop.xlane.xlu0 %1064
    %v1066 = vrcp.pop %v1062
    %v1067 = vrcp.pop %v1065
    %v1068 = vmul.f32 %v1057, %v1066
    %v1069 = vmul.f32 %v1059, %v1067
    %v1070 = vmul.f32 %v1068, %v152
    %v1071 = vmul.f32 %v1069, %v153
    %v1072 = vsel %vm286, %v1070, 0.0
    %1073 = vadd.xlane.f32.xlu0 %v1072
    %v1074 = vpop.xlane.xlu0 %1073
    %v1075 = vsel %vm286, %v1071, 0.0
    %1076 = vadd.xlane.f32.xlu0 %v1075
    %v1077 = vpop.xlane.xlu0 %1076
    %v1078 = vadd.f32 %v1074, 1e-08
    %v1079 = vadd.f32 %v1077, 1e-08
    %v1080 = vrcp.pop %v1078
    %v1081 = vrcp.pop %v1079
    %v1082 = vmul.f32 %v1070, %v1080
    %v1083 = vmul.f32 %v1071, %v1081
    %v1084 = vpack.c.bf16 %v1083, %v1082
    %v1086 = vsel %vm286, %v1084, 0
    %1088 = vmatpush.bf16.msra.mxu0 0
    %1089 = vmatpush.bf16.msra.mxu0 0
    %1090 = vmatpush.bf16.msra.mxu0 0
    %1091 = vmatpush.bf16.msra.mxu0 0
    %1092 = vmatpush.bf16.msra.mxu0 0
    %1093 = vmatpush.bf16.msra.mxu0 %v285
    %1094 = vmatpush.bf16.msra.mxu0 %v284
    %1095 = vmatpush.bf16.msra.mxu0 %v283
    %1096 = vmatmul.bf16.gmra.mxu0 %v1086
    %v1097 = vpop.f32.mrf.mxu0
    %v1098 = vadd.f32 0.0, %v1097
    %v1099 = vpop.f32.mrf.mxu0
    %v1100 = vadd.f32 0.0, %v1099
    %1101 = vdwg.mxu0
    %s1102 = scalar_lea.vmem [#allocation6], 192
    %v1103 = vld [vmem:[%s1102] sm:$0xf]
    %v1104 = vld [vmem:[%s1102 + $0x4] sm:$0xf]
    %v1105 = vld [vmem:[%s1102 + $0x8] sm:$0xf]
    %v1106 = vld [vmem:[%s1102 + $0xc] sm:$0xf]
    %v1107 = vld [vmem:[%s1102 + $0x10] sm:$0xf]
    %v1108 = vld [vmem:[%s1102 + $0x14] sm:$0xf]
    %v1109 = vld [vmem:[%s1102 + $0x18] sm:$0xf]
    %v1110 = vld [vmem:[%s1102 + $0x1c] sm:$0xf]
    %v1111 = vld [vmem:[%s1102 + $0x20] sm:$0xf]
    %v1112 = vld [vmem:[%s1102 + $0x24] sm:$0xf]
    %v1113 = vld [vmem:[%s1102 + $0x28] sm:$0xf]
    %v1114 = vld [vmem:[%s1102 + $0x2c] sm:$0xf]
    %v1115 = vld [vmem:[%s1102 + $0x30] sm:$0xf]
    %v1116 = vld [vmem:[%s1102 + $0x34] sm:$0xf]
    %v1117 = vld [vmem:[%s1102 + $0x38] sm:$0xf]
    %v1118 = vld [vmem:[%s1102 + $0x3c] sm:$0xf]
    %v1119 = vld [vmem:[%s5 + $0x3] sm:$0x1]
    %v1120 = vperm.slane %v1119, 0
    %v1137 = vunpack.c.l.b16 %v1103
    %v1138 = vunpack.c.l.b16 %v1104
    %v1139 = vunpack.c.l.b16 %v1105
    %v1140 = vunpack.c.l.b16 %v1106
    %v1141 = vunpack.c.l.b16 %v1107
    %v1142 = vunpack.c.l.b16 %v1108
    %v1143 = vunpack.c.l.b16 %v1109
    %v1144 = vunpack.c.l.b16 %v1110
    %v1145 = vunpack.c.l.b16 %v1111
    %v1146 = vunpack.c.l.b16 %v1112
    %v1147 = vunpack.c.l.b16 %v1113
    %v1148 = vunpack.c.l.b16 %v1114
    %v1149 = vunpack.c.l.b16 %v1115
    %v1150 = vunpack.c.l.b16 %v1116
    %v1151 = vunpack.c.l.b16 %v1117
    %v1152 = vunpack.c.l.b16 %v1118
    %v1153 = vpack.c.b16 %v1138, %v1137
    %v1154 = vpack.c.b16 %v1140, %v1139
    %v1155 = vpack.c.b16 %v1142, %v1141
    %v1156 = vpack.c.b16 %v1144, %v1143
    %v1157 = vpack.c.b16 %v1146, %v1145
    %v1158 = vpack.c.b16 %v1148, %v1147
    %v1159 = vpack.c.b16 %v1150, %v1149
    %v1160 = vpack.c.b16 %v1152, %v1151
    %1169 = vmatpush.bf16.msra.mxu0 %v1160
    %1170 = vmatpush.bf16.msra.mxu0 %v1159
    %1171 = vmatpush.bf16.msra.mxu0 %v1158
    %1172 = vmatpush.bf16.msra.mxu0 %v1157
    %1173 = vmatpush.bf16.msra.mxu0 %v1156
    %1174 = vmatpush.bf16.msra.mxu0 %v1155
    %1175 = vmatpush.bf16.msra.mxu0 %v1154
    %1176 = vmatpush.bf16.msra.mxu0 %v1153
    %1177 = vmatmul.bf16.gmra.mxu0 %v246
    %v1178 = vpop.f32.mrf.mxu0
    %v1179 = vadd.f32 %v1120, %v1178
    %v1180 = vpop.f32.mrf.mxu0
    %v1181 = vadd.f32 %v1120, %v1180
    %1182 = vdwg.mxu0
    %v1183 = vpack.c.bf16 %v1181, %v1179
    %1184 = vmatpush.bf16.xpose.msra.mxu0 0
    %1185 = vmatpush.bf16.xpose.msra.mxu0 0
    %1186 = vmatpush.bf16.xpose.msra.mxu0 0
    %1187 = vmatpush.bf16.xpose.msra.mxu0 0
    %1188 = vmatpush.bf16.xpose.msra.mxu0 0
    %1189 = vmatpush.bf16.xpose.msra.mxu0 0
    %1190 = vmatpush.bf16.xpose.msra.mxu0 0
    %1191 = vmatpush.bf16.xpose.msra.mxu0 %v1183
    %1192 = vmatmul.bf16.gmra.mxu0 %v208
    %v1193 = vpop.f32.mrf.mxu0
    %v1194 = vadd.f32 0.0, %v1193
    %v1195 = vpop.f32.mrf.mxu0
    %v1196 = vadd.f32 0.0, %v1195
    %1197 = vdwg.mxu0
    %v1198 = vsel %vm209, %v1194, -inf
    %1199 = vmax.xlane.f32.xlu0 %v1198
    %v1200 = vpop.xlane.xlu0 %1199
    %v1201 = vsel %vm209, %v1196, -inf
    %1202 = vmax.xlane.f32.xlu0 %v1201
    %v1203 = vpop.xlane.xlu0 %1202
    %v1204 = vsub.f32 %v1194, %v1200
    %v1205 = vsub.f32 %v1196, %v1203
    %v1206 = vmul.f32 %v1204, 1.442695
    %v1207 = vpow.pop %v1206
    %v1208 = vmul.f32 %v1205, 1.442695
    %v1209 = vpow.pop %v1208
    %v1210 = vsel %vm209, %v1207, 0.0
    %1211 = vadd.xlane.f32.xlu0 %v1210
    %v1212 = vpop.xlane.xlu0 %1211
    %v1213 = vsel %vm209, %v1209, 0.0
    %1214 = vadd.xlane.f32.xlu0 %v1213
    %v1215 = vpop.xlane.xlu0 %1214
    %v1216 = vrcp.pop %v1212
    %v1217 = vrcp.pop %v1215
    %v1218 = vmul.f32 %v1207, %v1216
    %v1219 = vmul.f32 %v1209, %v1217
    %v1220 = vmul.f32 %v1218, %v154
    %v1221 = vmul.f32 %v1219, %v155
    %v1222 = vsel %vm209, %v1220, 0.0
    %1223 = vadd.xlane.f32.xlu0 %v1222
    %v1224 = vpop.xlane.xlu0 %1223
    %v1225 = vsel %vm209, %v1221, 0.0
    %1226 = vadd.xlane.f32.xlu0 %v1225
    %v1227 = vpop.xlane.xlu0 %1226
    %v1228 = vadd.f32 %v1224, 1e-08
    %v1229 = vadd.f32 %v1227, 1e-08
    %v1230 = vrcp.pop %v1228
    %v1231 = vrcp.pop %v1229
    %v1232 = vmul.f32 %v1220, %v1230
    %v1233 = vmul.f32 %v1221, %v1231
    %v1234 = vpack.c.bf16 %v1233, %v1232
    %v1236 = vsel %vm209, %v1234, 0
    %1238 = vmatpush.bf16.msra.mxu0 0
    %1239 = vmatpush.bf16.msra.mxu0 0
    %1240 = vmatpush.bf16.msra.mxu0 0
    %1241 = vmatpush.bf16.msra.mxu0 0
    %1242 = vmatpush.bf16.msra.mxu0 0
    %1243 = vmatpush.bf16.msra.mxu0 0
    %1244 = vmatpush.bf16.msra.mxu0 0
    %1245 = vmatpush.bf16.msra.mxu0 %v246
    %1246 = vmatmul.bf16.gmra.mxu0 %v1236
    %v1247 = vpop.f32.mrf.mxu0
    %v1248 = vadd.f32 0.0, %v1247
    %v1249 = vpop.f32.mrf.mxu0
    %v1250 = vadd.f32 0.0, %v1249
    %1251 = vdwg.mxu0
    %v1252 = vpack.c.bf16 %v137, %v136
    %v1254 = vsel %vm209, %v1252, 0
    %1256 = vmatpush.bf16.msra.mxu0 0
    %1257 = vmatpush.bf16.msra.mxu0 0
    %1258 = vmatpush.bf16.msra.mxu0 0
    %1259 = vmatpush.bf16.msra.mxu0 0
    %1260 = vmatpush.bf16.msra.mxu0 0
    %1261 = vmatpush.bf16.msra.mxu0 0
    %1262 = vmatpush.bf16.msra.mxu0 0
    %1263 = vmatpush.bf16.msra.mxu0 %v208
    %1264 = vmatmul.bf16.gmra.mxu0 %v1254
    %v1265 = vpop.f32.mrf.mxu0
    %v1266 = vadd.f32 0.0, %v1265
    %v1267 = vpop.f32.mrf.mxu0
    %v1268 = vadd.f32 0.0, %v1267
    %1269 = vdwg.mxu0
    %s1270 = scalar_lea.vmem [#allocation7], 192
    %v1271 = vld [vmem:[%s1270] sm:$0xf]
    %v1272 = vld [vmem:[%s1270 + $0x4] sm:$0xf]
    %v1273 = vld [vmem:[%s1270 + $0x8] sm:$0xf]
    %v1274 = vld [vmem:[%s1270 + $0xc] sm:$0xf]
    %v1275 = vld [vmem:[%s1270 + $0x10] sm:$0xf]
    %v1276 = vld [vmem:[%s1270 + $0x14] sm:$0xf]
    %v1277 = vld [vmem:[%s1270 + $0x18] sm:$0xf]
    %v1278 = vld [vmem:[%s1270 + $0x1c] sm:$0xf]
    %v1279 = vld [vmem:[%s1270 + $0x20] sm:$0xf]
    %v1280 = vld [vmem:[%s1270 + $0x24] sm:$0xf]
    %v1281 = vld [vmem:[%s1270 + $0x28] sm:$0xf]
    %v1282 = vld [vmem:[%s1270 + $0x2c] sm:$0xf]
    %v1283 = vld [vmem:[%s1270 + $0x30] sm:$0xf]
    %v1284 = vld [vmem:[%s1270 + $0x34] sm:$0xf]
    %v1285 = vld [vmem:[%s1270 + $0x38] sm:$0xf]
    %v1286 = vld [vmem:[%s1270 + $0x3c] sm:$0xf]
    %v1287 = vld [vmem:[%s1270 + $0x40] sm:$0xf]
    %v1288 = vld [vmem:[%s1270 + $0x44] sm:$0xf]
    %v1289 = vld [vmem:[%s1270 + $0x48] sm:$0xf]
    %v1290 = vld [vmem:[%s1270 + $0x4c] sm:$0xf]
    %v1291 = vld [vmem:[%s1270 + $0x50] sm:$0xf]
    %v1292 = vld [vmem:[%s1270 + $0x54] sm:$0xf]
    %v1293 = vld [vmem:[%s1270 + $0x58] sm:$0xf]
    %v1294 = vld [vmem:[%s1270 + $0x5c] sm:$0xf]
    %v1295 = vld [vmem:[%s1270 + $0x60] sm:$0xf]
    %v1296 = vld [vmem:[%s1270 + $0x64] sm:$0xf]
    %v1297 = vld [vmem:[%s1270 + $0x68] sm:$0xf]
    %v1298 = vld [vmem:[%s1270 + $0x6c] sm:$0xf]
    %v1299 = vld [vmem:[%s1270 + $0x70] sm:$0xf]
    %v1300 = vld [vmem:[%s1270 + $0x74] sm:$0xf]
    %v1301 = vld [vmem:[%s1270 + $0x78] sm:$0xf]
    %v1302 = vld [vmem:[%s1270 + $0x7c] sm:$0xf]
    %v1303 = vld [vmem:[%s1270 + $0x80] sm:$0xf]
    %v1304 = vld [vmem:[%s1270 + $0x84] sm:$0xf]
    %v1305 = vld [vmem:[%s1270 + $0x88] sm:$0xf]
    %v1306 = vld [vmem:[%s1270 + $0x8c] sm:$0xf]
    %v1307 = vld [vmem:[%s1270 + $0x90] sm:$0xf]
    %v1308 = vld [vmem:[%s1270 + $0x94] sm:$0xf]
    %v1309 = vld [vmem:[%s1270 + $0x98] sm:$0xf]
    %v1310 = vld [vmem:[%s1270 + $0x9c] sm:$0xf]
    %v1311 = vld [vmem:[%s1270 + $0xa0] sm:$0xf]
    %v1312 = vld [vmem:[%s1270 + $0xa4] sm:$0xf]
    %v1313 = vld [vmem:[%s1270 + $0xa8] sm:$0xf]
    %v1314 = vld [vmem:[%s1270 + $0xac] sm:$0xf]
    %v1315 = vld [vmem:[%s1270 + $0xb0] sm:$0xf]
    %v1316 = vld [vmem:[%s1270 + $0xb4] sm:$0xf]
    %v1317 = vld [vmem:[%s1270 + $0xb8] sm:$0xf]
    %v1318 = vld [vmem:[%s1270 + $0xbc] sm:$0xf]
    %v1319 = vpack.c.bf16 %v1100, %v1098
    %v1320 = vpack.c.bf16 %v1250, %v1248
    %v1321 = vld [vmem:[%s5 + $0x7] sm:$0x1]
    %v1322 = vperm.slane %v1321, 0
    %v1371 = vunpack.c.l.b16 %v1271
    %v1372 = vunpack.c.l.b16 %v1272
    %v1373 = vunpack.c.l.b16 %v1273
    %v1374 = vunpack.c.l.b16 %v1274
    %v1375 = vunpack.c.l.b16 %v1275
    %v1376 = vunpack.c.l.b16 %v1276
    %v1377 = vunpack.c.l.b16 %v1277
    %v1378 = vunpack.c.l.b16 %v1278
    %v1379 = vunpack.c.l.b16 %v1279
    %v1380 = vunpack.c.l.b16 %v1280
    %v1381 = vunpack.c.l.b16 %v1281
    %v1382 = vunpack.c.l.b16 %v1282
    %v1383 = vunpack.c.l.b16 %v1283
    %v1384 = vunpack.c.l.b16 %v1284
    %v1385 = vunpack.c.l.b16 %v1285
    %v1386 = vunpack.c.l.b16 %v1286
    %v1387 = vunpack.c.l.b16 %v1287
    %v1388 = vunpack.c.l.b16 %v1288
    %v1389 = vunpack.c.l.b16 %v1289
    %v1390 = vunpack.c.l.b16 %v1290
    %v1391 = vunpack.c.l.b16 %v1291
    %v1392 = vunpack.c.l.b16 %v1292
    %v1393 = vunpack.c.l.b16 %v1293
    %v1394 = vunpack.c.l.b16 %v1294
    %v1395 = vunpack.c.l.b16 %v1295
    %v1396 = vunpack.c.l.b16 %v1296
    %v1397 = vunpack.c.l.b16 %v1297
    %v1398 = vunpack.c.l.b16 %v1298
    %v1399 = vunpack.c.l.b16 %v1299
    %v1400 = vunpack.c.l.b16 %v1300
    %v1401 = vunpack.c.l.b16 %v1301
    %v1402 = vunpack.c.l.b16 %v1302
    %v1403 = vunpack.c.l.b16 %v1303
    %v1404 = vunpack.c.l.b16 %v1304
    %v1405 = vunpack.c.l.b16 %v1305
    %v1406 = vunpack.c.l.b16 %v1306
    %v1407 = vunpack.c.l.b16 %v1307
    %v1408 = vunpack.c.l.b16 %v1308
    %v1409 = vunpack.c.l.b16 %v1309
    %v1410 = vunpack.c.l.b16 %v1310
    %v1411 = vunpack.c.l.b16 %v1311
    %v1412 = vunpack.c.l.b16 %v1312
    %v1413 = vunpack.c.l.b16 %v1313
    %v1414 = vunpack.c.l.b16 %v1314
    %v1415 = vunpack.c.l.b16 %v1315
    %v1416 = vunpack.c.l.b16 %v1316
    %v1417 = vunpack.c.l.b16 %v1317
    %v1418 = vunpack.c.l.b16 %v1318
    %v1419 = vpack.c.b16 %v1372, %v1371
    %v1420 = vpack.c.b16 %v1374, %v1373
    %v1421 = vpack.c.b16 %v1376, %v1375
    %v1422 = vpack.c.b16 %v1378, %v1377
    %v1423 = vpack.c.b16 %v1380, %v1379
    %v1424 = vpack.c.b16 %v1382, %v1381
    %v1425 = vpack.c.b16 %v1384, %v1383
    %v1426 = vpack.c.b16 %v1386, %v1385
    %v1427 = vpack.c.b16 %v1388, %v1387
    %v1428 = vpack.c.b16 %v1390, %v1389
    %v1429 = vpack.c.b16 %v1392, %v1391
    %v1430 = vpack.c.b16 %v1394, %v1393
    %v1431 = vpack.c.b16 %v1396, %v1395
    %v1432 = vpack.c.b16 %v1398, %v1397
    %v1433 = vpack.c.b16 %v1400, %v1399
    %v1434 = vpack.c.b16 %v1402, %v1401
    %v1435 = vpack.c.b16 %v1404, %v1403
    %v1436 = vpack.c.b16 %v1406, %v1405
    %v1437 = vpack.c.b16 %v1408, %v1407
    %v1438 = vpack.c.b16 %v1410, %v1409
    %v1439 = vpack.c.b16 %v1412, %v1411
    %v1440 = vpack.c.b16 %v1414, %v1413
    %v1441 = vpack.c.b16 %v1416, %v1415
    %v1442 = vpack.c.b16 %v1418, %v1417
    %1467 = vmatpush.bf16.msra.mxu0 %v1426
    %1468 = vmatpush.bf16.msra.mxu0 %v1425
    %1469 = vmatpush.bf16.msra.mxu0 %v1424
    %1470 = vmatpush.bf16.msra.mxu0 %v1423
    %1471 = vmatpush.bf16.msra.mxu0 %v1422
    %1472 = vmatpush.bf16.msra.mxu0 %v1421
    %1473 = vmatpush.bf16.msra.mxu0 %v1420
    %1474 = vmatpush.bf16.msra.mxu0 %v1419
    %1475 = vmatmul.bf16.gmra.mxu0 %v208
    %v1476 = vpop.f32.mrf.mxu0
    %v1477 = vadd.f32 %v1322, %v1476
    %v1478 = vpop.f32.mrf.mxu0
    %v1479 = vadd.f32 %v1322, %v1478
    %1480 = vdwg.mxu0
    %1481 = vmatpush.bf16.msra.mxu0 %v1434
    %1482 = vmatpush.bf16.msra.mxu0 %v1433
    %1483 = vmatpush.bf16.msra.mxu0 %v1432
    %1484 = vmatpush.bf16.msra.mxu0 %v1431
    %1485 = vmatpush.bf16.msra.mxu0 %v1430
    %1486 = vmatpush.bf16.msra.mxu0 %v1429
    %1487 = vmatpush.bf16.msra.mxu0 %v1428
    %1488 = vmatpush.bf16.msra.mxu0 %v1427
    %1489 = vmatmul.bf16.gmra.mxu0 %v1319
    %v1490 = vpop.f32.mrf.mxu0
    %v1491 = vadd.f32 %v1477, %v1490
    %v1492 = vpop.f32.mrf.mxu0
    %v1493 = vadd.f32 %v1479, %v1492
    %1494 = vdwg.mxu0
    %1495 = vmatpush.bf16.msra.mxu0 %v1442
    %1496 = vmatpush.bf16.msra.mxu0 %v1441
    %1497 = vmatpush.bf16.msra.mxu0 %v1440
    %1498 = vmatpush.bf16.msra.mxu0 %v1439
    %1499 = vmatpush.bf16.msra.mxu0 %v1438
    %1500 = vmatpush.bf16.msra.mxu0 %v1437
    %1501 = vmatpush.bf16.msra.mxu0 %v1436
    %1502 = vmatpush.bf16.msra.mxu0 %v1435
    %1503 = vmatmul.bf16.gmra.mxu0 %v1320
    %v1504 = vpop.f32.mrf.mxu0
    %v1505 = vadd.f32 %v1491, %v1504
    %v1506 = vpop.f32.mrf.mxu0
    %v1507 = vadd.f32 %v1493, %v1506
    %1508 = vdwg.mxu0
    %s1509 = scalar_lea.vmem [#allocation10], 256
    %v1510 = vld [vmem:[%s1509] sm:$0xff]
    %v1511 = vld [vmem:[%s1509 + $0x8] sm:$0xff]
    %v1512 = vld [vmem:[%s1509 + $0x10] sm:$0xff]
    %v1513 = vld [vmem:[%s1509 + $0x18] sm:$0xff]
    %v1514 = vld [vmem:[%s1509 + $0x20] sm:$0xff]
    %v1515 = vld [vmem:[%s1509 + $0x28] sm:$0xff]
    %v1516 = vld [vmem:[%s1509 + $0x30] sm:$0xff]
    %v1517 = vld [vmem:[%s1509 + $0x38] sm:$0xff]
    %v1518 = vld [vmem:[%s1509 + $0x40] sm:$0xff]
    %v1519 = vld [vmem:[%s1509 + $0x48] sm:$0xff]
    %v1520 = vld [vmem:[%s1509 + $0x50] sm:$0xff]
    %v1521 = vld [vmem:[%s1509 + $0x58] sm:$0xff]
    %v1522 = vld [vmem:[%s1509 + $0x60] sm:$0xff]
    %v1523 = vld [vmem:[%s1509 + $0x68] sm:$0xff]
    %v1524 = vld [vmem:[%s1509 + $0x70] sm:$0xff]
    %v1525 = vld [vmem:[%s1509 + $0x78] sm:$0xff]
    %v1526 = vld [vmem:[%s1509 + $0x80] sm:$0xff]
    %v1527 = vld [vmem:[%s1509 + $0x88] sm:$0xff]
    %v1528 = vld [vmem:[%s1509 + $0x90] sm:$0xff]
    %v1529 = vld [vmem:[%s1509 + $0x98] sm:$0xff]
    %v1530 = vld [vmem:[%s1509 + $0xa0] sm:$0xff]
    %v1531 = vld [vmem:[%s1509 + $0xa8] sm:$0xff]
    %v1532 = vld [vmem:[%s1509 + $0xb0] sm:$0xff]
    %v1533 = vld [vmem:[%s1509 + $0xb8] sm:$0xff]
    %v1534 = vld [vmem:[%s1509 + $0xc0] sm:$0xff]
    %v1535 = vld [vmem:[%s1509 + $0xc8] sm:$0xff]
    %v1536 = vld [vmem:[%s1509 + $0xd0] sm:$0xff]
    %v1537 = vld [vmem:[%s1509 + $0xd8] sm:$0xff]
    %v1538 = vld [vmem:[%s1509 + $0xe0] sm:$0xff]
    %v1539 = vld [vmem:[%s1509 + $0xe8] sm:$0xff]
    %v1540 = vld [vmem:[%s1509 + $0xf0] sm:$0xff]
    %v1541 = vld [vmem:[%s1509 + $0xf8] sm:$0xff]
    %s1542 = scalar_lea.vmem %s9, 1
    %v1543 = vld [vmem:[%s1542] ss:$4 sm:$0x3]
    %v1545 = vperm.slane %v1543, 0
    %v1546 = vperm.slane %v1543, 1
    %v1581 = vunpack.c.l.b16 %v1510
    %v1582 = vunpack.c.h.b16 %v1510
    %v1583 = vunpack.c.l.b16 %v1511
    %v1584 = vunpack.c.h.b16 %v1511
    %v1585 = vunpack.c.l.b16 %v1512
    %v1586 = vunpack.c.h.b16 %v1512
    %v1587 = vunpack.c.l.b16 %v1513
    %v1588 = vunpack.c.h.b16 %v1513
    %v1589 = vunpack.c.l.b16 %v1514
    %v1590 = vunpack.c.h.b16 %v1514
    %v1591 = vunpack.c.l.b16 %v1515
    %v1592 = vunpack.c.h.b16 %v1515
    %v1593 = vunpack.c.l.b16 %v1516
    %v1594 = vunpack.c.h.b16 %v1516
    %v1595 = vunpack.c.l.b16 %v1517
    %v1596 = vunpack.c.h.b16 %v1517
    %v1597 = vunpack.c.l.b16 %v1518
    %v1598 = vunpack.c.h.b16 %v1518
    %v1599 = vunpack.c.l.b16 %v1519
    %v1600 = vunpack.c.h.b16 %v1519
    %v1601 = vunpack.c.l.b16 %v1520
    %v1602 = vunpack.c.h.b16 %v1520
    %v1603 = vunpack.c.l.b16 %v1521
    %v1604 = vunpack.c.h.b16 %v1521
    %v1605 = vunpack.c.l.b16 %v1522
    %v1606 = vunpack.c.h.b16 %v1522
    %v1607 = vunpack.c.l.b16 %v1523
    %v1608 = vunpack.c.h.b16 %v1523
    %v1609 = vunpack.c.l.b16 %v1524
    %v1610 = vunpack.c.h.b16 %v1524
    %v1611 = vunpack.c.l.b16 %v1525
    %v1612 = vunpack.c.h.b16 %v1525
    %v1613 = vunpack.c.l.b16 %v1526
    %v1614 = vunpack.c.h.b16 %v1526
    %v1615 = vunpack.c.l.b16 %v1527
    %v1616 = vunpack.c.h.b16 %v1527
    %v1617 = vunpack.c.l.b16 %v1528
    %v1618 = vunpack.c.h.b16 %v1528
    %v1619 = vunpack.c.l.b16 %v1529
    %v1620 = vunpack.c.h.b16 %v1529
    %v1621 = vunpack.c.l.b16 %v1530
    %v1622 = vunpack.c.h.b16 %v1530
    %v1623 = vunpack.c.l.b16 %v1531
    %v1624 = vunpack.c.h.b16 %v1531
    %v1625 = vunpack.c.l.b16 %v1532
    %v1626 = vunpack.c.h.b16 %v1532
    %v1627 = vunpack.c.l.b16 %v1533
    %v1628 = vunpack.c.h.b16 %v1533
    %v1629 = vunpack.c.l.b16 %v1534
    %v1630 = vunpack.c.h.b16 %v1534
    %v1631 = vunpack.c.l.b16 %v1535
    %v1632 = vunpack.c.h.b16 %v1535
    %v1633 = vunpack.c.l.b16 %v1536
    %v1634 = vunpack.c.h.b16 %v1536
    %v1635 = vunpack.c.l.b16 %v1537
    %v1636 = vunpack.c.h.b16 %v1537
    %v1637 = vunpack.c.l.b16 %v1538
    %v1638 = vunpack.c.h.b16 %v1538
    %v1639 = vunpack.c.l.b16 %v1539
    %v1640 = vunpack.c.h.b16 %v1539
    %v1641 = vunpack.c.l.b16 %v1540
    %v1642 = vunpack.c.h.b16 %v1540
    %v1643 = vunpack.c.l.b16 %v1541
    %v1644 = vunpack.c.h.b16 %v1541
    %v1645 = vpack.c.b16 %v1583, %v1581
    %v1646 = vpack.c.b16 %v1584, %v1582
    %v1647 = vpack.c.b16 %v1587, %v1585
    %v1648 = vpack.c.b16 %v1588, %v1586
    %v1649 = vpack.c.b16 %v1591, %v1589
    %v1650 = vpack.c.b16 %v1592, %v1590
    %v1651 = vpack.c.b16 %v1595, %v1593
    %v1652 = vpack.c.b16 %v1596, %v1594
    %v1653 = vpack.c.b16 %v1599, %v1597
    %v1654 = vpack.c.b16 %v1600, %v1598
    %v1655 = vpack.c.b16 %v1603, %v1601
    %v1656 = vpack.c.b16 %v1604, %v1602
    %v1657 = vpack.c.b16 %v1607, %v1605
    %v1658 = vpack.c.b16 %v1608, %v1606
    %v1659 = vpack.c.b16 %v1611, %v1609
    %v1660 = vpack.c.b16 %v1612, %v1610
    %v1661 = vpack.c.b16 %v1615, %v1613
    %v1662 = vpack.c.b16 %v1616, %v1614
    %v1663 = vpack.c.b16 %v1619, %v1617
    %v1664 = vpack.c.b16 %v1620, %v1618
    %v1665 = vpack.c.b16 %v1623, %v1621
    %v1666 = vpack.c.b16 %v1624, %v1622
    %v1667 = vpack.c.b16 %v1627, %v1625
    %v1668 = vpack.c.b16 %v1628, %v1626
    %v1669 = vpack.c.b16 %v1631, %v1629
    %v1670 = vpack.c.b16 %v1632, %v1630
    %v1671 = vpack.c.b16 %v1635, %v1633
    %v1672 = vpack.c.b16 %v1636, %v1634
    %v1673 = vpack.c.b16 %v1639, %v1637
    %v1674 = vpack.c.b16 %v1640, %v1638
    %v1675 = vpack.c.b16 %v1643, %v1641
    %v1676 = vpack.c.b16 %v1644, %v1642
    %1709 = vmatpush.bf16.msra.mxu0 %v1659
    %1710 = vmatpush.bf16.msra.mxu0 %v1657
    %1711 = vmatpush.bf16.msra.mxu0 %v1655
    %1712 = vmatpush.bf16.msra.mxu0 %v1653
    %1713 = vmatpush.bf16.msra.mxu0 %v1651
    %1714 = vmatpush.bf16.msra.mxu0 %v1649
    %1715 = vmatpush.bf16.msra.mxu0 %v1647
    %1716 = vmatpush.bf16.msra.mxu0 %v1645
    %1717 = vmatmul.bf16.gmra.mxu0 %v1319
    %v1718 = vpop.f32.mrf.mxu0
    %v1719 = vadd.f32 %v1545, %v1718
    %v1720 = vpop.f32.mrf.mxu0
    %v1721 = vadd.f32 %v1545, %v1720
    %1722 = vdwg.mxu0
    %1723 = vmatpush.bf16.msra.mxu0 %v1675
    %1724 = vmatpush.bf16.msra.mxu0 %v1673
    %1725 = vmatpush.bf16.msra.mxu0 %v1671
    %1726 = vmatpush.bf16.msra.mxu0 %v1669
    %1727 = vmatpush.bf16.msra.mxu0 %v1667
    %1728 = vmatpush.bf16.msra.mxu0 %v1665
    %1729 = vmatpush.bf16.msra.mxu0 %v1663
    %1730 = vmatpush.bf16.msra.mxu0 %v1661
    %1731 = vmatmul.bf16.gmra.mxu0 %v1320
    %v1732 = vpop.f32.mrf.mxu0
    %v1733 = vadd.f32 %v1719, %v1732
    %v1734 = vpop.f32.mrf.mxu0
    %v1735 = vadd.f32 %v1721, %v1734
    %1736 = vdwg.mxu0
    %1737 = vmatpush.bf16.msra.mxu0 %v1660
    %1738 = vmatpush.bf16.msra.mxu0 %v1658
    %1739 = vmatpush.bf16.msra.mxu0 %v1656
    %1740 = vmatpush.bf16.msra.mxu0 %v1654
    %1741 = vmatpush.bf16.msra.mxu0 %v1652
    %1742 = vmatpush.bf16.msra.mxu0 %v1650
    %1743 = vmatpush.bf16.msra.mxu0 %v1648
    %1744 = vmatpush.bf16.msra.mxu0 %v1646
    %1745 = vmatmul.bf16.gmra.mxu0 %v1319
    %v1746 = vpop.f32.mrf.mxu0
    %v1747 = vadd.f32 %v1546, %v1746
    %v1748 = vpop.f32.mrf.mxu0
    %v1749 = vadd.f32 %v1546, %v1748
    %1750 = vdwg.mxu0
    %1751 = vmatpush.bf16.msra.mxu0 %v1676
    %1752 = vmatpush.bf16.msra.mxu0 %v1674
    %1753 = vmatpush.bf16.msra.mxu0 %v1672
    %1754 = vmatpush.bf16.msra.mxu0 %v1670
    %1755 = vmatpush.bf16.msra.mxu0 %v1668
    %1756 = vmatpush.bf16.msra.mxu0 %v1666
    %1757 = vmatpush.bf16.msra.mxu0 %v1664
    %1758 = vmatpush.bf16.msra.mxu0 %v1662
    %1759 = vmatmul.bf16.gmra.mxu0 %v1320
    %v1760 = vpop.f32.mrf.mxu0
    %v1761 = vadd.f32 %v1747, %v1760
    %v1762 = vpop.f32.mrf.mxu0
    %v1763 = vadd.f32 %v1749, %v1762
    %1764 = vdwg.mxu0
    %v1765 = vadd.f32 %v1505, %v1733
    %v1766 = vadd.f32 %v1507, %v1735
    %v1767 = vtanh.pop %v1765
    %v1768 = vtanh.pop %v1766
    %v1769 = vadd.f32 %v1505, %v1761
    %v1770 = vadd.f32 %v1507, %v1763
    %v1771 = vtanh.pop %v1769
    %v1772 = vtanh.pop %v1770
    %v1773 = vmul.f32 %v1767, %v1098
    %v1774 = vmul.f32 %v1768, %v1100
    %v1775 = vadd.f32 %v184, %v1773
    %v1776 = vadd.f32 %v185, %v1774
    %v1777 = vmul.f32 %v1771, %v1248
    %v1778 = vmul.f32 %v1772, %v1250
    %v1779 = vadd.f32 %v1775, %v1777
    %v1780 = vadd.f32 %v1776, %v1778
    %v1781 = vadd.f32 %v1779, %v1266
    %v1782 = vadd.f32 %v1780, %v1268
    %s1783 = scalar_lea.vmem [#allocation6], 320
    %v1784 = vld [vmem:[%s1783] sm:$0xf]
    %v1785 = vld [vmem:[%s1783 + $0x4] sm:$0xf]
    %v1786 = vld [vmem:[%s1783 + $0x8] sm:$0xf]
    %v1787 = vld [vmem:[%s1783 + $0xc] sm:$0xf]
    %v1788 = vld [vmem:[%s1783 + $0x10] sm:$0xf]
    %v1789 = vld [vmem:[%s1783 + $0x14] sm:$0xf]
    %v1790 = vld [vmem:[%s1783 + $0x18] sm:$0xf]
    %v1791 = vld [vmem:[%s1783 + $0x1c] sm:$0xf]
    %v1792 = vld [vmem:[%s1783 + $0x20] sm:$0xf]
    %v1793 = vld [vmem:[%s1783 + $0x24] sm:$0xf]
    %v1794 = vld [vmem:[%s1783 + $0x28] sm:$0xf]
    %v1795 = vld [vmem:[%s1783 + $0x2c] sm:$0xf]
    %v1796 = vld [vmem:[%s1783 + $0x30] sm:$0xf]
    %v1797 = vld [vmem:[%s1783 + $0x34] sm:$0xf]
    %v1798 = vld [vmem:[%s1783 + $0x38] sm:$0xf]
    %v1799 = vld [vmem:[%s1783 + $0x3c] sm:$0xf]
    %v1800 = vld [vmem:[%s5 + $0x5] sm:$0x1]
    %v1801 = vperm.slane %v1800, 0
    %v1818 = vunpack.c.l.b16 %v1784
    %v1819 = vunpack.c.l.b16 %v1785
    %v1820 = vunpack.c.l.b16 %v1786
    %v1821 = vunpack.c.l.b16 %v1787
    %v1822 = vunpack.c.l.b16 %v1788
    %v1823 = vunpack.c.l.b16 %v1789
    %v1824 = vunpack.c.l.b16 %v1790
    %v1825 = vunpack.c.l.b16 %v1791
    %v1826 = vunpack.c.l.b16 %v1792
    %v1827 = vunpack.c.l.b16 %v1793
    %v1828 = vunpack.c.l.b16 %v1794
    %v1829 = vunpack.c.l.b16 %v1795
    %v1830 = vunpack.c.l.b16 %v1796
    %v1831 = vunpack.c.l.b16 %v1797
    %v1832 = vunpack.c.l.b16 %v1798
    %v1833 = vunpack.c.l.b16 %v1799
    %v1834 = vpack.c.b16 %v1819, %v1818
    %v1835 = vpack.c.b16 %v1821, %v1820
    %v1836 = vpack.c.b16 %v1823, %v1822
    %v1837 = vpack.c.b16 %v1825, %v1824
    %v1838 = vpack.c.b16 %v1827, %v1826
    %v1839 = vpack.c.b16 %v1829, %v1828
    %v1840 = vpack.c.b16 %v1831, %v1830
    %v1841 = vpack.c.b16 %v1833, %v1832
    %1850 = vmatpush.bf16.msra.mxu0 %v1841
    %1851 = vmatpush.bf16.msra.mxu0 %v1840
    %1852 = vmatpush.bf16.msra.mxu0 %v1839
    %1853 = vmatpush.bf16.msra.mxu0 %v1838
    %1854 = vmatpush.bf16.msra.mxu0 %v1837
    %1855 = vmatpush.bf16.msra.mxu0 %v1836
    %1856 = vmatpush.bf16.msra.mxu0 %v1835
    %1857 = vmatpush.bf16.msra.mxu0 %v1834
    %1858 = vmatmul.bf16.gmra.mxu0 %v208
    %v1859 = vpop.f32.mrf.mxu0
    %v1860 = vadd.f32 %v1801, %v1859
    %v1861 = vpop.f32.mrf.mxu0
    %v1862 = vadd.f32 %v1801, %v1861
    %1863 = vdwg.mxu0
    %v1864 = vpack.c.bf16 %v1862, %v1860
    %1865 = vmatpush.bf16.xpose.msra.mxu0 0
    %1866 = vmatpush.bf16.xpose.msra.mxu0 0
    %1867 = vmatpush.bf16.xpose.msra.mxu0 0
    %1868 = vmatpush.bf16.xpose.msra.mxu0 0
    %1869 = vmatpush.bf16.xpose.msra.mxu0 0
    %1870 = vmatpush.bf16.xpose.msra.mxu0 0
    %1871 = vmatpush.bf16.xpose.msra.mxu0 0
    %1872 = vmatpush.bf16.xpose.msra.mxu0 %v1864
    %1873 = vmatmul.bf16.gmra.mxu0 %v246
    %v1874 = vpop.f32.mrf.mxu0
    %v1875 = vadd.f32 0.0, %v1874
    %v1876 = vpop.f32.mrf.mxu0
    %v1877 = vadd.f32 0.0, %v1876
    %1878 = vdwg.mxu0
    %v1879 = vsel %vm209, %v1875, -inf
    %1880 = vmax.xlane.f32.xlu0 %v1879
    %v1881 = vpop.xlane.xlu0 %1880
    %v1882 = vsel %vm209, %v1877, -inf
    %1883 = vmax.xlane.f32.xlu0 %v1882
    %v1884 = vpop.xlane.xlu0 %1883
    %v1885 = vsub.f32 %v1875, %v1881
    %v1886 = vsub.f32 %v1877, %v1884
    %v1887 = vmul.f32 %v1885, 1.442695
    %v1888 = vpow.pop %v1887
    %v1889 = vmul.f32 %v1886, 1.442695
    %v1890 = vpow.pop %v1889
    %v1891 = vsel %vm209, %v1888, 0.0
    %1892 = vadd.xlane.f32.xlu0 %v1891
    %v1893 = vpop.xlane.xlu0 %1892
    %v1894 = vsel %vm209, %v1890, 0.0
    %1895 = vadd.xlane.f32.xlu0 %v1894
    %v1896 = vpop.xlane.xlu0 %1895
    %v1897 = vrcp.pop %v1893
    %v1898 = vrcp.pop %v1896
    %v1899 = vmul.f32 %v1888, %v1897
    %v1900 = vmul.f32 %v1890, %v1898
    %v1901 = vmul.f32 %v1899, %v158
    %v1902 = vmul.f32 %v1900, %v159
    %v1903 = vsel %vm209, %v1901, 0.0
    %1904 = vadd.xlane.f32.xlu0 %v1903
    %v1905 = vpop.xlane.xlu0 %1904
    %v1906 = vsel %vm209, %v1902, 0.0
    %1907 = vadd.xlane.f32.xlu0 %v1906
    %v1908 = vpop.xlane.xlu0 %1907
    %v1909 = vadd.f32 %v1905, 1e-08
    %v1910 = vadd.f32 %v1908, 1e-08
    %v1911 = vrcp.pop %v1909
    %v1912 = vrcp.pop %v1910
    %v1913 = vmul.f32 %v1901, %v1911
    %v1914 = vmul.f32 %v1902, %v1912
    %v1915 = vpack.c.bf16 %v1914, %v1913
    %v1917 = vsel %vm209, %v1915, 0
    %1919 = vmatpush.bf16.msra.mxu0 0
    %1920 = vmatpush.bf16.msra.mxu0 0
    %1921 = vmatpush.bf16.msra.mxu0 0
    %1922 = vmatpush.bf16.msra.mxu0 0
    %1923 = vmatpush.bf16.msra.mxu0 0
    %1924 = vmatpush.bf16.msra.mxu0 0
    %1925 = vmatpush.bf16.msra.mxu0 0
    %1926 = vmatpush.bf16.msra.mxu0 %v208
    %1927 = vmatmul.bf16.gmra.mxu0 %v1917
    %v1928 = vpop.f32.mrf.mxu0
    %v1929 = vadd.f32 0.0, %v1928
    %v1930 = vpop.f32.mrf.mxu0
    %v1931 = vadd.f32 0.0, %v1930
    %1932 = vdwg.mxu0
    %s1933 = scalar_lea.vmem [#allocation6], 256
    %v1934 = vld [vmem:[%s1933] sm:$0xf]
    %v1935 = vld [vmem:[%s1933 + $0x4] sm:$0xf]
    %v1936 = vld [vmem:[%s1933 + $0x8] sm:$0xf]
    %v1937 = vld [vmem:[%s1933 + $0xc] sm:$0xf]
    %v1938 = vld [vmem:[%s1933 + $0x10] sm:$0xf]
    %v1939 = vld [vmem:[%s1933 + $0x14] sm:$0xf]
    %v1940 = vld [vmem:[%s1933 + $0x18] sm:$0xf]
    %v1941 = vld [vmem:[%s1933 + $0x1c] sm:$0xf]
    %v1942 = vld [vmem:[%s1933 + $0x20] sm:$0xf]
    %v1943 = vld [vmem:[%s1933 + $0x24] sm:$0xf]
    %v1944 = vld [vmem:[%s1933 + $0x28] sm:$0xf]
    %v1945 = vld [vmem:[%s1933 + $0x2c] sm:$0xf]
    %v1946 = vld [vmem:[%s1933 + $0x30] sm:$0xf]
    %v1947 = vld [vmem:[%s1933 + $0x34] sm:$0xf]
    %v1948 = vld [vmem:[%s1933 + $0x38] sm:$0xf]
    %v1949 = vld [vmem:[%s1933 + $0x3c] sm:$0xf]
    %v1950 = vld [vmem:[%s5 + $0x4] sm:$0x1]
    %v1951 = vperm.slane %v1950, 0
    %v1968 = vunpack.c.l.b16 %v1934
    %v1969 = vunpack.c.l.b16 %v1935
    %v1970 = vunpack.c.l.b16 %v1936
    %v1971 = vunpack.c.l.b16 %v1937
    %v1972 = vunpack.c.l.b16 %v1938
    %v1973 = vunpack.c.l.b16 %v1939
    %v1974 = vunpack.c.l.b16 %v1940
    %v1975 = vunpack.c.l.b16 %v1941
    %v1976 = vunpack.c.l.b16 %v1942
    %v1977 = vunpack.c.l.b16 %v1943
    %v1978 = vunpack.c.l.b16 %v1944
    %v1979 = vunpack.c.l.b16 %v1945
    %v1980 = vunpack.c.l.b16 %v1946
    %v1981 = vunpack.c.l.b16 %v1947
    %v1982 = vunpack.c.l.b16 %v1948
    %v1983 = vunpack.c.l.b16 %v1949
    %v1984 = vpack.c.b16 %v1969, %v1968
    %v1985 = vpack.c.b16 %v1971, %v1970
    %v1986 = vpack.c.b16 %v1973, %v1972
    %v1987 = vpack.c.b16 %v1975, %v1974
    %v1988 = vpack.c.b16 %v1977, %v1976
    %v1989 = vpack.c.b16 %v1979, %v1978
    %v1990 = vpack.c.b16 %v1981, %v1980
    %v1991 = vpack.c.b16 %v1983, %v1982
    %2000 = vmatpush.bf16.msra.mxu0 %v1991
    %2001 = vmatpush.bf16.msra.mxu0 %v1990
    %2002 = vmatpush.bf16.msra.mxu0 %v1989
    %2003 = vmatpush.bf16.msra.mxu0 %v1988
    %2004 = vmatpush.bf16.msra.mxu0 %v1987
    %2005 = vmatpush.bf16.msra.mxu0 %v1986
    %2006 = vmatpush.bf16.msra.mxu0 %v1985
    %2007 = vmatpush.bf16.msra.mxu0 %v1984
    %2008 = vmatmul.bf16.gmra.mxu0 %v283
    %v2009 = vpop.f32.mrf.mxu0
    %v2010 = vadd.f32 %v1951, %v2009
    %v2011 = vpop.f32.mrf.mxu0
    %v2012 = vadd.f32 %v1951, %v2011
    %2013 = vmatmul.bf16.gmra.mxu0 %v284
    %v2014 = vpop.f32.mrf.mxu0
    %v2015 = vadd.f32 %v1951, %v2014
    %v2016 = vpop.f32.mrf.mxu0
    %v2017 = vadd.f32 %v1951, %v2016
    %2018 = vmatmul.bf16.gmra.mxu0 %v285
    %v2019 = vpop.f32.mrf.mxu0
    %v2020 = vadd.f32 %v1951, %v2019
    %v2021 = vpop.f32.mrf.mxu0
    %v2022 = vadd.f32 %v1951, %v2021
    %2023 = vdwg.mxu0
    %v2024 = vpack.c.bf16 %v2012, %v2010
    %v2025 = vpack.c.bf16 %v2017, %v2015
    %v2026 = vpack.c.bf16 %v2022, %v2020
    %2027 = vmatpush.bf16.xpose.msra.mxu0 0
    %2028 = vmatpush.bf16.xpose.msra.mxu0 0
    %2029 = vmatpush.bf16.xpose.msra.mxu0 0
    %2030 = vmatpush.bf16.xpose.msra.mxu0 0
    %2031 = vmatpush.bf16.xpose.msra.mxu0 0
    %2032 = vmatpush.bf16.xpose.msra.mxu0 %v2026
    %2033 = vmatpush.bf16.xpose.msra.mxu0 %v2025
    %2034 = vmatpush.bf16.xpose.msra.mxu0 %v2024
    %2035 = vmatmul.bf16.gmra.mxu0 %v246
    %v2036 = vpop.f32.mrf.mxu0
    %v2037 = vadd.f32 0.0, %v2036
    %v2038 = vpop.f32.mrf.mxu0
    %v2039 = vadd.f32 0.0, %v2038
    %2040 = vdwg.mxu0
    %v2041 = vsel %vm286, %v2037, -inf
    %2042 = vmax.xlane.f32.xlu0 %v2041
    %v2043 = vpop.xlane.xlu0 %2042
    %v2044 = vsel %vm286, %v2039, -inf
    %2045 = vmax.xlane.f32.xlu0 %v2044
    %v2046 = vpop.xlane.xlu0 %2045
    %v2047 = vsub.f32 %v2037, %v2043
    %v2048 = vsub.f32 %v2039, %v2046
    %v2049 = vmul.f32 %v2047, 1.442695
    %v2050 = vpow.pop %v2049
    %v2051 = vmul.f32 %v2048, 1.442695
    %v2052 = vpow.pop %v2051
    %v2053 = vsel %vm286, %v2050, 0.0
    %2054 = vadd.xlane.f32.xlu0 %v2053
    %v2055 = vpop.xlane.xlu0 %2054
    %v2056 = vsel %vm286, %v2052, 0.0
    %2057 = vadd.xlane.f32.xlu0 %v2056
    %v2058 = vpop.xlane.xlu0 %2057
    %v2059 = vrcp.pop %v2055
    %v2060 = vrcp.pop %v2058
    %v2061 = vmul.f32 %v2050, %v2059
    %v2062 = vmul.f32 %v2052, %v2060
    %v2063 = vmul.f32 %v2061, %v156
    %v2064 = vmul.f32 %v2062, %v157
    %v2065 = vsel %vm286, %v2063, 0.0
    %2066 = vadd.xlane.f32.xlu0 %v2065
    %v2067 = vpop.xlane.xlu0 %2066
    %v2068 = vsel %vm286, %v2064, 0.0
    %2069 = vadd.xlane.f32.xlu0 %v2068
    %v2070 = vpop.xlane.xlu0 %2069
    %v2071 = vadd.f32 %v2067, 1e-08
    %v2072 = vadd.f32 %v2070, 1e-08
    %v2073 = vrcp.pop %v2071
    %v2074 = vrcp.pop %v2072
    %v2075 = vmul.f32 %v2063, %v2073
    %v2076 = vmul.f32 %v2064, %v2074
    %v2077 = vpack.c.bf16 %v2076, %v2075
    %v2079 = vsel %vm286, %v2077, 0
    %2081 = vmatpush.bf16.msra.mxu0 0
    %2082 = vmatpush.bf16.msra.mxu0 0
    %2083 = vmatpush.bf16.msra.mxu0 0
    %2084 = vmatpush.bf16.msra.mxu0 0
    %2085 = vmatpush.bf16.msra.mxu0 0
    %2086 = vmatpush.bf16.msra.mxu0 %v285
    %2087 = vmatpush.bf16.msra.mxu0 %v284
    %2088 = vmatpush.bf16.msra.mxu0 %v283
    %2089 = vmatmul.bf16.gmra.mxu0 %v2079
    %v2090 = vpop.f32.mrf.mxu0
    %v2091 = vadd.f32 0.0, %v2090
    %v2092 = vpop.f32.mrf.mxu0
    %v2093 = vadd.f32 0.0, %v2092
    %2094 = vdwg.mxu0
    %v2095 = vpack.c.bf16 %v139, %v138
    %v2097 = vsel %vm209, %v2095, 0
    %2099 = vmatpush.bf16.msra.mxu0 0
    %2100 = vmatpush.bf16.msra.mxu0 0
    %2101 = vmatpush.bf16.msra.mxu0 0
    %2102 = vmatpush.bf16.msra.mxu0 0
    %2103 = vmatpush.bf16.msra.mxu0 0
    %2104 = vmatpush.bf16.msra.mxu0 0
    %2105 = vmatpush.bf16.msra.mxu0 0
    %2106 = vmatpush.bf16.msra.mxu0 %v246
    %2107 = vmatmul.bf16.gmra.mxu0 %v2097
    %v2108 = vpop.f32.mrf.mxu0
    %v2109 = vadd.f32 0.0, %v2108
    %v2110 = vpop.f32.mrf.mxu0
    %v2111 = vadd.f32 0.0, %v2110
    %2112 = vdwg.mxu0
    %s2113 = scalar_lea.vmem [#allocation7], 384
    %v2114 = vld [vmem:[%s2113] sm:$0xf]
    %v2115 = vld [vmem:[%s2113 + $0x4] sm:$0xf]
    %v2116 = vld [vmem:[%s2113 + $0x8] sm:$0xf]
    %v2117 = vld [vmem:[%s2113 + $0xc] sm:$0xf]
    %v2118 = vld [vmem:[%s2113 + $0x10] sm:$0xf]
    %v2119 = vld [vmem:[%s2113 + $0x14] sm:$0xf]
    %v2120 = vld [vmem:[%s2113 + $0x18] sm:$0xf]
    %v2121 = vld [vmem:[%s2113 + $0x1c] sm:$0xf]
    %v2122 = vld [vmem:[%s2113 + $0x20] sm:$0xf]
    %v2123 = vld [vmem:[%s2113 + $0x24] sm:$0xf]
    %v2124 = vld [vmem:[%s2113 + $0x28] sm:$0xf]
    %v2125 = vld [vmem:[%s2113 + $0x2c] sm:$0xf]
    %v2126 = vld [vmem:[%s2113 + $0x30] sm:$0xf]
    %v2127 = vld [vmem:[%s2113 + $0x34] sm:$0xf]
    %v2128 = vld [vmem:[%s2113 + $0x38] sm:$0xf]
    %v2129 = vld [vmem:[%s2113 + $0x3c] sm:$0xf]
    %v2130 = vld [vmem:[%s2113 + $0x40] sm:$0xf]
    %v2131 = vld [vmem:[%s2113 + $0x44] sm:$0xf]
    %v2132 = vld [vmem:[%s2113 + $0x48] sm:$0xf]
    %v2133 = vld [vmem:[%s2113 + $0x4c] sm:$0xf]
    %v2134 = vld [vmem:[%s2113 + $0x50] sm:$0xf]
    %v2135 = vld [vmem:[%s2113 + $0x54] sm:$0xf]
    %v2136 = vld [vmem:[%s2113 + $0x58] sm:$0xf]
    %v2137 = vld [vmem:[%s2113 + $0x5c] sm:$0xf]
    %v2138 = vld [vmem:[%s2113 + $0x60] sm:$0xf]
    %v2139 = vld [vmem:[%s2113 + $0x64] sm:$0xf]
    %v2140 = vld [vmem:[%s2113 + $0x68] sm:$0xf]
    %v2141 = vld [vmem:[%s2113 + $0x6c] sm:$0xf]
    %v2142 = vld [vmem:[%s2113 + $0x70] sm:$0xf]
    %v2143 = vld [vmem:[%s2113 + $0x74] sm:$0xf]
    %v2144 = vld [vmem:[%s2113 + $0x78] sm:$0xf]
    %v2145 = vld [vmem:[%s2113 + $0x7c] sm:$0xf]
    %v2146 = vld [vmem:[%s2113 + $0x80] sm:$0xf]
    %v2147 = vld [vmem:[%s2113 + $0x84] sm:$0xf]
    %v2148 = vld [vmem:[%s2113 + $0x88] sm:$0xf]
    %v2149 = vld [vmem:[%s2113 + $0x8c] sm:$0xf]
    %v2150 = vld [vmem:[%s2113 + $0x90] sm:$0xf]
    %v2151 = vld [vmem:[%s2113 + $0x94] sm:$0xf]
    %v2152 = vld [vmem:[%s2113 + $0x98] sm:$0xf]
    %v2153 = vld [vmem:[%s2113 + $0x9c] sm:$0xf]
    %v2154 = vld [vmem:[%s2113 + $0xa0] sm:$0xf]
    %v2155 = vld [vmem:[%s2113 + $0xa4] sm:$0xf]
    %v2156 = vld [vmem:[%s2113 + $0xa8] sm:$0xf]
    %v2157 = vld [vmem:[%s2113 + $0xac] sm:$0xf]
    %v2158 = vld [vmem:[%s2113 + $0xb0] sm:$0xf]
    %v2159 = vld [vmem:[%s2113 + $0xb4] sm:$0xf]
    %v2160 = vld [vmem:[%s2113 + $0xb8] sm:$0xf]
    %v2161 = vld [vmem:[%s2113 + $0xbc] sm:$0xf]
    %v2162 = vpack.c.bf16 %v1931, %v1929
    %v2163 = vpack.c.bf16 %v2093, %v2091
    %v2164 = vld [vmem:[%s5 + $0x8] sm:$0x1]
    %v2165 = vperm.slane %v2164, 0
    %v2214 = vunpack.c.l.b16 %v2114
    %v2215 = vunpack.c.l.b16 %v2115
    %v2216 = vunpack.c.l.b16 %v2116
    %v2217 = vunpack.c.l.b16 %v2117
    %v2218 = vunpack.c.l.b16 %v2118
    %v2219 = vunpack.c.l.b16 %v2119
    %v2220 = vunpack.c.l.b16 %v2120
    %v2221 = vunpack.c.l.b16 %v2121
    %v2222 = vunpack.c.l.b16 %v2122
    %v2223 = vunpack.c.l.b16 %v2123
    %v2224 = vunpack.c.l.b16 %v2124
    %v2225 = vunpack.c.l.b16 %v2125
    %v2226 = vunpack.c.l.b16 %v2126
    %v2227 = vunpack.c.l.b16 %v2127
    %v2228 = vunpack.c.l.b16 %v2128
    %v2229 = vunpack.c.l.b16 %v2129
    %v2230 = vunpack.c.l.b16 %v2130
    %v2231 = vunpack.c.l.b16 %v2131
    %v2232 = vunpack.c.l.b16 %v2132
    %v2233 = vunpack.c.l.b16 %v2133
    %v2234 = vunpack.c.l.b16 %v2134
    %v2235 = vunpack.c.l.b16 %v2135
    %v2236 = vunpack.c.l.b16 %v2136
    %v2237 = vunpack.c.l.b16 %v2137
    %v2238 = vunpack.c.l.b16 %v2138
    %v2239 = vunpack.c.l.b16 %v2139
    %v2240 = vunpack.c.l.b16 %v2140
    %v2241 = vunpack.c.l.b16 %v2141
    %v2242 = vunpack.c.l.b16 %v2142
    %v2243 = vunpack.c.l.b16 %v2143
    %v2244 = vunpack.c.l.b16 %v2144
    %v2245 = vunpack.c.l.b16 %v2145
    %v2246 = vunpack.c.l.b16 %v2146
    %v2247 = vunpack.c.l.b16 %v2147
    %v2248 = vunpack.c.l.b16 %v2148
    %v2249 = vunpack.c.l.b16 %v2149
    %v2250 = vunpack.c.l.b16 %v2150
    %v2251 = vunpack.c.l.b16 %v2151
    %v2252 = vunpack.c.l.b16 %v2152
    %v2253 = vunpack.c.l.b16 %v2153
    %v2254 = vunpack.c.l.b16 %v2154
    %v2255 = vunpack.c.l.b16 %v2155
    %v2256 = vunpack.c.l.b16 %v2156
    %v2257 = vunpack.c.l.b16 %v2157
    %v2258 = vunpack.c.l.b16 %v2158
    %v2259 = vunpack.c.l.b16 %v2159
    %v2260 = vunpack.c.l.b16 %v2160
    %v2261 = vunpack.c.l.b16 %v2161
    %v2262 = vpack.c.b16 %v2215, %v2214
    %v2263 = vpack.c.b16 %v2217, %v2216
    %v2264 = vpack.c.b16 %v2219, %v2218
    %v2265 = vpack.c.b16 %v2221, %v2220
    %v2266 = vpack.c.b16 %v2223, %v2222
    %v2267 = vpack.c.b16 %v2225, %v2224
    %v2268 = vpack.c.b16 %v2227, %v2226
    %v2269 = vpack.c.b16 %v2229, %v2228
    %v2270 = vpack.c.b16 %v2231, %v2230
    %v2271 = vpack.c.b16 %v2233, %v2232
    %v2272 = vpack.c.b16 %v2235, %v2234
    %v2273 = vpack.c.b16 %v2237, %v2236
    %v2274 = vpack.c.b16 %v2239, %v2238
    %v2275 = vpack.c.b16 %v2241, %v2240
    %v2276 = vpack.c.b16 %v2243, %v2242
    %v2277 = vpack.c.b16 %v2245, %v2244
    %v2278 = vpack.c.b16 %v2247, %v2246
    %v2279 = vpack.c.b16 %v2249, %v2248
    %v2280 = vpack.c.b16 %v2251, %v2250
    %v2281 = vpack.c.b16 %v2253, %v2252
    %v2282 = vpack.c.b16 %v2255, %v2254
    %v2283 = vpack.c.b16 %v2257, %v2256
    %v2284 = vpack.c.b16 %v2259, %v2258
    %v2285 = vpack.c.b16 %v2261, %v2260
    %2310 = vmatpush.bf16.msra.mxu0 %v2269
    %2311 = vmatpush.bf16.msra.mxu0 %v2268
    %2312 = vmatpush.bf16.msra.mxu0 %v2267
    %2313 = vmatpush.bf16.msra.mxu0 %v2266
    %2314 = vmatpush.bf16.msra.mxu0 %v2265
    %2315 = vmatpush.bf16.msra.mxu0 %v2264
    %2316 = vmatpush.bf16.msra.mxu0 %v2263
    %2317 = vmatpush.bf16.msra.mxu0 %v2262
    %2318 = vmatmul.bf16.gmra.mxu0 %v246
    %v2319 = vpop.f32.mrf.mxu0
    %v2320 = vadd.f32 %v2165, %v2319
    %v2321 = vpop.f32.mrf.mxu0
    %v2322 = vadd.f32 %v2165, %v2321
    %2323 = vdwg.mxu0
    %2324 = vmatpush.bf16.msra.mxu0 %v2277
    %2325 = vmatpush.bf16.msra.mxu0 %v2276
    %2326 = vmatpush.bf16.msra.mxu0 %v2275
    %2327 = vmatpush.bf16.msra.mxu0 %v2274
    %2328 = vmatpush.bf16.msra.mxu0 %v2273
    %2329 = vmatpush.bf16.msra.mxu0 %v2272
    %2330 = vmatpush.bf16.msra.mxu0 %v2271
    %2331 = vmatpush.bf16.msra.mxu0 %v2270
    %2332 = vmatmul.bf16.gmra.mxu0 %v2162
    %v2333 = vpop.f32.mrf.mxu0
    %v2334 = vadd.f32 %v2320, %v2333
    %v2335 = vpop.f32.mrf.mxu0
    %v2336 = vadd.f32 %v2322, %v2335
    %2337 = vdwg.mxu0
    %2338 = vmatpush.bf16.msra.mxu0 %v2285
    %2339 = vmatpush.bf16.msra.mxu0 %v2284
    %2340 = vmatpush.bf16.msra.mxu0 %v2283
    %2341 = vmatpush.bf16.msra.mxu0 %v2282
    %2342 = vmatpush.bf16.msra.mxu0 %v2281
    %2343 = vmatpush.bf16.msra.mxu0 %v2280
    %2344 = vmatpush.bf16.msra.mxu0 %v2279
    %2345 = vmatpush.bf16.msra.mxu0 %v2278
    %2346 = vmatmul.bf16.gmra.mxu0 %v2163
    %v2347 = vpop.f32.mrf.mxu0
    %v2348 = vadd.f32 %v2334, %v2347
    %v2349 = vpop.f32.mrf.mxu0
    %v2350 = vadd.f32 %v2336, %v2349
    %2351 = vdwg.mxu0
    %s2352 = scalar_lea.vmem [#allocation10], 512
    %v2353 = vld [vmem:[%s2352] sm:$0xff]
    %v2354 = vld [vmem:[%s2352 + $0x8] sm:$0xff]
    %v2355 = vld [vmem:[%s2352 + $0x10] sm:$0xff]
    %v2356 = vld [vmem:[%s2352 + $0x18] sm:$0xff]
    %v2357 = vld [vmem:[%s2352 + $0x20] sm:$0xff]
    %v2358 = vld [vmem:[%s2352 + $0x28] sm:$0xff]
    %v2359 = vld [vmem:[%s2352 + $0x30] sm:$0xff]
    %v2360 = vld [vmem:[%s2352 + $0x38] sm:$0xff]
    %v2361 = vld [vmem:[%s2352 + $0x40] sm:$0xff]
    %v2362 = vld [vmem:[%s2352 + $0x48] sm:$0xff]
    %v2363 = vld [vmem:[%s2352 + $0x50] sm:$0xff]
    %v2364 = vld [vmem:[%s2352 + $0x58] sm:$0xff]
    %v2365 = vld [vmem:[%s2352 + $0x60] sm:$0xff]
    %v2366 = vld [vmem:[%s2352 + $0x68] sm:$0xff]
    %v2367 = vld [vmem:[%s2352 + $0x70] sm:$0xff]
    %v2368 = vld [vmem:[%s2352 + $0x78] sm:$0xff]
    %v2369 = vld [vmem:[%s2352 + $0x80] sm:$0xff]
    %v2370 = vld [vmem:[%s2352 + $0x88] sm:$0xff]
    %v2371 = vld [vmem:[%s2352 + $0x90] sm:$0xff]
    %v2372 = vld [vmem:[%s2352 + $0x98] sm:$0xff]
    %v2373 = vld [vmem:[%s2352 + $0xa0] sm:$0xff]
    %v2374 = vld [vmem:[%s2352 + $0xa8] sm:$0xff]
    %v2375 = vld [vmem:[%s2352 + $0xb0] sm:$0xff]
    %v2376 = vld [vmem:[%s2352 + $0xb8] sm:$0xff]
    %v2377 = vld [vmem:[%s2352 + $0xc0] sm:$0xff]
    %v2378 = vld [vmem:[%s2352 + $0xc8] sm:$0xff]
    %v2379 = vld [vmem:[%s2352 + $0xd0] sm:$0xff]
    %v2380 = vld [vmem:[%s2352 + $0xd8] sm:$0xff]
    %v2381 = vld [vmem:[%s2352 + $0xe0] sm:$0xff]
    %v2382 = vld [vmem:[%s2352 + $0xe8] sm:$0xff]
    %v2383 = vld [vmem:[%s2352 + $0xf0] sm:$0xff]
    %v2384 = vld [vmem:[%s2352 + $0xf8] sm:$0xff]
    %s2385 = scalar_lea.vmem %s9, 2
    %v2386 = vld [vmem:[%s2385] ss:$4 sm:$0x3]
    %v2388 = vperm.slane %v2386, 0
    %v2389 = vperm.slane %v2386, 1
    %v2424 = vunpack.c.l.b16 %v2353
    %v2425 = vunpack.c.h.b16 %v2353
    %v2426 = vunpack.c.l.b16 %v2354
    %v2427 = vunpack.c.h.b16 %v2354
    %v2428 = vunpack.c.l.b16 %v2355
    %v2429 = vunpack.c.h.b16 %v2355
    %v2430 = vunpack.c.l.b16 %v2356
    %v2431 = vunpack.c.h.b16 %v2356
    %v2432 = vunpack.c.l.b16 %v2357
    %v2433 = vunpack.c.h.b16 %v2357
    %v2434 = vunpack.c.l.b16 %v2358
    %v2435 = vunpack.c.h.b16 %v2358
    %v2436 = vunpack.c.l.b16 %v2359
    %v2437 = vunpack.c.h.b16 %v2359
    %v2438 = vunpack.c.l.b16 %v2360
    %v2439 = vunpack.c.h.b16 %v2360
    %v2440 = vunpack.c.l.b16 %v2361
    %v2441 = vunpack.c.h.b16 %v2361
    %v2442 = vunpack.c.l.b16 %v2362
    %v2443 = vunpack.c.h.b16 %v2362
    %v2444 = vunpack.c.l.b16 %v2363
    %v2445 = vunpack.c.h.b16 %v2363
    %v2446 = vunpack.c.l.b16 %v2364
    %v2447 = vunpack.c.h.b16 %v2364
    %v2448 = vunpack.c.l.b16 %v2365
    %v2449 = vunpack.c.h.b16 %v2365
    %v2450 = vunpack.c.l.b16 %v2366
    %v2451 = vunpack.c.h.b16 %v2366
    %v2452 = vunpack.c.l.b16 %v2367
    %v2453 = vunpack.c.h.b16 %v2367
    %v2454 = vunpack.c.l.b16 %v2368
    %v2455 = vunpack.c.h.b16 %v2368
    %v2456 = vunpack.c.l.b16 %v2369
    %v2457 = vunpack.c.h.b16 %v2369
    %v2458 = vunpack.c.l.b16 %v2370
    %v2459 = vunpack.c.h.b16 %v2370
    %v2460 = vunpack.c.l.b16 %v2371
    %v2461 = vunpack.c.h.b16 %v2371
    %v2462 = vunpack.c.l.b16 %v2372
    %v2463 = vunpack.c.h.b16 %v2372
    %v2464 = vunpack.c.l.b16 %v2373
    %v2465 = vunpack.c.h.b16 %v2373
    %v2466 = vunpack.c.l.b16 %v2374
    %v2467 = vunpack.c.h.b16 %v2374
    %v2468 = vunpack.c.l.b16 %v2375
    %v2469 = vunpack.c.h.b16 %v2375
    %v2470 = vunpack.c.l.b16 %v2376
    %v2471 = vunpack.c.h.b16 %v2376
    %v2472 = vunpack.c.l.b16 %v2377
    %v2473 = vunpack.c.h.b16 %v2377
    %v2474 = vunpack.c.l.b16 %v2378
    %v2475 = vunpack.c.h.b16 %v2378
    %v2476 = vunpack.c.l.b16 %v2379
    %v2477 = vunpack.c.h.b16 %v2379
    %v2478 = vunpack.c.l.b16 %v2380
    %v2479 = vunpack.c.h.b16 %v2380
    %v2480 = vunpack.c.l.b16 %v2381
    %v2481 = vunpack.c.h.b16 %v2381
    %v2482 = vunpack.c.l.b16 %v2382
    %v2483 = vunpack.c.h.b16 %v2382
    %v2484 = vunpack.c.l.b16 %v2383
    %v2485 = vunpack.c.h.b16 %v2383
    %v2486 = vunpack.c.l.b16 %v2384
    %v2487 = vunpack.c.h.b16 %v2384
    %v2488 = vpack.c.b16 %v2426, %v2424
    %v2489 = vpack.c.b16 %v2427, %v2425
    %v2490 = vpack.c.b16 %v2430, %v2428
    %v2491 = vpack.c.b16 %v2431, %v2429
    %v2492 = vpack.c.b16 %v2434, %v2432
    %v2493 = vpack.c.b16 %v2435, %v2433
    %v2494 = vpack.c.b16 %v2438, %v2436
    %v2495 = vpack.c.b16 %v2439, %v2437
    %v2496 = vpack.c.b16 %v2442, %v2440
    %v2497 = vpack.c.b16 %v2443, %v2441
    %v2498 = vpack.c.b16 %v2446, %v2444
    %v2499 = vpack.c.b16 %v2447, %v2445
    %v2500 = vpack.c.b16 %v2450, %v2448
    %v2501 = vpack.c.b16 %v2451, %v2449
    %v2502 = vpack.c.b16 %v2454, %v2452
    %v2503 = vpack.c.b16 %v2455, %v2453
    %v2504 = vpack.c.b16 %v2458, %v2456
    %v2505 = vpack.c.b16 %v2459, %v2457
    %v2506 = vpack.c.b16 %v2462, %v2460
    %v2507 = vpack.c.b16 %v2463, %v2461
    %v2508 = vpack.c.b16 %v2466, %v2464
    %v2509 = vpack.c.b16 %v2467, %v2465
    %v2510 = vpack.c.b16 %v2470, %v2468
    %v2511 = vpack.c.b16 %v2471, %v2469
    %v2512 = vpack.c.b16 %v2474, %v2472
    %v2513 = vpack.c.b16 %v2475, %v2473
    %v2514 = vpack.c.b16 %v2478, %v2476
    %v2515 = vpack.c.b16 %v2479, %v2477
    %v2516 = vpack.c.b16 %v2482, %v2480
    %v2517 = vpack.c.b16 %v2483, %v2481
    %v2518 = vpack.c.b16 %v2486, %v2484
    %v2519 = vpack.c.b16 %v2487, %v2485
    %2552 = vmatpush.bf16.msra.mxu0 %v2502
    %2553 = vmatpush.bf16.msra.mxu0 %v2500
    %2554 = vmatpush.bf16.msra.mxu0 %v2498
    %2555 = vmatpush.bf16.msra.mxu0 %v2496
    %2556 = vmatpush.bf16.msra.mxu0 %v2494
    %2557 = vmatpush.bf16.msra.mxu0 %v2492
    %2558 = vmatpush.bf16.msra.mxu0 %v2490
    %2559 = vmatpush.bf16.msra.mxu0 %v2488
    %2560 = vmatmul.bf16.gmra.mxu0 %v2162
    %v2561 = vpop.f32.mrf.mxu0
    %v2562 = vadd.f32 %v2388, %v2561
    %v2563 = vpop.f32.mrf.mxu0
    %v2564 = vadd.f32 %v2388, %v2563
    %2565 = vdwg.mxu0
    %2566 = vmatpush.bf16.msra.mxu0 %v2518
    %2567 = vmatpush.bf16.msra.mxu0 %v2516
    %2568 = vmatpush.bf16.msra.mxu0 %v2514
    %2569 = vmatpush.bf16.msra.mxu0 %v2512
    %2570 = vmatpush.bf16.msra.mxu0 %v2510
    %2571 = vmatpush.bf16.msra.mxu0 %v2508
    %2572 = vmatpush.bf16.msra.mxu0 %v2506
    %2573 = vmatpush.bf16.msra.mxu0 %v2504
    %2574 = vmatmul.bf16.gmra.mxu0 %v2163
    %v2575 = vpop.f32.mrf.mxu0
    %v2576 = vadd.f32 %v2562, %v2575
    %v2577 = vpop.f32.mrf.mxu0
    %v2578 = vadd.f32 %v2564, %v2577
    %2579 = vdwg.mxu0
    %2580 = vmatpush.bf16.msra.mxu0 %v2503
    %2581 = vmatpush.bf16.msra.mxu0 %v2501
    %2582 = vmatpush.bf16.msra.mxu0 %v2499
    %2583 = vmatpush.bf16.msra.mxu0 %v2497
    %2584 = vmatpush.bf16.msra.mxu0 %v2495
    %2585 = vmatpush.bf16.msra.mxu0 %v2493
    %2586 = vmatpush.bf16.msra.mxu0 %v2491
    %2587 = vmatpush.bf16.msra.mxu0 %v2489
    %2588 = vmatmul.bf16.gmra.mxu0 %v2162
    %v2589 = vpop.f32.mrf.mxu0
    %v2590 = vadd.f32 %v2389, %v2589
    %v2591 = vpop.f32.mrf.mxu0
    %v2592 = vadd.f32 %v2389, %v2591
    %2593 = vdwg.mxu0
    %2594 = vmatpush.bf16.msra.mxu0 %v2519
    %2595 = vmatpush.bf16.msra.mxu0 %v2517
    %2596 = vmatpush.bf16.msra.mxu0 %v2515
    %2597 = vmatpush.bf16.msra.mxu0 %v2513
    %2598 = vmatpush.bf16.msra.mxu0 %v2511
    %2599 = vmatpush.bf16.msra.mxu0 %v2509
    %2600 = vmatpush.bf16.msra.mxu0 %v2507
    %2601 = vmatpush.bf16.msra.mxu0 %v2505
    %2602 = vmatmul.bf16.gmra.mxu0 %v2163
    %v2603 = vpop.f32.mrf.mxu0
    %v2604 = vadd.f32 %v2590, %v2603
    %v2605 = vpop.f32.mrf.mxu0
    %v2606 = vadd.f32 %v2592, %v2605
    %2607 = vdwg.mxu0
    %v2608 = vadd.f32 %v2348, %v2576
    %v2609 = vadd.f32 %v2350, %v2578
    %v2610 = vtanh.pop %v2608
    %v2611 = vtanh.pop %v2609
    %v2612 = vadd.f32 %v2348, %v2604
    %v2613 = vadd.f32 %v2350, %v2606
    %v2614 = vtanh.pop %v2612
    %v2615 = vtanh.pop %v2613
    %v2616 = vmul.f32 %v2610, %v1929
    %v2617 = vmul.f32 %v2611, %v1931
    %v2618 = vadd.f32 %v186, %v2616
    %v2619 = vadd.f32 %v187, %v2617
    %v2620 = vmul.f32 %v2614, %v2091
    %v2621 = vmul.f32 %v2615, %v2093
    %v2622 = vadd.f32 %v2618, %v2620
    %v2623 = vadd.f32 %v2619, %v2621
    %v2624 = vadd.f32 %v2622, %v2109
    %v2625 = vadd.f32 %v2623, %v2111
    %v2626 = vpack.c.bf16 %v161, %v160
    %v2627 = vpack.c.bf16 %v163, %v162
    %v2628 = vpack.c.bf16 %v175, %v174
    %v2629 = vpack.c.bf16 %v177, %v176
    %vm2630 = vcmask 261120
    %v2632 = vsel %vm2630, %v2626, 0
    %v2635 = vsel %vm2630, %v2627, 0
    %2637 = vmatpush.bf16.msra.mxu0 0
    %2638 = vmatpush.bf16.msra.mxu0 0
    %2639 = vmatpush.bf16.msra.mxu0 0
    %2640 = vmatpush.bf16.msra.mxu0 0
    %2641 = vmatpush.bf16.msra.mxu0 0
    %2642 = vmatpush.bf16.msra.mxu0 0
    %2643 = vmatpush.bf16.msra.mxu0 %v2629
    %2644 = vmatpush.bf16.msra.mxu0 %v2628
    %2645 = vmatmul.bf16.gmra.mxu0 %v2632
    %v2646 = vpop.f32.mrf.mxu0
    %v2647 = vadd.f32 0.0, %v2646
    %v2648 = vpop.f32.mrf.mxu0
    %v2649 = vadd.f32 0.0, %v2648
    %2650 = vmatmul.bf16.gmra.mxu0 %v2635
    %v2651 = vpop.f32.mrf.mxu0
    %v2652 = vadd.f32 0.0, %v2651
    %v2653 = vpop.f32.mrf.mxu0
    %v2654 = vadd.f32 0.0, %v2653
    %2655 = vdwg.mxu0
    %v2656 = vmax.f32 %v2647, 0.0
    %v2657 = vmax.f32 %v2649, 0.0
    %v2658 = vmax.f32 %v2652, 0.0
    %v2659 = vmax.f32 %v2654, 0.0
    %v2660 = vsel %vm193, %v174, %v2656
    %v2661 = vsel %vm194, %v175, %v2657
    %v2662 = vsel %vm195, %v176, %v2658
    %v2663 = vsel %vm196, %v177, %v2659
    %v2664 = vsel %vm193, %v2656, %v174
    %v2665 = vsel %vm194, %v2657, %v175
    %v2666 = vsel %vm195, %v2658, %v176
    %v2667 = vsel %vm196, %v2659, %v177
    %v2668 = vld [vmem:[#allocation9] sm:$0xf]
    %v2669 = vld [vmem:[#allocation9 + $0x4] sm:$0xf]
    %v2670 = vld [vmem:[#allocation9 + $0x8] sm:$0xf]
    %v2671 = vld [vmem:[#allocation9 + $0xc] sm:$0xf]
    %v2672 = vld [vmem:[#allocation9 + $0x10] sm:$0xf]
    %v2673 = vld [vmem:[#allocation9 + $0x14] sm:$0xf]
    %v2674 = vld [vmem:[#allocation9 + $0x18] sm:$0xf]
    %v2675 = vld [vmem:[#allocation9 + $0x1c] sm:$0xf]
    %v2676 = vld [vmem:[#allocation9 + $0x20] sm:$0xf]
    %v2677 = vld [vmem:[#allocation9 + $0x24] sm:$0xf]
    %v2678 = vld [vmem:[#allocation9 + $0x28] sm:$0xf]
    %v2679 = vld [vmem:[#allocation9 + $0x2c] sm:$0xf]
    %v2680 = vld [vmem:[#allocation9 + $0x30] sm:$0xf]
    %v2681 = vld [vmem:[#allocation9 + $0x34] sm:$0xf]
    %v2682 = vld [vmem:[#allocation9 + $0x38] sm:$0xf]
    %v2683 = vld [vmem:[#allocation9 + $0x3c] sm:$0xf]
    %v2684 = vld [vmem:[#allocation9 + $0x40] sm:$0xf]
    %v2685 = vld [vmem:[#allocation9 + $0x44] sm:$0xf]
    %v2686 = vld [vmem:[#allocation9 + $0x48] sm:$0xf]
    %v2687 = vld [vmem:[#allocation9 + $0x4c] sm:$0xf]
    %v2688 = vld [vmem:[#allocation9 + $0x50] sm:$0xf]
    %v2689 = vld [vmem:[#allocation9 + $0x54] sm:$0xf]
    %v2690 = vld [vmem:[#allocation9 + $0x58] sm:$0xf]
    %v2691 = vld [vmem:[#allocation9 + $0x5c] sm:$0xf]
    %v2692 = vld [vmem:[#allocation9 + $0x60] sm:$0xf]
    %v2693 = vld [vmem:[#allocation9 + $0x64] sm:$0xf]
    %v2694 = vld [vmem:[#allocation9 + $0x68] sm:$0xf]
    %v2695 = vld [vmem:[#allocation9 + $0x6c] sm:$0xf]
    %v2696 = vld [vmem:[#allocation9 + $0x70] sm:$0xf]
    %v2697 = vld [vmem:[#allocation9 + $0x74] sm:$0xf]
    %v2698 = vld [vmem:[#allocation9 + $0x78] sm:$0xf]
    %v2699 = vld [vmem:[#allocation9 + $0x7c] sm:$0xf]
    %v2700 = vpack.c.bf16 %v2661, %v2660
    %v2701 = vpack.c.bf16 %v2665, %v2664
    %v2702 = vpack.c.bf16 %v2663, %v2662
    %v2703 = vpack.c.bf16 %v2667, %v2666
    %v2704 = vld [vmem:[%s5 + $0x9] sm:$0x1]
    %v2705 = vperm.slane %v2704, 0
    %v2738 = vunpack.c.l.b16 %v2668
    %v2739 = vunpack.c.l.b16 %v2669
    %v2740 = vunpack.c.l.b16 %v2670
    %v2741 = vunpack.c.l.b16 %v2671
    %v2742 = vunpack.c.l.b16 %v2672
    %v2743 = vunpack.c.l.b16 %v2673
    %v2744 = vunpack.c.l.b16 %v2674
    %v2745 = vunpack.c.l.b16 %v2675
    %v2746 = vunpack.c.l.b16 %v2676
    %v2747 = vunpack.c.l.b16 %v2677
    %v2748 = vunpack.c.l.b16 %v2678
    %v2749 = vunpack.c.l.b16 %v2679
    %v2750 = vunpack.c.l.b16 %v2680
    %v2751 = vunpack.c.l.b16 %v2681
    %v2752 = vunpack.c.l.b16 %v2682
    %v2753 = vunpack.c.l.b16 %v2683
    %v2754 = vunpack.c.l.b16 %v2684
    %v2755 = vunpack.c.l.b16 %v2685
    %v2756 = vunpack.c.l.b16 %v2686
    %v2757 = vunpack.c.l.b16 %v2687
    %v2758 = vunpack.c.l.b16 %v2688
    %v2759 = vunpack.c.l.b16 %v2689
    %v2760 = vunpack.c.l.b16 %v2690
    %v2761 = vunpack.c.l.b16 %v2691
    %v2762 = vunpack.c.l.b16 %v2692
    %v2763 = vunpack.c.l.b16 %v2693
    %v2764 = vunpack.c.l.b16 %v2694
    %v2765 = vunpack.c.l.b16 %v2695
    %v2766 = vunpack.c.l.b16 %v2696
    %v2767 = vunpack.c.l.b16 %v2697
    %v2768 = vunpack.c.l.b16 %v2698
    %v2769 = vunpack.c.l.b16 %v2699
    %v2770 = vpack.c.b16 %v2739, %v2738
    %v2771 = vpack.c.b16 %v2741, %v2740
    %v2772 = vpack.c.b16 %v2743, %v2742
    %v2773 = vpack.c.b16 %v2745, %v2744
    %v2774 = vpack.c.b16 %v2747, %v2746
    %v2775 = vpack.c.b16 %v2749, %v2748
    %v2776 = vpack.c.b16 %v2751, %v2750
    %v2777 = vpack.c.b16 %v2753, %v2752
    %v2778 = vpack.c.b16 %v2755, %v2754
    %v2779 = vpack.c.b16 %v2757, %v2756
    %v2780 = vpack.c.b16 %v2759, %v2758
    %v2781 = vpack.c.b16 %v2761, %v2760
    %v2782 = vpack.c.b16 %v2763, %v2762
    %v2783 = vpack.c.b16 %v2765, %v2764
    %v2784 = vpack.c.b16 %v2767, %v2766
    %v2785 = vpack.c.b16 %v2769, %v2768
    %2802 = vmatpush.bf16.msra.mxu0 %v2777
    %2803 = vmatpush.bf16.msra.mxu0 %v2776
    %2804 = vmatpush.bf16.msra.mxu0 %v2775
    %2805 = vmatpush.bf16.msra.mxu0 %v2774
    %2806 = vmatpush.bf16.msra.mxu0 %v2773
    %2807 = vmatpush.bf16.msra.mxu0 %v2772
    %2808 = vmatpush.bf16.msra.mxu0 %v2771
    %2809 = vmatpush.bf16.msra.mxu0 %v2770
    %2810 = vmatmul.bf16.gmra.mxu0 %v2700
    %v2811 = vpop.f32.mrf.mxu0
    %v2812 = vadd.f32 %v2705, %v2811
    %v2813 = vpop.f32.mrf.mxu0
    %v2814 = vadd.f32 %v2705, %v2813
    %2815 = vmatmul.bf16.gmra.mxu0 %v2702
    %v2816 = vpop.f32.mrf.mxu0
    %v2817 = vadd.f32 %v2705, %v2816
    %v2818 = vpop.f32.mrf.mxu0
    %v2819 = vadd.f32 %v2705, %v2818
    %2820 = vdwg.mxu0
    %2821 = vmatpush.bf16.msra.mxu0 %v2785
    %2822 = vmatpush.bf16.msra.mxu0 %v2784
    %2823 = vmatpush.bf16.msra.mxu0 %v2783
    %2824 = vmatpush.bf16.msra.mxu0 %v2782
    %2825 = vmatpush.bf16.msra.mxu0 %v2781
    %2826 = vmatpush.bf16.msra.mxu0 %v2780
    %2827 = vmatpush.bf16.msra.mxu0 %v2779
    %2828 = vmatpush.bf16.msra.mxu0 %v2778
    %2829 = vmatmul.bf16.gmra.mxu0 %v2701
    %v2830 = vpop.f32.mrf.mxu0
    %v2831 = vadd.f32 %v2812, %v2830
    %v2832 = vpop.f32.mrf.mxu0
    %v2833 = vadd.f32 %v2814, %v2832
    %2834 = vmatmul.bf16.gmra.mxu0 %v2703
    %v2835 = vpop.f32.mrf.mxu0
    %v2836 = vadd.f32 %v2817, %v2835
    %v2837 = vpop.f32.mrf.mxu0
    %v2838 = vadd.f32 %v2819, %v2837
    %2839 = vdwg.mxu0
    %v2840 = vxor.u32 %v2831, 2147483648
    %v2841 = vxor.u32 %v2833, 2147483648
    %v2842 = vxor.u32 %v2836, 2147483648
    %v2843 = vxor.u32 %v2838, 2147483648
    %v2844 = vmul.f32 %v2840, 1.442695
    %v2845 = vpow.pop %v2844
    %v2846 = vmul.f32 %v2841, 1.442695
    %v2847 = vpow.pop %v2846
    %v2848 = vmul.f32 %v2842, 1.442695
    %v2849 = vpow.pop %v2848
    %v2850 = vmul.f32 %v2843, 1.442695
    %v2851 = vpow.pop %v2850
    %v2852 = vadd.f32 %v2845, 1.0
    %v2853 = vadd.f32 %v2847, 1.0
    %v2854 = vadd.f32 %v2849, 1.0
    %v2855 = vadd.f32 %v2851, 1.0
    %v2856 = vrcp.pop %v2852
    %v2857 = vmul.f32 %v2852, %v2856
    %v2858 = vsub.f32 1.0, %v2857
    %v2859 = vmul.f32 %v2856, %v2858
    %v2860 = vadd.f32 %v2856, %v2859
    %vm2861 = vweird.f32 %v2852
    %vm2862 = vweird.f32 %v2856
    %vm2863 = vmor %vm2861, %vm2862
    %v2864 = vsel %vm2863, %v2856, %v2860
    %v2865 = vand.u32 2147483647, %v2852
    %vm2866 = vcmp.eq.f32.partialorder %v2865, 8.507059e+37
    %v2867 = vand.u32 %v2852, 2147483648
    %v2868 = vor.u32 1.1754944e-38, %v2867
    %v2869 = vsel %vm2866, %v2868, %v2864
    %v2870 = vmul.f32 1.0, %v2869
    %v2871 = vrcp.pop %v2853
    %v2872 = vmul.f32 %v2853, %v2871
    %v2873 = vsub.f32 1.0, %v2872
    %v2874 = vmul.f32 %v2871, %v2873
    %v2875 = vadd.f32 %v2871, %v2874
    %vm2876 = vweird.f32 %v2853
    %vm2877 = vweird.f32 %v2871
    %vm2878 = vmor %vm2876, %vm2877
    %v2879 = vsel %vm2878, %v2871, %v2875
    %v2880 = vand.u32 2147483647, %v2853
    %vm2881 = vcmp.eq.f32.partialorder %v2880, 8.507059e+37
    %v2882 = vand.u32 %v2853, 2147483648
    %v2883 = vor.u32 1.1754944e-38, %v2882
    %v2884 = vsel %vm2881, %v2883, %v2879
    %v2885 = vmul.f32 1.0, %v2884
    %v2886 = vrcp.pop %v2854
    %v2887 = vmul.f32 %v2854, %v2886
    %v2888 = vsub.f32 1.0, %v2887
    %v2889 = vmul.f32 %v2886, %v2888
    %v2890 = vadd.f32 %v2886, %v2889
    %vm2891 = vweird.f32 %v2854
    %vm2892 = vweird.f32 %v2886
    %vm2893 = vmor %vm2891, %vm2892
    %v2894 = vsel %vm2893, %v2886, %v2890
    %v2895 = vand.u32 2147483647, %v2854
    %vm2896 = vcmp.eq.f32.partialorder %v2895, 8.507059e+37
    %v2897 = vand.u32 %v2854, 2147483648
    %v2898 = vor.u32 1.1754944e-38, %v2897
    %v2899 = vsel %vm2896, %v2898, %v2894
    %v2900 = vmul.f32 1.0, %v2899
    %v2901 = vrcp.pop %v2855
    %v2902 = vmul.f32 %v2855, %v2901
    %v2903 = vsub.f32 1.0, %v2902
    %v2904 = vmul.f32 %v2901, %v2903
    %v2905 = vadd.f32 %v2901, %v2904
    %vm2906 = vweird.f32 %v2855
    %vm2907 = vweird.f32 %v2901
    %vm2908 = vmor %vm2906, %vm2907
    %v2909 = vsel %vm2908, %v2901, %v2905
    %v2910 = vand.u32 2147483647, %v2855
    %vm2911 = vcmp.eq.f32.partialorder %v2910, 8.507059e+37
    %v2912 = vand.u32 %v2855, 2147483648
    %v2913 = vor.u32 1.1754944e-38, %v2912
    %v2914 = vsel %vm2911, %v2913, %v2909
    %v2915 = vmul.f32 1.0, %v2914
    %v2916 = vmul.f32 %v2870, %v174
    %v2917 = vmul.f32 %v2885, %v175
    %v2918 = vmul.f32 %v2900, %v176
    %v2919 = vmul.f32 %v2915, %v177
    %v2920 = vsub.f32 1.0, %v2870
    %v2921 = vsub.f32 1.0, %v2885
    %v2922 = vsub.f32 1.0, %v2900
    %v2923 = vsub.f32 1.0, %v2915
    %v2924 = vmul.f32 %v2920, %v2656
    %v2925 = vmul.f32 %v2921, %v2657
    %v2926 = vmul.f32 %v2922, %v2658
    %v2927 = vmul.f32 %v2923, %v2659
    %v2928 = vadd.f32 %v2916, %v2924
    %v2929 = vadd.f32 %v2917, %v2925
    %v2930 = vadd.f32 %v2918, %v2926
    %v2931 = vadd.f32 %v2919, %v2927
    %v2932 = vpack.c.bf16 %v165, %v164
    %v2933 = vpack.c.bf16 %v167, %v166
    %v2934 = vpack.c.bf16 %v169, %v168
    %v2935 = vpack.c.bf16 %v935, %v934
    %v2936 = vpack.c.bf16 %v937, %v936
    %v2937 = vpack.c.bf16 %v939, %v938
    %v2939 = vsel %vm286, %v2932, 0
    %v2942 = vsel %vm286, %v2933, 0
    %v2945 = vsel %vm286, %v2934, 0
    %2947 = vmatpush.bf16.msra.mxu0 0
    %2948 = vmatpush.bf16.msra.mxu0 0
    %2949 = vmatpush.bf16.msra.mxu0 0
    %2950 = vmatpush.bf16.msra.mxu0 0
    %2951 = vmatpush.bf16.msra.mxu0 0
    %2952 = vmatpush.bf16.msra.mxu0 %v2937
    %2953 = vmatpush.bf16.msra.mxu0 %v2936
    %2954 = vmatpush.bf16.msra.mxu0 %v2935
    %2955 = vmatmul.bf16.gmra.mxu0 %v2939
    %v2956 = vpop.f32.mrf.mxu0
    %v2957 = vadd.f32 0.0, %v2956
    %v2958 = vpop.f32.mrf.mxu0
    %v2959 = vadd.f32 0.0, %v2958
    %2960 = vmatmul.bf16.gmra.mxu0 %v2942
    %v2961 = vpop.f32.mrf.mxu0
    %v2962 = vadd.f32 0.0, %v2961
    %v2963 = vpop.f32.mrf.mxu0
    %v2964 = vadd.f32 0.0, %v2963
    %2965 = vmatmul.bf16.gmra.mxu0 %v2945
    %v2966 = vpop.f32.mrf.mxu0
    %v2967 = vadd.f32 0.0, %v2966
    %v2968 = vpop.f32.mrf.mxu0
    %v2969 = vadd.f32 0.0, %v2968
    %2970 = vdwg.mxu0
    %v2971 = vmax.f32 %v2957, 0.0
    %v2972 = vmax.f32 %v2959, 0.0
    %v2973 = vmax.f32 %v2962, 0.0
    %v2974 = vmax.f32 %v2964, 0.0
    %v2975 = vmax.f32 %v2967, 0.0
    %v2976 = vmax.f32 %v2969, 0.0
    %v2977 = vsel %vm199, %v934, %v2971
    %v2978 = vsel %vm200, %v935, %v2972
    %v2979 = vsel %vm201, %v936, %v2973
    %v2980 = vsel %vm202, %v937, %v2974
    %v2981 = vsel %vm203, %v938, %v2975
    %v2982 = vsel %vm204, %v939, %v2976
    %v2983 = vsel %vm199, %v2971, %v934
    %v2984 = vsel %vm200, %v2972, %v935
    %v2985 = vsel %vm201, %v2973, %v936
    %v2986 = vsel %vm202, %v2974, %v937
    %v2987 = vsel %vm203, %v2975, %v938
    %v2988 = vsel %vm204, %v2976, %v939
    %v2989 = vpack.c.bf16 %v2978, %v2977
    %v2990 = vpack.c.bf16 %v2984, %v2983
    %v2991 = vpack.c.bf16 %v2980, %v2979
    %v2992 = vpack.c.bf16 %v2986, %v2985
    %v2993 = vpack.c.bf16 %v2982, %v2981
    %v2994 = vpack.c.bf16 %v2988, %v2987
    %2995 = vmatpush.bf16.msra.mxu0 %v2777
    %2996 = vmatpush.bf16.msra.mxu0 %v2776
    %2997 = vmatpush.bf16.msra.mxu0 %v2775
    %2998 = vmatpush.bf16.msra.mxu0 %v2774
    %2999 = vmatpush.bf16.msra.mxu0 %v2773
    %3000 = vmatpush.bf16.msra.mxu0 %v2772
    %3001 = vmatpush.bf16.msra.mxu0 %v2771
    %3002 = vmatpush.bf16.msra.mxu0 %v2770
    %3003 = vmatmul.bf16.gmra.mxu0 %v2989
    %v3004 = vpop.f32.mrf.mxu0
    %v3005 = vadd.f32 %v2705, %v3004
    %v3006 = vpop.f32.mrf.mxu0
    %v3007 = vadd.f32 %v2705, %v3006
    %3008 = vmatmul.bf16.gmra.mxu0 %v2991
    %v3009 = vpop.f32.mrf.mxu0
    %v3010 = vadd.f32 %v2705, %v3009
    %v3011 = vpop.f32.mrf.mxu0
    %v3012 = vadd.f32 %v2705, %v3011
    %3013 = vmatmul.bf16.gmra.mxu0 %v2993
    %v3014 = vpop.f32.mrf.mxu0
    %v3015 = vadd.f32 %v2705, %v3014
    %v3016 = vpop.f32.mrf.mxu0
    %v3017 = vadd.f32 %v2705, %v3016
    %3018 = vdwg.mxu0
    %3019 = vmatpush.bf16.msra.mxu0 %v2785
    %3020 = vmatpush.bf16.msra.mxu0 %v2784
    %3021 = vmatpush.bf16.msra.mxu0 %v2783
    %3022 = vmatpush.bf16.msra.mxu0 %v2782
    %3023 = vmatpush.bf16.msra.mxu0 %v2781
    %3024 = vmatpush.bf16.msra.mxu0 %v2780
    %3025 = vmatpush.bf16.msra.mxu0 %v2779
    %3026 = vmatpush.bf16.msra.mxu0 %v2778
    %3027 = vmatmul.bf16.gmra.mxu0 %v2990
    %v3028 = vpop.f32.mrf.mxu0
    %v3029 = vadd.f32 %v3005, %v3028
    %v3030 = vpop.f32.mrf.mxu0
    %v3031 = vadd.f32 %v3007, %v3030
    %3032 = vmatmul.bf16.gmra.mxu0 %v2992
    %v3033 = vpop.f32.mrf.mxu0
    %v3034 = vadd.f32 %v3010, %v3033
    %v3035 = vpop.f32.mrf.mxu0
    %v3036 = vadd.f32 %v3012, %v3035
    %3037 = vmatmul.bf16.gmra.mxu0 %v2994
    %v3038 = vpop.f32.mrf.mxu0
    %v3039 = vadd.f32 %v3015, %v3038
    %v3040 = vpop.f32.mrf.mxu0
    %v3041 = vadd.f32 %v3017, %v3040
    %3042 = vdwg.mxu0
    %v3043 = vxor.u32 %v3029, 2147483648
    %v3044 = vxor.u32 %v3031, 2147483648
    %v3045 = vxor.u32 %v3034, 2147483648
    %v3046 = vxor.u32 %v3036, 2147483648
    %v3047 = vxor.u32 %v3039, 2147483648
    %v3048 = vxor.u32 %v3041, 2147483648
    %v3049 = vmul.f32 %v3043, 1.442695
    %v3050 = vpow.pop %v3049
    %v3051 = vmul.f32 %v3044, 1.442695
    %v3052 = vpow.pop %v3051
    %v3053 = vmul.f32 %v3045, 1.442695
    %v3054 = vpow.pop %v3053
    %v3055 = vmul.f32 %v3046, 1.442695
    %v3056 = vpow.pop %v3055
    %v3057 = vmul.f32 %v3047, 1.442695
    %v3058 = vpow.pop %v3057
    %v3059 = vmul.f32 %v3048, 1.442695
    %v3060 = vpow.pop %v3059
    %v3061 = vadd.f32 %v3050, 1.0
    %v3062 = vadd.f32 %v3052, 1.0
    %v3063 = vadd.f32 %v3054, 1.0
    %v3064 = vadd.f32 %v3056, 1.0
    %v3065 = vadd.f32 %v3058, 1.0
    %v3066 = vadd.f32 %v3060, 1.0
    %v3067 = vrcp.pop %v3061
    %v3068 = vmul.f32 %v3061, %v3067
    %v3069 = vsub.f32 1.0, %v3068
    %v3070 = vmul.f32 %v3067, %v3069
    %v3071 = vadd.f32 %v3067, %v3070
    %vm3072 = vweird.f32 %v3061
    %vm3073 = vweird.f32 %v3067
    %vm3074 = vmor %vm3072, %vm3073
    %v3075 = vsel %vm3074, %v3067, %v3071
    %v3076 = vand.u32 2147483647, %v3061
    %vm3077 = vcmp.eq.f32.partialorder %v3076, 8.507059e+37
    %v3078 = vand.u32 %v3061, 2147483648
    %v3079 = vor.u32 1.1754944e-38, %v3078
    %v3080 = vsel %vm3077, %v3079, %v3075
    %v3081 = vmul.f32 1.0, %v3080
    %v3082 = vrcp.pop %v3062
    %v3083 = vmul.f32 %v3062, %v3082
    %v3084 = vsub.f32 1.0, %v3083
    %v3085 = vmul.f32 %v3082, %v3084
    %v3086 = vadd.f32 %v3082, %v3085
    %vm3087 = vweird.f32 %v3062
    %vm3088 = vweird.f32 %v3082
    %vm3089 = vmor %vm3087, %vm3088
    %v3090 = vsel %vm3089, %v3082, %v3086
    %v3091 = vand.u32 2147483647, %v3062
    %vm3092 = vcmp.eq.f32.partialorder %v3091, 8.507059e+37
    %v3093 = vand.u32 %v3062, 2147483648
    %v3094 = vor.u32 1.1754944e-38, %v3093
    %v3095 = vsel %vm3092, %v3094, %v3090
    %v3096 = vmul.f32 1.0, %v3095
    %v3097 = vrcp.pop %v3063
    %v3098 = vmul.f32 %v3063, %v3097
    %v3099 = vsub.f32 1.0, %v3098
    %v3100 = vmul.f32 %v3097, %v3099
    %v3101 = vadd.f32 %v3097, %v3100
    %vm3102 = vweird.f32 %v3063
    %vm3103 = vweird.f32 %v3097
    %vm3104 = vmor %vm3102, %vm3103
    %v3105 = vsel %vm3104, %v3097, %v3101
    %v3106 = vand.u32 2147483647, %v3063
    %vm3107 = vcmp.eq.f32.partialorder %v3106, 8.507059e+37
    %v3108 = vand.u32 %v3063, 2147483648
    %v3109 = vor.u32 1.1754944e-38, %v3108
    %v3110 = vsel %vm3107, %v3109, %v3105
    %v3111 = vmul.f32 1.0, %v3110
    %v3112 = vrcp.pop %v3064
    %v3113 = vmul.f32 %v3064, %v3112
    %v3114 = vsub.f32 1.0, %v3113
    %v3115 = vmul.f32 %v3112, %v3114
    %v3116 = vadd.f32 %v3112, %v3115
    %vm3117 = vweird.f32 %v3064
    %vm3118 = vweird.f32 %v3112
    %vm3119 = vmor %vm3117, %vm3118
    %v3120 = vsel %vm3119, %v3112, %v3116
    %v3121 = vand.u32 2147483647, %v3064
    %vm3122 = vcmp.eq.f32.partialorder %v3121, 8.507059e+37
    %v3123 = vand.u32 %v3064, 2147483648
    %v3124 = vor.u32 1.1754944e-38, %v3123
    %v3125 = vsel %vm3122, %v3124, %v3120
    %v3126 = vmul.f32 1.0, %v3125
    %v3127 = vrcp.pop %v3065
    %v3128 = vmul.f32 %v3065, %v3127
    %v3129 = vsub.f32 1.0, %v3128
    %v3130 = vmul.f32 %v3127, %v3129
    %v3131 = vadd.f32 %v3127, %v3130
    %vm3132 = vweird.f32 %v3065
    %vm3133 = vweird.f32 %v3127
    %vm3134 = vmor %vm3132, %vm3133
    %v3135 = vsel %vm3134, %v3127, %v3131
    %v3136 = vand.u32 2147483647, %v3065
    %vm3137 = vcmp.eq.f32.partialorder %v3136, 8.507059e+37
    %v3138 = vand.u32 %v3065, 2147483648
    %v3139 = vor.u32 1.1754944e-38, %v3138
    %v3140 = vsel %vm3137, %v3139, %v3135
    %v3141 = vmul.f32 1.0, %v3140
    %v3142 = vrcp.pop %v3066
    %v3143 = vmul.f32 %v3066, %v3142
    %v3144 = vsub.f32 1.0, %v3143
    %v3145 = vmul.f32 %v3142, %v3144
    %v3146 = vadd.f32 %v3142, %v3145
    %vm3147 = vweird.f32 %v3066
    %vm3148 = vweird.f32 %v3142
    %vm3149 = vmor %vm3147, %vm3148
    %v3150 = vsel %vm3149, %v3142, %v3146
    %v3151 = vand.u32 2147483647, %v3066
    %vm3152 = vcmp.eq.f32.partialorder %v3151, 8.507059e+37
    %v3153 = vand.u32 %v3066, 2147483648
    %v3154 = vor.u32 1.1754944e-38, %v3153
    %v3155 = vsel %vm3152, %v3154, %v3150
    %v3156 = vmul.f32 1.0, %v3155
    %v3157 = vmul.f32 %v3081, %v934
    %v3158 = vmul.f32 %v3096, %v935
    %v3159 = vmul.f32 %v3111, %v936
    %v3160 = vmul.f32 %v3126, %v937
    %v3161 = vmul.f32 %v3141, %v938
    %v3162 = vmul.f32 %v3156, %v939
    %v3163 = vsub.f32 1.0, %v3081
    %v3164 = vsub.f32 1.0, %v3096
    %v3165 = vsub.f32 1.0, %v3111
    %v3166 = vsub.f32 1.0, %v3126
    %v3167 = vsub.f32 1.0, %v3141
    %v3168 = vsub.f32 1.0, %v3156
    %v3169 = vmul.f32 %v3163, %v2971
    %v3170 = vmul.f32 %v3164, %v2972
    %v3171 = vmul.f32 %v3165, %v2973
    %v3172 = vmul.f32 %v3166, %v2974
    %v3173 = vmul.f32 %v3167, %v2975
    %v3174 = vmul.f32 %v3168, %v2976
    %v3175 = vadd.f32 %v3157, %v3169
    %v3176 = vadd.f32 %v3158, %v3170
    %v3177 = vadd.f32 %v3159, %v3171
    %v3178 = vadd.f32 %v3160, %v3172
    %v3179 = vadd.f32 %v3161, %v3173
    %v3180 = vadd.f32 %v3162, %v3174
    %v3181 = vpack.c.bf16 %v171, %v170
    %v3182 = vpack.c.bf16 %v173, %v172
    %v3183 = vpack.c.bf16 %v2929, %v2928
    %v3184 = vpack.c.bf16 %v2931, %v2930
    %v3186 = vsel %vm2630, %v3181, 0
    %v3189 = vsel %vm2630, %v3182, 0
    %3191 = vmatpush.bf16.msra.mxu0 0
    %3192 = vmatpush.bf16.msra.mxu0 0
    %3193 = vmatpush.bf16.msra.mxu0 0
    %3194 = vmatpush.bf16.msra.mxu0 0
    %3195 = vmatpush.bf16.msra.mxu0 0
    %3196 = vmatpush.bf16.msra.mxu0 0
    %3197 = vmatpush.bf16.msra.mxu0 %v3184
    %3198 = vmatpush.bf16.msra.mxu0 %v3183
    %3199 = vmatmul.bf16.gmra.mxu0 %v3186
    %v3200 = vpop.f32.mrf.mxu0
    %v3201 = vadd.f32 0.0, %v3200
    %v3202 = vpop.f32.mrf.mxu0
    %v3203 = vadd.f32 0.0, %v3202
    %3204 = vmatmul.bf16.gmra.mxu0 %v3189
    %v3205 = vpop.f32.mrf.mxu0
    %v3206 = vadd.f32 0.0, %v3205
    %v3207 = vpop.f32.mrf.mxu0
    %v3208 = vadd.f32 0.0, %v3207
    %3209 = vdwg.mxu0
    %v3210 = vld [vmem:[#allocation6] sm:$0xf]
    %v3211 = vld [vmem:[#allocation6 + $0x4] sm:$0xf]
    %v3212 = vld [vmem:[#allocation6 + $0x8] sm:$0xf]
    %v3213 = vld [vmem:[#allocation6 + $0xc] sm:$0xf]
    %v3214 = vld [vmem:[#allocation6 + $0x10] sm:$0xf]
    %v3215 = vld [vmem:[#allocation6 + $0x14] sm:$0xf]
    %v3216 = vld [vmem:[#allocation6 + $0x18] sm:$0xf]
    %v3217 = vld [vmem:[#allocation6 + $0x1c] sm:$0xf]
    %v3218 = vld [vmem:[#allocation6 + $0x20] sm:$0xf]
    %v3219 = vld [vmem:[#allocation6 + $0x24] sm:$0xf]
    %v3220 = vld [vmem:[#allocation6 + $0x28] sm:$0xf]
    %v3221 = vld [vmem:[#allocation6 + $0x2c] sm:$0xf]
    %v3222 = vld [vmem:[#allocation6 + $0x30] sm:$0xf]
    %v3223 = vld [vmem:[#allocation6 + $0x34] sm:$0xf]
    %v3224 = vld [vmem:[#allocation6 + $0x38] sm:$0xf]
    %v3225 = vld [vmem:[#allocation6 + $0x3c] sm:$0xf]
    %v3226 = vpack.c.bf16 %v3203, %v3201
    %v3227 = vpack.c.bf16 %v3176, %v3175
    %v3228 = vpack.c.bf16 %v3177, %v3177
    %v3229 = vld [vmem:[%s5] sm:$0x1]
    %v3230 = vperm.slane %v3229, 0
    %v3247 = vunpack.c.l.b16 %v3210
    %v3248 = vunpack.c.l.b16 %v3211
    %v3249 = vunpack.c.l.b16 %v3212
    %v3250 = vunpack.c.l.b16 %v3213
    %v3251 = vunpack.c.l.b16 %v3214
    %v3252 = vunpack.c.l.b16 %v3215
    %v3253 = vunpack.c.l.b16 %v3216
    %v3254 = vunpack.c.l.b16 %v3217
    %v3255 = vunpack.c.l.b16 %v3218
    %v3256 = vunpack.c.l.b16 %v3219
    %v3257 = vunpack.c.l.b16 %v3220
    %v3258 = vunpack.c.l.b16 %v3221
    %v3259 = vunpack.c.l.b16 %v3222
    %v3260 = vunpack.c.l.b16 %v3223
    %v3261 = vunpack.c.l.b16 %v3224
    %v3262 = vunpack.c.l.b16 %v3225
    %v3263 = vpack.c.b16 %v3248, %v3247
    %v3264 = vpack.c.b16 %v3250, %v3249
    %v3265 = vpack.c.b16 %v3252, %v3251
    %v3266 = vpack.c.b16 %v3254, %v3253
    %v3267 = vpack.c.b16 %v3256, %v3255
    %v3268 = vpack.c.b16 %v3258, %v3257
    %v3269 = vpack.c.b16 %v3260, %v3259
    %v3270 = vpack.c.b16 %v3262, %v3261
    %3279 = vmatpush.bf16.msra.mxu0 %v3270
    %3280 = vmatpush.bf16.msra.mxu0 %v3269
    %3281 = vmatpush.bf16.msra.mxu0 %v3268
    %3282 = vmatpush.bf16.msra.mxu0 %v3267
    %3283 = vmatpush.bf16.msra.mxu0 %v3266
    %3284 = vmatpush.bf16.msra.mxu0 %v3265
    %3285 = vmatpush.bf16.msra.mxu0 %v3264
    %3286 = vmatpush.bf16.msra.mxu0 %v3263
    %3287 = vmatmul.bf16.gmra.mxu0 %v3226
    %v3288 = vpop.f32.mrf.mxu0
    %v3289 = vadd.f32 %v3230, %v3288
    %v3290 = vpop.f32.mrf.mxu0
    %v3291 = vadd.f32 %v3230, %v3290
    %3292 = vmatmul.bf16.gmra.mxu0 %v3227
    %v3293 = vpop.f32.mrf.mxu0
    %v3294 = vadd.f32 %v3230, %v3293
    %v3295 = vpop.f32.mrf.mxu0
    %v3296 = vadd.f32 %v3230, %v3295
    %3297 = vmatmul.bf16.gmra.mxu0 %v3228
    %v3298 = vpop.f32.mrf.mxu0
    %v3299 = vadd.f32 %v3230, %v3298
    %v3300 = vpop.f32.mrf.mxu0
    %3301 = vdwg.mxu0
    %v3302 = vmax.f32 %v3289, 0.0
    %v3303 = vmax.f32 %v3291, 0.0
    %v3304 = vmax.f32 %v3294, 0.0
    %v3305 = vmax.f32 %v3296, 0.0
    %v3306 = vmax.f32 %v3299, 0.0
    %v3307 = vadd.f32 %v3302, %v3201
    %v3308 = vadd.f32 %v3303, %v3203
    %v3309 = vadd.f32 %v3304, %v3175
    %v3310 = vadd.f32 %v3305, %v3176
    %v3311 = vadd.f32 %v3306, %v3177
    %s3312 = scalar_lea.vmem [#allocation6], 64
    %v3313 = vld [vmem:[%s3312] sm:$0xf]
    %v3314 = vld [vmem:[%s3312 + $0x4] sm:$0xf]
    %v3315 = vld [vmem:[%s3312 + $0x8] sm:$0xf]
    %v3316 = vld [vmem:[%s3312 + $0xc] sm:$0xf]
    %v3317 = vld [vmem:[%s3312 + $0x10] sm:$0xf]
    %v3318 = vld [vmem:[%s3312 + $0x14] sm:$0xf]
    %v3319 = vld [vmem:[%s3312 + $0x18] sm:$0xf]
    %v3320 = vld [vmem:[%s3312 + $0x1c] sm:$0xf]
    %v3321 = vld [vmem:[%s3312 + $0x20] sm:$0xf]
    %v3322 = vld [vmem:[%s3312 + $0x24] sm:$0xf]
    %v3323 = vld [vmem:[%s3312 + $0x28] sm:$0xf]
    %v3324 = vld [vmem:[%s3312 + $0x2c] sm:$0xf]
    %v3325 = vld [vmem:[%s3312 + $0x30] sm:$0xf]
    %v3326 = vld [vmem:[%s3312 + $0x34] sm:$0xf]
    %v3327 = vld [vmem:[%s3312 + $0x38] sm:$0xf]
    %v3328 = vld [vmem:[%s3312 + $0x3c] sm:$0xf]
    %v3329 = vpack.c.bf16 %v3208, %v3206
    %v3330 = vpack.c.bf16 %v3179, %v3178
    %v3331 = vpack.c.bf16 %v3180, %v3180
    %v3332 = vld [vmem:[%s5 + $0x1] sm:$0x1]
    %v3333 = vperm.slane %v3332, 0
    %v3350 = vunpack.c.l.b16 %v3313
    %v3351 = vunpack.c.l.b16 %v3314
    %v3352 = vunpack.c.l.b16 %v3315
    %v3353 = vunpack.c.l.b16 %v3316
    %v3354 = vunpack.c.l.b16 %v3317
    %v3355 = vunpack.c.l.b16 %v3318
    %v3356 = vunpack.c.l.b16 %v3319
    %v3357 = vunpack.c.l.b16 %v3320
    %v3358 = vunpack.c.l.b16 %v3321
    %v3359 = vunpack.c.l.b16 %v3322
    %v3360 = vunpack.c.l.b16 %v3323
    %v3361 = vunpack.c.l.b16 %v3324
    %v3362 = vunpack.c.l.b16 %v3325
    %v3363 = vunpack.c.l.b16 %v3326
    %v3364 = vunpack.c.l.b16 %v3327
    %v3365 = vunpack.c.l.b16 %v3328
    %v3366 = vpack.c.b16 %v3351, %v3350
    %v3367 = vpack.c.b16 %v3353, %v3352
    %v3368 = vpack.c.b16 %v3355, %v3354
    %v3369 = vpack.c.b16 %v3357, %v3356
    %v3370 = vpack.c.b16 %v3359, %v3358
    %v3371 = vpack.c.b16 %v3361, %v3360
    %v3372 = vpack.c.b16 %v3363, %v3362
    %v3373 = vpack.c.b16 %v3365, %v3364
    %3382 = vmatpush.bf16.msra.mxu0 %v3373
    %3383 = vmatpush.bf16.msra.mxu0 %v3372
    %3384 = vmatpush.bf16.msra.mxu0 %v3371
    %3385 = vmatpush.bf16.msra.mxu0 %v3370
    %3386 = vmatpush.bf16.msra.mxu0 %v3369
    %3387 = vmatpush.bf16.msra.mxu0 %v3368
    %3388 = vmatpush.bf16.msra.mxu0 %v3367
    %3389 = vmatpush.bf16.msra.mxu0 %v3366
    %3390 = vmatmul.bf16.gmra.mxu0 %v3329
    %v3391 = vpop.f32.mrf.mxu0
    %v3392 = vadd.f32 %v3333, %v3391
    %v3393 = vpop.f32.mrf.mxu0
    %v3394 = vadd.f32 %v3333, %v3393
    %3395 = vmatmul.bf16.gmra.mxu0 %v3330
    %v3396 = vpop.f32.mrf.mxu0
    %v3397 = vadd.f32 %v3333, %v3396
    %v3398 = vpop.f32.mrf.mxu0
    %v3399 = vadd.f32 %v3333, %v3398
    %3400 = vmatmul.bf16.gmra.mxu0 %v3331
    %v3401 = vpop.f32.mrf.mxu0
    %v3402 = vadd.f32 %v3333, %v3401
    %v3403 = vpop.f32.mrf.mxu0
    %3404 = vdwg.mxu0
    %v3405 = vmax.f32 %v3392, 0.0
    %v3406 = vmax.f32 %v3394, 0.0
    %v3407 = vmax.f32 %v3397, 0.0
    %v3408 = vmax.f32 %v3399, 0.0
    %v3409 = vmax.f32 %v3402, 0.0
    %v3410 = vadd.f32 %v3405, %v3206
    %v3411 = vadd.f32 %v3406, %v3208
    %v3412 = vadd.f32 %v3407, %v3178
    %v3413 = vadd.f32 %v3408, %v3179
    %v3414 = vadd.f32 %v3409, %v3180
    %v3415 = vpack.c.bf16 %v1782, %v1781
    %3416 = vmatpush.bf16.msra.mxu0 0
    %3417 = vmatpush.bf16.msra.mxu0 0
    %3418 = vmatpush.bf16.msra.mxu0 0
    %3419 = vmatpush.bf16.msra.mxu0 0
    %3420 = vmatpush.bf16.msra.mxu0 0
    %3421 = vmatpush.bf16.msra.mxu0 0
    %3422 = vmatpush.bf16.msra.mxu0 0
    %3423 = vmatpush.bf16.msra.mxu0 %v3415
    %3424 = vmatmul.bf16.gmra.mxu0 %v211
    %v3425 = vpop.f32.mrf.mxu0
    %v3426 = vadd.f32 0.0, %v3425
    %v3427 = vpop.f32.mrf.mxu0
    %v3428 = vadd.f32 0.0, %v3427
    %3429 = vmatmul.bf16.gmra.mxu0 %v214
    %v3430 = vpop.f32.mrf.mxu0
    %v3431 = vadd.f32 0.0, %v3430
    %v3432 = vpop.f32.mrf.mxu0
    %v3433 = vadd.f32 0.0, %v3432
    %3434 = vmatmul.bf16.gmra.mxu0 %v217
    %v3435 = vpop.f32.mrf.mxu0
    %v3436 = vadd.f32 0.0, %v3435
    %v3437 = vpop.f32.mrf.mxu0
    %v3438 = vadd.f32 0.0, %v3437
    %3439 = vdwg.mxu0
    %v3440 = vpack.c.bf16 %v2625, %v2624
    %3441 = vmatpush.bf16.msra.mxu0 0
    %3442 = vmatpush.bf16.msra.mxu0 0
    %3443 = vmatpush.bf16.msra.mxu0 0
    %3444 = vmatpush.bf16.msra.mxu0 0
    %3445 = vmatpush.bf16.msra.mxu0 0
    %3446 = vmatpush.bf16.msra.mxu0 0
    %3447 = vmatpush.bf16.msra.mxu0 0
    %3448 = vmatpush.bf16.msra.mxu0 %v3440
    %3449 = vmatmul.bf16.gmra.mxu0 %v248
    %v3450 = vpop.f32.mrf.mxu0
    %v3451 = vadd.f32 0.0, %v3450
    %v3452 = vpop.f32.mrf.mxu0
    %v3453 = vadd.f32 0.0, %v3452
    %3454 = vmatmul.bf16.gmra.mxu0 %v251
    %v3455 = vpop.f32.mrf.mxu0
    %v3456 = vadd.f32 0.0, %v3455
    %v3457 = vpop.f32.mrf.mxu0
    %v3458 = vadd.f32 0.0, %v3457
    %3459 = vmatmul.bf16.gmra.mxu0 %v254
    %v3460 = vpop.f32.mrf.mxu0
    %v3461 = vadd.f32 0.0, %v3460
    %v3462 = vpop.f32.mrf.mxu0
    %v3463 = vadd.f32 0.0, %v3462
    %3464 = vdwg.mxu0
    %v3465 = vpack.c.bf16 %v3310, %v3309
    %v3466 = vpack.c.bf16 %v3412, %v3311
    %v3467 = vpack.c.bf16 %v3414, %v3413
    %3468 = vmatpush.bf16.msra.mxu0 0
    %3469 = vmatpush.bf16.msra.mxu0 0
    %3470 = vmatpush.bf16.msra.mxu0 0
    %3471 = vmatpush.bf16.msra.mxu0 0
    %3472 = vmatpush.bf16.msra.mxu0 0
    %3473 = vmatpush.bf16.msra.mxu0 %v3467
    %3474 = vmatpush.bf16.msra.mxu0 %v3466
    %3475 = vmatpush.bf16.msra.mxu0 %v3465
    %3476 = vmatmul.bf16.gmra.mxu0 %v288
    %v3477 = vpop.f32.mrf.mxu0
    %v3478 = vadd.f32 0.0, %v3477
    %v3479 = vpop.f32.mrf.mxu0
    %v3480 = vadd.f32 0.0, %v3479
    %3481 = vmatmul.bf16.gmra.mxu0 %v291
    %v3482 = vpop.f32.mrf.mxu0
    %v3483 = vadd.f32 0.0, %v3482
    %v3484 = vpop.f32.mrf.mxu0
    %v3485 = vadd.f32 0.0, %v3484
    %3486 = vmatmul.bf16.gmra.mxu0 %v294
    %v3487 = vpop.f32.mrf.mxu0
    %v3488 = vadd.f32 0.0, %v3487
    %v3489 = vpop.f32.mrf.mxu0
    %v3490 = vadd.f32 0.0, %v3489
    %3491 = vdwg.mxu0
    %v3492 = vpack.c.bf16 %v3428, %v3426
    %v3493 = vpack.c.bf16 %v3453, %v3451
    %v3494 = vpack.c.bf16 %v3433, %v3431
    %v3495 = vpack.c.bf16 %v3458, %v3456
    %v3496 = vpack.c.bf16 %v3438, %v3436
    %v3497 = vpack.c.bf16 %v3463, %v3461
    %3498 = vmatpush.bf16.msra.mxu0 %v479
    %3499 = vmatpush.bf16.msra.mxu0 %v478
    %3500 = vmatpush.bf16.msra.mxu0 %v477
    %3501 = vmatpush.bf16.msra.mxu0 %v476
    %3502 = vmatpush.bf16.msra.mxu0 %v475
    %3503 = vmatpush.bf16.msra.mxu0 %v474
    %3504 = vmatpush.bf16.msra.mxu0 %v473
    %3505 = vmatpush.bf16.msra.mxu0 %v472
    %3506 = vmatmul.bf16.gmra.mxu0 %v3465
    %v3507 = vpop.f32.mrf.mxu0
    %v3508 = vadd.f32 %v375, %v3507
    %v3509 = vpop.f32.mrf.mxu0
    %v3510 = vadd.f32 %v375, %v3509
    %3511 = vmatmul.bf16.gmra.mxu0 %v3466
    %v3512 = vpop.f32.mrf.mxu0
    %v3513 = vadd.f32 %v375, %v3512
    %v3514 = vpop.f32.mrf.mxu0
    %v3515 = vadd.f32 %v375, %v3514
    %3516 = vmatmul.bf16.gmra.mxu0 %v3467
    %v3517 = vpop.f32.mrf.mxu0
    %v3518 = vadd.f32 %v375, %v3517
    %v3519 = vpop.f32.mrf.mxu0
    %v3520 = vadd.f32 %v375, %v3519
    %3521 = vdwg.mxu0
    %3522 = vmatpush.bf16.msra.mxu0 %v487
    %3523 = vmatpush.bf16.msra.mxu0 %v486
    %3524 = vmatpush.bf16.msra.mxu0 %v485
    %3525 = vmatpush.bf16.msra.mxu0 %v484
    %3526 = vmatpush.bf16.msra.mxu0 %v483
    %3527 = vmatpush.bf16.msra.mxu0 %v482
    %3528 = vmatpush.bf16.msra.mxu0 %v481
    %3529 = vmatpush.bf16.msra.mxu0 %v480
    %3530 = vmatmul.bf16.gmra.mxu0 %v3492
    %v3531 = vpop.f32.mrf.mxu0
    %v3532 = vadd.f32 %v3508, %v3531
    %v3533 = vpop.f32.mrf.mxu0
    %v3534 = vadd.f32 %v3510, %v3533
    %3535 = vmatmul.bf16.gmra.mxu0 %v3494
    %v3536 = vpop.f32.mrf.mxu0
    %v3537 = vadd.f32 %v3513, %v3536
    %v3538 = vpop.f32.mrf.mxu0
    %v3539 = vadd.f32 %v3515, %v3538
    %3540 = vmatmul.bf16.gmra.mxu0 %v3496
    %v3541 = vpop.f32.mrf.mxu0
    %v3542 = vadd.f32 %v3518, %v3541
    %v3543 = vpop.f32.mrf.mxu0
    %v3544 = vadd.f32 %v3520, %v3543
    %3545 = vdwg.mxu0
    %3546 = vmatpush.bf16.msra.mxu0 %v495
    %3547 = vmatpush.bf16.msra.mxu0 %v494
    %3548 = vmatpush.bf16.msra.mxu0 %v493
    %3549 = vmatpush.bf16.msra.mxu0 %v492
    %3550 = vmatpush.bf16.msra.mxu0 %v491
    %3551 = vmatpush.bf16.msra.mxu0 %v490
    %3552 = vmatpush.bf16.msra.mxu0 %v489
    %3553 = vmatpush.bf16.msra.mxu0 %v488
    %3554 = vmatmul.bf16.gmra.mxu0 %v3493
    %v3555 = vpop.f32.mrf.mxu0
    %v3556 = vadd.f32 %v3532, %v3555
    %v3557 = vpop.f32.mrf.mxu0
    %v3558 = vadd.f32 %v3534, %v3557
    %3559 = vmatmul.bf16.gmra.mxu0 %v3495
    %v3560 = vpop.f32.mrf.mxu0
    %v3561 = vadd.f32 %v3537, %v3560
    %v3562 = vpop.f32.mrf.mxu0
    %v3563 = vadd.f32 %v3539, %v3562
    %3564 = vmatmul.bf16.gmra.mxu0 %v3497
    %v3565 = vpop.f32.mrf.mxu0
    %v3566 = vadd.f32 %v3542, %v3565
    %v3567 = vpop.f32.mrf.mxu0
    %v3568 = vadd.f32 %v3544, %v3567
    %3569 = vdwg.mxu0
    %3570 = vmatpush.bf16.msra.mxu0 %v740
    %3571 = vmatpush.bf16.msra.mxu0 %v738
    %3572 = vmatpush.bf16.msra.mxu0 %v736
    %3573 = vmatpush.bf16.msra.mxu0 %v734
    %3574 = vmatpush.bf16.msra.mxu0 %v732
    %3575 = vmatpush.bf16.msra.mxu0 %v730
    %3576 = vmatpush.bf16.msra.mxu0 %v728
    %3577 = vmatpush.bf16.msra.mxu0 %v726
    %3578 = vmatmul.bf16.gmra.mxu0 %v3492
    %v3579 = vpop.f32.mrf.mxu0
    %v3580 = vadd.f32 %v626, %v3579
    %v3581 = vpop.f32.mrf.mxu0
    %v3582 = vadd.f32 %v626, %v3581
    %3583 = vmatmul.bf16.gmra.mxu0 %v3494
    %v3584 = vpop.f32.mrf.mxu0
    %v3585 = vadd.f32 %v626, %v3584
    %v3586 = vpop.f32.mrf.mxu0
    %v3587 = vadd.f32 %v626, %v3586
    %3588 = vmatmul.bf16.gmra.mxu0 %v3496
    %v3589 = vpop.f32.mrf.mxu0
    %v3590 = vadd.f32 %v626, %v3589
    %v3591 = vpop.f32.mrf.mxu0
    %v3592 = vadd.f32 %v626, %v3591
    %3593 = vdwg.mxu0
    %3594 = vmatpush.bf16.msra.mxu0 %v756
    %3595 = vmatpush.bf16.msra.mxu0 %v754
    %3596 = vmatpush.bf16.msra.mxu0 %v752
    %3597 = vmatpush.bf16.msra.mxu0 %v750
    %3598 = vmatpush.bf16.msra.mxu0 %v748
    %3599 = vmatpush.bf16.msra.mxu0 %v746
    %3600 = vmatpush.bf16.msra.mxu0 %v744
    %3601 = vmatpush.bf16.msra.mxu0 %v742
    %3602 = vmatmul.bf16.gmra.mxu0 %v3493
    %v3603 = vpop.f32.mrf.mxu0
    %v3604 = vadd.f32 %v3580, %v3603
    %v3605 = vpop.f32.mrf.mxu0
    %v3606 = vadd.f32 %v3582, %v3605
    %3607 = vmatmul.bf16.gmra.mxu0 %v3495
    %v3608 = vpop.f32.mrf.mxu0
    %v3609 = vadd.f32 %v3585, %v3608
    %v3610 = vpop.f32.mrf.mxu0
    %v3611 = vadd.f32 %v3587, %v3610
    %3612 = vmatmul.bf16.gmra.mxu0 %v3497
    %v3613 = vpop.f32.mrf.mxu0
    %v3614 = vadd.f32 %v3590, %v3613
    %v3615 = vpop.f32.mrf.mxu0
    %v3616 = vadd.f32 %v3592, %v3615
    %3617 = vdwg.mxu0
    %3618 = vmatpush.bf16.msra.mxu0 %v741
    %3619 = vmatpush.bf16.msra.mxu0 %v739
    %3620 = vmatpush.bf16.msra.mxu0 %v737
    %3621 = vmatpush.bf16.msra.mxu0 %v735
    %3622 = vmatpush.bf16.msra.mxu0 %v733
    %3623 = vmatpush.bf16.msra.mxu0 %v731
    %3624 = vmatpush.bf16.msra.mxu0 %v729
    %3625 = vmatpush.bf16.msra.mxu0 %v727
    %3626 = vmatmul.bf16.gmra.mxu0 %v3492
    %v3627 = vpop.f32.mrf.mxu0
    %v3628 = vadd.f32 %v627, %v3627
    %v3629 = vpop.f32.mrf.mxu0
    %v3630 = vadd.f32 %v627, %v3629
    %3631 = vmatmul.bf16.gmra.mxu0 %v3494
    %v3632 = vpop.f32.mrf.mxu0
    %v3633 = vadd.f32 %v627, %v3632
    %v3634 = vpop.f32.mrf.mxu0
    %v3635 = vadd.f32 %v627, %v3634
    %3636 = vmatmul.bf16.gmra.mxu0 %v3496
    %v3637 = vpop.f32.mrf.mxu0
    %v3638 = vadd.f32 %v627, %v3637
    %v3639 = vpop.f32.mrf.mxu0
    %v3640 = vadd.f32 %v627, %v3639
    %3641 = vdwg.mxu0
    %3642 = vmatpush.bf16.msra.mxu0 %v757
    %3643 = vmatpush.bf16.msra.mxu0 %v755
    %3644 = vmatpush.bf16.msra.mxu0 %v753
    %3645 = vmatpush.bf16.msra.mxu0 %v751
    %3646 = vmatpush.bf16.msra.mxu0 %v749
    %3647 = vmatpush.bf16.msra.mxu0 %v747
    %3648 = vmatpush.bf16.msra.mxu0 %v745
    %3649 = vmatpush.bf16.msra.mxu0 %v743
    %3650 = vmatmul.bf16.gmra.mxu0 %v3493
    %v3651 = vpop.f32.mrf.mxu0
    %v3652 = vadd.f32 %v3628, %v3651
    %v3653 = vpop.f32.mrf.mxu0
    %v3654 = vadd.f32 %v3630, %v3653
    %3655 = vmatmul.bf16.gmra.mxu0 %v3495
    %v3656 = vpop.f32.mrf.mxu0
    %v3657 = vadd.f32 %v3633, %v3656
    %v3658 = vpop.f32.mrf.mxu0
    %v3659 = vadd.f32 %v3635, %v3658
    %3660 = vmatmul.bf16.gmra.mxu0 %v3497
    %v3661 = vpop.f32.mrf.mxu0
    %v3662 = vadd.f32 %v3638, %v3661
    %v3663 = vpop.f32.mrf.mxu0
    %v3664 = vadd.f32 %v3640, %v3663
    %3665 = vdwg.mxu0
    %v3666 = vadd.f32 %v3556, %v3604
    %v3667 = vadd.f32 %v3558, %v3606
    %v3668 = vadd.f32 %v3561, %v3609
    %v3669 = vadd.f32 %v3563, %v3611
    %v3670 = vadd.f32 %v3566, %v3614
    %v3671 = vadd.f32 %v3568, %v3616
    %v3672 = vtanh.pop %v3666
    %v3673 = vtanh.pop %v3667
    %v3674 = vtanh.pop %v3668
    %v3675 = vtanh.pop %v3669
    %v3676 = vtanh.pop %v3670
    %v3677 = vtanh.pop %v3671
    %v3678 = vadd.f32 %v3556, %v3652
    %v3679 = vadd.f32 %v3558, %v3654
    %v3680 = vadd.f32 %v3561, %v3657
    %v3681 = vadd.f32 %v3563, %v3659
    %v3682 = vadd.f32 %v3566, %v3662
    %v3683 = vadd.f32 %v3568, %v3664
    %v3684 = vtanh.pop %v3678
    %v3685 = vtanh.pop %v3679
    %v3686 = vtanh.pop %v3680
    %v3687 = vtanh.pop %v3681
    %v3688 = vtanh.pop %v3682
    %v3689 = vtanh.pop %v3683
    %v3690 = vmul.f32 %v3672, %v3426
    %v3691 = vmul.f32 %v3673, %v3428
    %v3692 = vmul.f32 %v3674, %v3431
    %v3693 = vmul.f32 %v3675, %v3433
    %v3694 = vmul.f32 %v3676, %v3436
    %v3695 = vmul.f32 %v3677, %v3438
    %v3696 = vadd.f32 %v3309, %v3690
    %v3697 = vadd.f32 %v3310, %v3691
    %v3698 = vadd.f32 %v3311, %v3692
    %v3699 = vadd.f32 %v3412, %v3693
    %v3700 = vadd.f32 %v3413, %v3694
    %v3701 = vadd.f32 %v3414, %v3695
    %v3702 = vmul.f32 %v3684, %v3451
    %v3703 = vmul.f32 %v3685, %v3453
    %v3704 = vmul.f32 %v3686, %v3456
    %v3705 = vmul.f32 %v3687, %v3458
    %v3706 = vmul.f32 %v3688, %v3461
    %v3707 = vmul.f32 %v3689, %v3463
    %v3708 = vadd.f32 %v3696, %v3702
    %v3709 = vadd.f32 %v3697, %v3703
    %v3710 = vadd.f32 %v3698, %v3704
    %v3711 = vadd.f32 %v3699, %v3705
    %v3712 = vadd.f32 %v3700, %v3706
    %v3713 = vadd.f32 %v3701, %v3707
    %v3714 = vadd.f32 %v3708, %v3478
    %v3715 = vadd.f32 %v3709, %v3480
    %v3716 = vadd.f32 %v3710, %v3483
    %v3717 = vadd.f32 %v3711, %v3485
    %v3718 = vadd.f32 %v3712, %v3488
    %v3719 = vadd.f32 %v3713, %v3490
    %v3720 = vpack.c.bf16 %v3308, %v3307
    %v3721 = vpack.c.bf16 %v3411, %v3410
    %3722 = vmatpush.bf16.msra.mxu0 0
    %3723 = vmatpush.bf16.msra.mxu0 0
    %3724 = vmatpush.bf16.msra.mxu0 0
    %3725 = vmatpush.bf16.msra.mxu0 0
    %3726 = vmatpush.bf16.msra.mxu0 0
    %3727 = vmatpush.bf16.msra.mxu0 0
    %3728 = vmatpush.bf16.msra.mxu0 %v3721
    %3729 = vmatpush.bf16.msra.mxu0 %v3720
    %3730 = vmatmul.bf16.gmra.mxu0 %v2632
    %v3731 = vpop.f32.mrf.mxu0
    %v3732 = vadd.f32 0.0, %v3731
    %v3733 = vpop.f32.mrf.mxu0
    %v3734 = vadd.f32 0.0, %v3733
    %3735 = vmatmul.bf16.gmra.mxu0 %v2635
    %v3736 = vpop.f32.mrf.mxu0
    %v3737 = vadd.f32 0.0, %v3736
    %v3738 = vpop.f32.mrf.mxu0
    %v3739 = vadd.f32 0.0, %v3738
    %3740 = vdwg.mxu0
    %v3741 = vmax.f32 %v3732, 0.0
    %v3742 = vmax.f32 %v3734, 0.0
    %v3743 = vmax.f32 %v3737, 0.0
    %v3744 = vmax.f32 %v3739, 0.0
    %v3745 = vsel %vm193, %v3307, %v3741
    %v3746 = vsel %vm194, %v3308, %v3742
    %v3747 = vsel %vm195, %v3410, %v3743
    %v3748 = vsel %vm196, %v3411, %v3744
    %v3749 = vsel %vm193, %v3741, %v3307
    %v3750 = vsel %vm194, %v3742, %v3308
    %v3751 = vsel %vm195, %v3743, %v3410
    %v3752 = vsel %vm196, %v3744, %v3411
    %v3753 = vpack.c.bf16 %v3746, %v3745
    %v3754 = vpack.c.bf16 %v3750, %v3749
    %v3755 = vpack.c.bf16 %v3748, %v3747
    %v3756 = vpack.c.bf16 %v3752, %v3751
    %3757 = vmatpush.bf16.msra.mxu0 %v2777
    %3758 = vmatpush.bf16.msra.mxu0 %v2776
    %3759 = vmatpush.bf16.msra.mxu0 %v2775
    %3760 = vmatpush.bf16.msra.mxu0 %v2774
    %3761 = vmatpush.bf16.msra.mxu0 %v2773
    %3762 = vmatpush.bf16.msra.mxu0 %v2772
    %3763 = vmatpush.bf16.msra.mxu0 %v2771
    %3764 = vmatpush.bf16.msra.mxu0 %v2770
    %3765 = vmatmul.bf16.gmra.mxu0 %v3753
    %v3766 = vpop.f32.mrf.mxu0
    %v3767 = vadd.f32 %v2705, %v3766
    %v3768 = vpop.f32.mrf.mxu0
    %v3769 = vadd.f32 %v2705, %v3768
    %3770 = vmatmul.bf16.gmra.mxu0 %v3755
    %v3771 = vpop.f32.mrf.mxu0
    %v3772 = vadd.f32 %v2705, %v3771
    %v3773 = vpop.f32.mrf.mxu0
    %v3774 = vadd.f32 %v2705, %v3773
    %3775 = vdwg.mxu0
    %3776 = vmatpush.bf16.msra.mxu0 %v2785
    %3777 = vmatpush.bf16.msra.mxu0 %v2784
    %3778 = vmatpush.bf16.msra.mxu0 %v2783
    %3779 = vmatpush.bf16.msra.mxu0 %v2782
    %3780 = vmatpush.bf16.msra.mxu0 %v2781
    %3781 = vmatpush.bf16.msra.mxu0 %v2780
    %3782 = vmatpush.bf16.msra.mxu0 %v2779
    %3783 = vmatpush.bf16.msra.mxu0 %v2778
    %3784 = vmatmul.bf16.gmra.mxu0 %v3754
    %v3785 = vpop.f32.mrf.mxu0
    %v3786 = vadd.f32 %v3767, %v3785
    %v3787 = vpop.f32.mrf.mxu0
    %v3788 = vadd.f32 %v3769, %v3787
    %3789 = vmatmul.bf16.gmra.mxu0 %v3756
    %v3790 = vpop.f32.mrf.mxu0
    %v3791 = vadd.f32 %v3772, %v3790
    %v3792 = vpop.f32.mrf.mxu0
    %v3793 = vadd.f32 %v3774, %v3792
    %3794 = vdwg.mxu0
    %v3795 = vxor.u32 %v3786, 2147483648
    %v3796 = vxor.u32 %v3788, 2147483648
    %v3797 = vxor.u32 %v3791, 2147483648
    %v3798 = vxor.u32 %v3793, 2147483648
    %v3799 = vmul.f32 %v3795, 1.442695
    %v3800 = vpow.pop %v3799
    %v3801 = vmul.f32 %v3796, 1.442695
    %v3802 = vpow.pop %v3801
    %v3803 = vmul.f32 %v3797, 1.442695
    %v3804 = vpow.pop %v3803
    %v3805 = vmul.f32 %v3798, 1.442695
    %v3806 = vpow.pop %v3805
    %v3807 = vadd.f32 %v3800, 1.0
    %v3808 = vadd.f32 %v3802, 1.0
    %v3809 = vadd.f32 %v3804, 1.0
    %v3810 = vadd.f32 %v3806, 1.0
    %v3811 = vrcp.pop %v3807
    %v3812 = vmul.f32 %v3807, %v3811
    %v3813 = vsub.f32 1.0, %v3812
    %v3814 = vmul.f32 %v3811, %v3813
    %v3815 = vadd.f32 %v3811, %v3814
    %vm3816 = vweird.f32 %v3807
    %vm3817 = vweird.f32 %v3811
    %vm3818 = vmor %vm3816, %vm3817
    %v3819 = vsel %vm3818, %v3811, %v3815
    %v3820 = vand.u32 2147483647, %v3807
    %vm3821 = vcmp.eq.f32.partialorder %v3820, 8.507059e+37
    %v3822 = vand.u32 %v3807, 2147483648
    %v3823 = vor.u32 1.1754944e-38, %v3822
    %v3824 = vsel %vm3821, %v3823, %v3819
    %v3825 = vmul.f32 1.0, %v3824
    %v3826 = vrcp.pop %v3808
    %v3827 = vmul.f32 %v3808, %v3826
    %v3828 = vsub.f32 1.0, %v3827
    %v3829 = vmul.f32 %v3826, %v3828
    %v3830 = vadd.f32 %v3826, %v3829
    %vm3831 = vweird.f32 %v3808
    %vm3832 = vweird.f32 %v3826
    %vm3833 = vmor %vm3831, %vm3832
    %v3834 = vsel %vm3833, %v3826, %v3830
    %v3835 = vand.u32 2147483647, %v3808
    %vm3836 = vcmp.eq.f32.partialorder %v3835, 8.507059e+37
    %v3837 = vand.u32 %v3808, 2147483648
    %v3838 = vor.u32 1.1754944e-38, %v3837
    %v3839 = vsel %vm3836, %v3838, %v3834
    %v3840 = vmul.f32 1.0, %v3839
    %v3841 = vrcp.pop %v3809
    %v3842 = vmul.f32 %v3809, %v3841
    %v3843 = vsub.f32 1.0, %v3842
    %v3844 = vmul.f32 %v3841, %v3843
    %v3845 = vadd.f32 %v3841, %v3844
    %vm3846 = vweird.f32 %v3809
    %vm3847 = vweird.f32 %v3841
    %vm3848 = vmor %vm3846, %vm3847
    %v3849 = vsel %vm3848, %v3841, %v3845
    %v3850 = vand.u32 2147483647, %v3809
    %vm3851 = vcmp.eq.f32.partialorder %v3850, 8.507059e+37
    %v3852 = vand.u32 %v3809, 2147483648
    %v3853 = vor.u32 1.1754944e-38, %v3852
    %v3854 = vsel %vm3851, %v3853, %v3849
    %v3855 = vmul.f32 1.0, %v3854
    %v3856 = vrcp.pop %v3810
    %v3857 = vmul.f32 %v3810, %v3856
    %v3858 = vsub.f32 1.0, %v3857
    %v3859 = vmul.f32 %v3856, %v3858
    %v3860 = vadd.f32 %v3856, %v3859
    %vm3861 = vweird.f32 %v3810
    %vm3862 = vweird.f32 %v3856
    %vm3863 = vmor %vm3861, %vm3862
    %v3864 = vsel %vm3863, %v3856, %v3860
    %v3865 = vand.u32 2147483647, %v3810
    %vm3866 = vcmp.eq.f32.partialorder %v3865, 8.507059e+37
    %v3867 = vand.u32 %v3810, 2147483648
    %v3868 = vor.u32 1.1754944e-38, %v3867
    %v3869 = vsel %vm3866, %v3868, %v3864
    %v3870 = vmul.f32 1.0, %v3869
    %v3871 = vmul.f32 %v3825, %v3307
    %v3872 = vmul.f32 %v3840, %v3308
    %v3873 = vmul.f32 %v3855, %v3410
    %v3874 = vmul.f32 %v3870, %v3411
    %v3875 = vsub.f32 1.0, %v3825
    %v3876 = vsub.f32 1.0, %v3840
    %v3877 = vsub.f32 1.0, %v3855
    %v3878 = vsub.f32 1.0, %v3870
    %v3879 = vmul.f32 %v3875, %v3741
    %v3880 = vmul.f32 %v3876, %v3742
    %v3881 = vmul.f32 %v3877, %v3743
    %v3882 = vmul.f32 %v3878, %v3744
    %v3883 = vadd.f32 %v3871, %v3879
    %v3884 = vadd.f32 %v3872, %v3880
    %v3885 = vadd.f32 %v3873, %v3881
    %v3886 = vadd.f32 %v3874, %v3882
    %v3887 = vpack.c.bf16 %v3715, %v3714
    %v3888 = vpack.c.bf16 %v3717, %v3716
    %v3889 = vpack.c.bf16 %v3719, %v3718
    %3890 = vmatpush.bf16.msra.mxu0 0
    %3891 = vmatpush.bf16.msra.mxu0 0
    %3892 = vmatpush.bf16.msra.mxu0 0
    %3893 = vmatpush.bf16.msra.mxu0 0
    %3894 = vmatpush.bf16.msra.mxu0 0
    %3895 = vmatpush.bf16.msra.mxu0 %v3889
    %3896 = vmatpush.bf16.msra.mxu0 %v3888
    %3897 = vmatpush.bf16.msra.mxu0 %v3887
    %3898 = vmatmul.bf16.gmra.mxu0 %v2939
    %v3899 = vpop.f32.mrf.mxu0
    %v3900 = vadd.f32 0.0, %v3899
    %v3901 = vpop.f32.mrf.mxu0
    %v3902 = vadd.f32 0.0, %v3901
    %3903 = vmatmul.bf16.gmra.mxu0 %v2942
    %v3904 = vpop.f32.mrf.mxu0
    %v3905 = vadd.f32 0.0, %v3904
    %v3906 = vpop.f32.mrf.mxu0
    %v3907 = vadd.f32 0.0, %v3906
    %3908 = vmatmul.bf16.gmra.mxu0 %v2945
    %v3909 = vpop.f32.mrf.mxu0
    %v3910 = vadd.f32 0.0, %v3909
    %v3911 = vpop.f32.mrf.mxu0
    %v3912 = vadd.f32 0.0, %v3911
    %3913 = vdwg.mxu0
    %v3914 = vmax.f32 %v3900, 0.0
    %v3915 = vmax.f32 %v3902, 0.0
    %v3916 = vmax.f32 %v3905, 0.0
    %v3917 = vmax.f32 %v3907, 0.0
    %v3918 = vmax.f32 %v3910, 0.0
    %v3919 = vmax.f32 %v3912, 0.0
    %v3920 = vsel %vm199, %v3714, %v3914
    %v3921 = vsel %vm200, %v3715, %v3915
    %v3922 = vsel %vm201, %v3716, %v3916
    %v3923 = vsel %vm202, %v3717, %v3917
    %v3924 = vsel %vm203, %v3718, %v3918
    %v3925 = vsel %vm204, %v3719, %v3919
    %v3926 = vsel %vm199, %v3914, %v3714
    %v3927 = vsel %vm200, %v3915, %v3715
    %v3928 = vsel %vm201, %v3916, %v3716
    %v3929 = vsel %vm202, %v3917, %v3717
    %v3930 = vsel %vm203, %v3918, %v3718
    %v3931 = vsel %vm204, %v3919, %v3719
    %v3932 = vpack.c.bf16 %v3921, %v3920
    %v3933 = vpack.c.bf16 %v3927, %v3926
    %v3934 = vpack.c.bf16 %v3923, %v3922
    %v3935 = vpack.c.bf16 %v3929, %v3928
    %v3936 = vpack.c.bf16 %v3925, %v3924
    %v3937 = vpack.c.bf16 %v3931, %v3930
    %3938 = vmatpush.bf16.msra.mxu0 %v2777
    %3939 = vmatpush.bf16.msra.mxu0 %v2776
    %3940 = vmatpush.bf16.msra.mxu0 %v2775
    %3941 = vmatpush.bf16.msra.mxu0 %v2774
    %3942 = vmatpush.bf16.msra.mxu0 %v2773
    %3943 = vmatpush.bf16.msra.mxu0 %v2772
    %3944 = vmatpush.bf16.msra.mxu0 %v2771
    %3945 = vmatpush.bf16.msra.mxu0 %v2770
    %3946 = vmatmul.bf16.gmra.mxu0 %v3932
    %v3947 = vpop.f32.mrf.mxu0
    %v3948 = vadd.f32 %v2705, %v3947
    %v3949 = vpop.f32.mrf.mxu0
    %v3950 = vadd.f32 %v2705, %v3949
    %3951 = vmatmul.bf16.gmra.mxu0 %v3934
    %v3952 = vpop.f32.mrf.mxu0
    %v3953 = vadd.f32 %v2705, %v3952
    %v3954 = vpop.f32.mrf.mxu0
    %v3955 = vadd.f32 %v2705, %v3954
    %3956 = vmatmul.bf16.gmra.mxu0 %v3936
    %v3957 = vpop.f32.mrf.mxu0
    %v3958 = vadd.f32 %v2705, %v3957
    %v3959 = vpop.f32.mrf.mxu0
    %v3960 = vadd.f32 %v2705, %v3959
    %3961 = vdwg.mxu0
    %3962 = vmatpush.bf16.msra.mxu0 %v2785
    %3963 = vmatpush.bf16.msra.mxu0 %v2784
    %3964 = vmatpush.bf16.msra.mxu0 %v2783
    %3965 = vmatpush.bf16.msra.mxu0 %v2782
    %3966 = vmatpush.bf16.msra.mxu0 %v2781
    %3967 = vmatpush.bf16.msra.mxu0 %v2780
    %3968 = vmatpush.bf16.msra.mxu0 %v2779
    %3969 = vmatpush.bf16.msra.mxu0 %v2778
    %3970 = vmatmul.bf16.gmra.mxu0 %v3933
    %v3971 = vpop.f32.mrf.mxu0
    %v3972 = vadd.f32 %v3948, %v3971
    %v3973 = vpop.f32.mrf.mxu0
    %v3974 = vadd.f32 %v3950, %v3973
    %3975 = vmatmul.bf16.gmra.mxu0 %v3935
    %v3976 = vpop.f32.mrf.mxu0
    %v3977 = vadd.f32 %v3953, %v3976
    %v3978 = vpop.f32.mrf.mxu0
    %v3979 = vadd.f32 %v3955, %v3978
    %3980 = vmatmul.bf16.gmra.mxu0 %v3937
    %v3981 = vpop.f32.mrf.mxu0
    %v3982 = vadd.f32 %v3958, %v3981
    %v3983 = vpop.f32.mrf.mxu0
    %v3984 = vadd.f32 %v3960, %v3983
    %3985 = vdwg.mxu0
    %v3986 = vxor.u32 %v3972, 2147483648
    %v3987 = vxor.u32 %v3974, 2147483648
    %v3988 = vxor.u32 %v3977, 2147483648
    %v3989 = vxor.u32 %v3979, 2147483648
    %v3990 = vxor.u32 %v3982, 2147483648
    %v3991 = vxor.u32 %v3984, 2147483648
    %v3992 = vmul.f32 %v3986, 1.442695
    %v3993 = vpow.pop %v3992
    %v3994 = vmul.f32 %v3987, 1.442695
    %v3995 = vpow.pop %v3994
    %v3996 = vmul.f32 %v3988, 1.442695
    %v3997 = vpow.pop %v3996
    %v3998 = vmul.f32 %v3989, 1.442695
    %v3999 = vpow.pop %v3998
    %v4000 = vmul.f32 %v3990, 1.442695
    %v4001 = vpow.pop %v4000
    %v4002 = vmul.f32 %v3991, 1.442695
    %v4003 = vpow.pop %v4002
    %v4004 = vadd.f32 %v3993, 1.0
    %v4005 = vadd.f32 %v3995, 1.0
    %v4006 = vadd.f32 %v3997, 1.0
    %v4007 = vadd.f32 %v3999, 1.0
    %v4008 = vadd.f32 %v4001, 1.0
    %v4009 = vadd.f32 %v4003, 1.0
    %v4010 = vrcp.pop %v4004
    %v4011 = vmul.f32 %v4004, %v4010
    %v4012 = vsub.f32 1.0, %v4011
    %v4013 = vmul.f32 %v4010, %v4012
    %v4014 = vadd.f32 %v4010, %v4013
    %vm4015 = vweird.f32 %v4004
    %vm4016 = vweird.f32 %v4010
    %vm4017 = vmor %vm4015, %vm4016
    %v4018 = vsel %vm4017, %v4010, %v4014
    %v4019 = vand.u32 2147483647, %v4004
    %vm4020 = vcmp.eq.f32.partialorder %v4019, 8.507059e+37
    %v4021 = vand.u32 %v4004, 2147483648
    %v4022 = vor.u32 1.1754944e-38, %v4021
    %v4023 = vsel %vm4020, %v4022, %v4018
    %v4024 = vmul.f32 1.0, %v4023
    %v4025 = vrcp.pop %v4005
    %v4026 = vmul.f32 %v4005, %v4025
    %v4027 = vsub.f32 1.0, %v4026
    %v4028 = vmul.f32 %v4025, %v4027
    %v4029 = vadd.f32 %v4025, %v4028
    %vm4030 = vweird.f32 %v4005
    %vm4031 = vweird.f32 %v4025
    %vm4032 = vmor %vm4030, %vm4031
    %v4033 = vsel %vm4032, %v4025, %v4029
    %v4034 = vand.u32 2147483647, %v4005
    %vm4035 = vcmp.eq.f32.partialorder %v4034, 8.507059e+37
    %v4036 = vand.u32 %v4005, 2147483648
    %v4037 = vor.u32 1.1754944e-38, %v4036
    %v4038 = vsel %vm4035, %v4037, %v4033
    %v4039 = vmul.f32 1.0, %v4038
    %v4040 = vrcp.pop %v4006
    %v4041 = vmul.f32 %v4006, %v4040
    %v4042 = vsub.f32 1.0, %v4041
    %v4043 = vmul.f32 %v4040, %v4042
    %v4044 = vadd.f32 %v4040, %v4043
    %vm4045 = vweird.f32 %v4006
    %vm4046 = vweird.f32 %v4040
    %vm4047 = vmor %vm4045, %vm4046
    %v4048 = vsel %vm4047, %v4040, %v4044
    %v4049 = vand.u32 2147483647, %v4006
    %vm4050 = vcmp.eq.f32.partialorder %v4049, 8.507059e+37
    %v4051 = vand.u32 %v4006, 2147483648
    %v4052 = vor.u32 1.1754944e-38, %v4051
    %v4053 = vsel %vm4050, %v4052, %v4048
    %v4054 = vmul.f32 1.0, %v4053
    %v4055 = vrcp.pop %v4007
    %v4056 = vmul.f32 %v4007, %v4055
    %v4057 = vsub.f32 1.0, %v4056
    %v4058 = vmul.f32 %v4055, %v4057
    %v4059 = vadd.f32 %v4055, %v4058
    %vm4060 = vweird.f32 %v4007
    %vm4061 = vweird.f32 %v4055
    %vm4062 = vmor %vm4060, %vm4061
    %v4063 = vsel %vm4062, %v4055, %v4059
    %v4064 = vand.u32 2147483647, %v4007
    %vm4065 = vcmp.eq.f32.partialorder %v4064, 8.507059e+37
    %v4066 = vand.u32 %v4007, 2147483648
    %v4067 = vor.u32 1.1754944e-38, %v4066
    %v4068 = vsel %vm4065, %v4067, %v4063
    %v4069 = vmul.f32 1.0, %v4068
    %v4070 = vrcp.pop %v4008
    %v4071 = vmul.f32 %v4008, %v4070
    %v4072 = vsub.f32 1.0, %v4071
    %v4073 = vmul.f32 %v4070, %v4072
    %v4074 = vadd.f32 %v4070, %v4073
    %vm4075 = vweird.f32 %v4008
    %vm4076 = vweird.f32 %v4070
    %vm4077 = vmor %vm4075, %vm4076
    %v4078 = vsel %vm4077, %v4070, %v4074
    %v4079 = vand.u32 2147483647, %v4008
    %vm4080 = vcmp.eq.f32.partialorder %v4079, 8.507059e+37
    %v4081 = vand.u32 %v4008, 2147483648
    %v4082 = vor.u32 1.1754944e-38, %v4081
    %v4083 = vsel %vm4080, %v4082, %v4078
    %v4084 = vmul.f32 1.0, %v4083
    %v4085 = vrcp.pop %v4009
    %v4086 = vmul.f32 %v4009, %v4085
    %v4087 = vsub.f32 1.0, %v4086
    %v4088 = vmul.f32 %v4085, %v4087
    %v4089 = vadd.f32 %v4085, %v4088
    %vm4090 = vweird.f32 %v4009
    %vm4091 = vweird.f32 %v4085
    %vm4092 = vmor %vm4090, %vm4091
    %v4093 = vsel %vm4092, %v4085, %v4089
    %v4094 = vand.u32 2147483647, %v4009
    %vm4095 = vcmp.eq.f32.partialorder %v4094, 8.507059e+37
    %v4096 = vand.u32 %v4009, 2147483648
    %v4097 = vor.u32 1.1754944e-38, %v4096
    %v4098 = vsel %vm4095, %v4097, %v4093
    %v4099 = vmul.f32 1.0, %v4098
    %v4100 = vmul.f32 %v4024, %v3714
    %v4101 = vmul.f32 %v4039, %v3715
    %v4102 = vmul.f32 %v4054, %v3716
    %v4103 = vmul.f32 %v4069, %v3717
    %v4104 = vmul.f32 %v4084, %v3718
    %v4105 = vmul.f32 %v4099, %v3719
    %v4106 = vsub.f32 1.0, %v4024
    %v4107 = vsub.f32 1.0, %v4039
    %v4108 = vsub.f32 1.0, %v4054
    %v4109 = vsub.f32 1.0, %v4069
    %v4110 = vsub.f32 1.0, %v4084
    %v4111 = vsub.f32 1.0, %v4099
    %v4112 = vmul.f32 %v4106, %v3914
    %v4113 = vmul.f32 %v4107, %v3915
    %v4114 = vmul.f32 %v4108, %v3916
    %v4115 = vmul.f32 %v4109, %v3917
    %v4116 = vmul.f32 %v4110, %v3918
    %v4117 = vmul.f32 %v4111, %v3919
    %v4118 = vadd.f32 %v4100, %v4112
    %v4119 = vadd.f32 %v4101, %v4113
    %v4120 = vadd.f32 %v4102, %v4114
    %v4121 = vadd.f32 %v4103, %v4115
    %v4122 = vadd.f32 %v4104, %v4116
    %v4123 = vadd.f32 %v4105, %v4117
    %v4124 = vld [vmem:[%s6] sm:$0xff]
    %v4125 = vld [vmem:[%s6 + $0x8] sm:$0xff]
    %v4127 = vsel %vm2630, %v4124, 0
    %v4130 = vsel %vm2630, %v4125, 0
    %4132 = vmatpush.msra.mxu0 0.0
    %4133 = vmatpush.msra.mxu0 0.0
    %4134 = vmatpush.msra.mxu0 0.0
    %4135 = vmatpush.msra.mxu0 0.0
    %4136 = vmatpush.msra.mxu0 0.0
    %4137 = vmatpush.msra.mxu0 0.0
    %4138 = vmatpush.msra.mxu0 0.0
    %4139 = vmatpush.msra.mxu0 0.0
    %4140 = vmatpush.msra.mxu0 0.0
    %4141 = vmatpush.msra.mxu0 0.0
    %4142 = vmatpush.msra.mxu0 0.0
    %4143 = vmatpush.msra.mxu0 0.0
    %4144 = vmatpush.msra.mxu0 %v177
    %4145 = vmatpush.msra.mxu0 %v176
    %4146 = vmatpush.msra.mxu0 %v175
    %4147 = vmatpush.msra.mxu0 %v174
    %4148 = vmatmul.f32.gmra.mxu0 %v4127
    %v4149 = vpop.f32.mrf.mxu0
    %v4150 = vadd.f32 0.0, %v4149
    %4151 = vmatmul.f32.gmra.mxu0 %v4130
    %v4152 = vpop.f32.mrf.mxu0
    %v4153 = vadd.f32 0.0, %v4152
    %4154 = vdwg.mxu0
    %4155 = vmatpush.msra.mxu0 0.0
    %4156 = vmatpush.msra.mxu0 0.0
    %4157 = vmatpush.msra.mxu0 0.0
    %4158 = vmatpush.msra.mxu0 0.0
    %4159 = vmatpush.msra.mxu0 0.0
    %4160 = vmatpush.msra.mxu0 0.0
    %4161 = vmatpush.msra.mxu0 0.0
    %4162 = vmatpush.msra.mxu0 0.0
    %4163 = vmatpush.msra.mxu0 0.0
    %4164 = vmatpush.msra.mxu0 0.0
    %4165 = vmatpush.msra.mxu0 0.0
    %4166 = vmatpush.msra.mxu0 0.0
    %4167 = vmatpush.msra.mxu0 %v2931
    %4168 = vmatpush.msra.mxu0 %v2930
    %4169 = vmatpush.msra.mxu0 %v2929
    %4170 = vmatpush.msra.mxu0 %v2928
    %4171 = vmatmul.f32.gmra.mxu0 %v4127
    %v4172 = vpop.f32.mrf.mxu0
    %v4173 = vadd.f32 0.0, %v4172
    %4174 = vmatmul.f32.gmra.mxu0 %v4130
    %v4175 = vpop.f32.mrf.mxu0
    %v4176 = vadd.f32 0.0, %v4175
    %4177 = vdwg.mxu0
    %4178 = vmatpush.msra.mxu0 0.0
    %4179 = vmatpush.msra.mxu0 0.0
    %4180 = vmatpush.msra.mxu0 0.0
    %4181 = vmatpush.msra.mxu0 0.0
    %4182 = vmatpush.msra.mxu0 0.0
    %4183 = vmatpush.msra.mxu0 0.0
    %4184 = vmatpush.msra.mxu0 0.0
    %4185 = vmatpush.msra.mxu0 0.0
    %4186 = vmatpush.msra.mxu0 0.0
    %4187 = vmatpush.msra.mxu0 0.0
    %4188 = vmatpush.msra.mxu0 0.0
    %4189 = vmatpush.msra.mxu0 0.0
    %4190 = vmatpush.msra.mxu0 %v3886
    %4191 = vmatpush.msra.mxu0 %v3885
    %4192 = vmatpush.msra.mxu0 %v3884
    %4193 = vmatpush.msra.mxu0 %v3883
    %4194 = vmatmul.f32.gmra.mxu0 %v4127
    %v4195 = vpop.f32.mrf.mxu0
    %v4196 = vadd.f32 0.0, %v4195
    %4197 = vmatmul.f32.gmra.mxu0 %v4130
    %v4198 = vpop.f32.mrf.mxu0
    %v4199 = vadd.f32 0.0, %v4198
    %4200 = vdwg.mxu0
    %v4201 = vld [vmem:[%s7] sm:$0xff]
    %v4202 = vld [vmem:[%s7 + $0x8] sm:$0xff]
    %v4204 = vsel %vm286, %v4201, 0
    %v4207 = vsel %vm286, %v4202, 0
    %4209 = vmatpush.msra.mxu0 0.0
    %4210 = vmatpush.msra.mxu0 0.0
    %4211 = vmatpush.msra.mxu0 0.0
    %4212 = vmatpush.msra.mxu0 0.0
    %4213 = vmatpush.msra.mxu0 0.0
    %4214 = vmatpush.msra.mxu0 0.0
    %4215 = vmatpush.msra.mxu0 0.0
    %4216 = vmatpush.msra.mxu0 0.0
    %4217 = vmatpush.msra.mxu0 0.0
    %4218 = vmatpush.msra.mxu0 0.0
    %4219 = vmatpush.msra.mxu0 %v183
    %4220 = vmatpush.msra.mxu0 %v182
    %4221 = vmatpush.msra.mxu0 %v181
    %4222 = vmatpush.msra.mxu0 %v180
    %4223 = vmatpush.msra.mxu0 %v179
    %4224 = vmatpush.msra.mxu0 %v178
    %4225 = vmatmul.f32.gmra.mxu0 %v4204
    %v4226 = vpop.f32.mrf.mxu0
    %v4227 = vadd.f32 0.0, %v4226
    %4228 = vmatmul.f32.gmra.mxu0 %v4207
    %v4229 = vpop.f32.mrf.mxu0
    %v4230 = vadd.f32 0.0, %v4229
    %4231 = vdwg.mxu0
    %4232 = vmatpush.msra.mxu0 0.0
    %4233 = vmatpush.msra.mxu0 0.0
    %4234 = vmatpush.msra.mxu0 0.0
    %4235 = vmatpush.msra.mxu0 0.0
    %4236 = vmatpush.msra.mxu0 0.0
    %4237 = vmatpush.msra.mxu0 0.0
    %4238 = vmatpush.msra.mxu0 0.0
    %4239 = vmatpush.msra.mxu0 0.0
    %4240 = vmatpush.msra.mxu0 0.0
    %4241 = vmatpush.msra.mxu0 0.0
    %4242 = vmatpush.msra.mxu0 %v3180
    %4243 = vmatpush.msra.mxu0 %v3179
    %4244 = vmatpush.msra.mxu0 %v3178
    %4245 = vmatpush.msra.mxu0 %v3177
    %4246 = vmatpush.msra.mxu0 %v3176
    %4247 = vmatpush.msra.mxu0 %v3175
    %4248 = vmatmul.f32.gmra.mxu0 %v4204
    %v4249 = vpop.f32.mrf.mxu0
    %v4250 = vadd.f32 0.0, %v4249
    %4251 = vmatmul.f32.gmra.mxu0 %v4207
    %v4252 = vpop.f32.mrf.mxu0
    %v4253 = vadd.f32 0.0, %v4252
    %4254 = vdwg.mxu0
    %4255 = vmatpush.msra.mxu0 0.0
    %4256 = vmatpush.msra.mxu0 0.0
    %4257 = vmatpush.msra.mxu0 0.0
    %4258 = vmatpush.msra.mxu0 0.0
    %4259 = vmatpush.msra.mxu0 0.0
    %4260 = vmatpush.msra.mxu0 0.0
    %4261 = vmatpush.msra.mxu0 0.0
    %4262 = vmatpush.msra.mxu0 0.0
    %4263 = vmatpush.msra.mxu0 0.0
    %4264 = vmatpush.msra.mxu0 0.0
    %4265 = vmatpush.msra.mxu0 %v4123
    %4266 = vmatpush.msra.mxu0 %v4122
    %4267 = vmatpush.msra.mxu0 %v4121
    %4268 = vmatpush.msra.mxu0 %v4120
    %4269 = vmatpush.msra.mxu0 %v4119
    %4270 = vmatpush.msra.mxu0 %v4118
    %4271 = vmatmul.f32.gmra.mxu0 %v4204
    %v4272 = vpop.f32.mrf.mxu0
    %v4273 = vadd.f32 0.0, %v4272
    %4274 = vmatmul.f32.gmra.mxu0 %v4207
    %v4275 = vpop.f32.mrf.mxu0
    %v4276 = vadd.f32 0.0, %v4275
    %4277 = vdwg.mxu0
    %v4278 = vmul.f32 %v4150, %v4227
    %v4279 = vmul.f32 %v4173, %v4250
    %v4280 = vmul.f32 %v4196, %v4273
    %v4281 = vmul.f32 %v4153, %v4230
    %v4282 = vmul.f32 %v4176, %v4253
    %v4283 = vmul.f32 %v4199, %v4276
    %v4284 = vadd.f32 %v4278, %v4279
    %v4285 = vadd.f32 %v4284, %v4280
    %4286 = vadd.xlane.f32.xlu0 %v4285
    %v4287 = vpop.xlane.xlu0 %4286
    %v4288 = vadd.f32 %v4281, %v4282
    %v4289 = vadd.f32 %v4288, %v4283
    %4290 = vadd.xlane.f32.xlu0 %v4289
    %v4291 = vpop.xlane.xlu0 %4290
    %v4292 = vmul.f32 %v4150, %v4150
    %v4293 = vmul.f32 %v4173, %v4173
    %v4294 = vmul.f32 %v4196, %v4196
    %v4295 = vmul.f32 %v4153, %v4153
    %v4296 = vmul.f32 %v4176, %v4176
    %v4297 = vmul.f32 %v4199, %v4199
    %v4298 = vadd.f32 %v4292, %v4293
    %v4299 = vadd.f32 %v4298, %v4294
    %4300 = vadd.xlane.f32.xlu0 %v4299
    %v4301 = vpop.xlane.xlu0 %4300
    %v4302 = vadd.f32 %v4295, %v4296
    %v4303 = vadd.f32 %v4302, %v4297
    %4304 = vadd.xlane.f32.xlu0 %v4303
    %v4305 = vpop.xlane.xlu0 %4304
    %v4306 = vmul.f32 %v4227, %v4227
    %v4307 = vmul.f32 %v4250, %v4250
    %v4308 = vmul.f32 %v4273, %v4273
    %v4309 = vmul.f32 %v4230, %v4230
    %v4310 = vmul.f32 %v4253, %v4253
    %v4311 = vmul.f32 %v4276, %v4276
    %v4312 = vadd.f32 %v4306, %v4307
    %v4313 = vadd.f32 %v4312, %v4308
    %4314 = vadd.xlane.f32.xlu0 %v4313
    %v4315 = vpop.xlane.xlu0 %4314
    %v4316 = vadd.f32 %v4309, %v4310
    %v4317 = vadd.f32 %v4316, %v4311
    %4318 = vadd.xlane.f32.xlu0 %v4317
    %v4319 = vpop.xlane.xlu0 %4318
    %v4320 = vmul.f32 %v4301, %v4315
    %v4321 = vmul.f32 %v4305, %v4319
    %v4322 = vmax.f32 %v4320, 1e-16
    %v4323 = vmax.f32 %v4321, 1e-16
    %v4324 = vrsqrt.pop %v4322
    %v4325 = vmul.f32 %v4324, %v4322
    %v4326 = vmul.f32 %v4325, %v4324
    %v4327 = vmul.f32 0.5, %v4326
    %v4328 = vsub.f32 1.5, %v4327
    %v4329 = vmul.f32 %v4324, %v4328
    %vm4330 = vweird.f32 %v4322
    %vm4331 = vweird.f32 %v4324
    %vm4332 = vmor %vm4330, %vm4331
    %v4333 = vsel %vm4332, %v4324, %v4329
    %v4334 = vrsqrt.pop %v4323
    %v4335 = vmul.f32 %v4334, %v4323
    %v4336 = vmul.f32 %v4335, %v4334
    %v4337 = vmul.f32 0.5, %v4336
    %v4338 = vsub.f32 1.5, %v4337
    %v4339 = vmul.f32 %v4334, %v4338
    %vm4340 = vweird.f32 %v4323
    %vm4341 = vweird.f32 %v4334
    %vm4342 = vmor %vm4340, %vm4341
    %v4343 = vsel %vm4342, %v4334, %v4339
    %v4344 = vmul.f32 %v4287, %v4333
    %v4345 = vmul.f32 %v4291, %v4343
    %v4346 = vmax.f32 %v4344, 0.0
    %v4347 = vmax.f32 %v4345, 0.0
    %v4348 = vmin.f32 %v4346, 1.0
    %v4349 = vmin.f32 %v4347, 1.0
    %4350 = vst [vmem:[%s10] sm:$0xff] %v4348
    %4351 = vst [vmem:[%s10 + $0x8] sm:$0xff] %v4349
    // Predicated region
    $region66: #{forward.1} parent=1 // pred_check
      _
    $region67: #{forward.1} parent=1 // pred_check_branch
      %4353 = sbr.rel (0) target = $region69
    $region68: #{forward.1} parent=1 // pred_region
      _
    $region69: #{forward.1} parent=1 // pred_fallthru
      _
    // Predicated region
    $region70: #{forward.1} parent=1 // pred_check
      _
    $region71: #{forward.1} parent=1 // pred_check_branch
      %4355 = sbr.rel (0) target = $region73
    $region72: #{forward.1} parent=1 // pred_region
      _
    $region73: #{forward.1} parent=1 // pred_fallthru
      _
    %4356 = vsyncpa [#allocation3], 1
    %4357 = vsyncpa [#allocation5], 1
    %4358 = vsyncpa [#allocation8], 1
    %4359 = vsyncpa [#allocation11], 1

</llo_original>
